<compile_context>
chip_gen: v5e
topology: v5e:2x2
jax: 0.10.0
libtpu: 0.0.40
codegen_flags: <defaults>
</compile_context>

<pallas_src>
import functools
import math

import jax
import jax.numpy as jnp
from jax.experimental import pallas as pl
from jax.experimental.pallas import tpu as pltpu


def _self_attention_kernel(
    q_ref, k_ref, v_ref, a_ref,
    wq_ref, bq_ref, wk_ref, bk_ref, wv_ref, bv_ref,
    wa_ref, ba_ref, wf_ref, bf_ref,
    o_ref,
    ctx_ref,
    *, n_heads, inv_scale):
    # Shapes seen by the kernel:
    #   q_ref (BT, Lq, H)   k_ref/v_ref (BT, Lk, H)   a_ref (BT, La, H)
    #   w*_ref (in, out)  [pre-transposed so y = x @ W + b]   b*_ref (1, out) f32
    #   o_ref (BT, Lq, H)   ctx_ref VMEM scratch (BT, Lq, H) f32
    bt, Lq, hid = q_ref.shape
    Lk = k_ref.shape[1]
    La = a_ref.shape[1]
    ha = wa_ref.shape[1]
    hd = hid // n_heads
    hd_a = ha // n_heads
    mm_dtype = q_ref.dtype          # f32 or bf16 (matmul operand dtype)

    # Flatten (BT, L, H) -> (BT*L, H): cheap collapse of leading dims, gives the
    # projection matmuls M = BT*L rows instead of L.
    xq = q_ref[...].reshape(bt * Lq, hid)
    xk = k_ref[...].reshape(bt * Lk, hid)
    xv = v_ref[...].reshape(bt * Lk, hid)
    xa = a_ref[...].reshape(bt * La, hid)

    # Fused input projections (MXU, f32 accumulation).
    Q = jnp.dot(xq, wq_ref[...], preferred_element_type=jnp.float32) + bq_ref[...]
    K = jnp.dot(xk, wk_ref[...], preferred_element_type=jnp.float32) + bk_ref[...]
    V = jnp.dot(xv, wv_ref[...], preferred_element_type=jnp.float32) + bv_ref[...]
    A = jnp.dot(xa, wa_ref[...], preferred_element_type=jnp.float32) + ba_ref[...]

    # Fold 1/sqrt(head_dim) into Q once (scalar scale commutes with Q @ K^T).
    Q = Q * inv_scale

    Q3 = Q.astype(mm_dtype).reshape(bt, Lq, hid)
    K3 = K.astype(mm_dtype).reshape(bt, Lk, hid)
    V3 = V.astype(mm_dtype).reshape(bt, Lk, hid)
    A3 = A.reshape(bt, La, ha)                      # softmax/bias math stays f32

    for h in range(n_heads):                        # static unroll; n_heads is tiny
        Qh = Q3[:, :, h * hd:(h + 1) * hd]          # (BT, Lq, hd)
        Kh = K3[:, :, h * hd:(h + 1) * hd]          # (BT, Lk, hd)
        Vh = V3[:, :, h * hd:(h + 1) * hd]          # (BT, Lk, hd)
        Ah = A3[:, :, h * hd_a:(h + 1) * hd_a]      # (BT, Lq, Lk)

        # Batched over BT; contracts the last axis of both operands (no .T,
        # no per-head XLU transpose).
        energy = jnp.einsum("bqd,bkd->bqk", Qh, Kh,
                            preferred_element_type=jnp.float32) + Ah
        # Numerically stable softmax over the key axis.
        energy = energy - jnp.max(energy, axis=-1, keepdims=True)
        p = jnp.exp(energy)                         # EUP
        p = p * pl.reciprocal(jnp.sum(p, axis=-1, keepdims=True), approx=True)
        ctx_h = jnp.einsum("bqk,bkd->bqd", p.astype(mm_dtype), Vh,
                           preferred_element_type=jnp.float32)
        # Write this head's context directly into the scratch slab (no concat).
        ctx_ref[:, :, h * hd:(h + 1) * hd] = ctx_h

    ctx = ctx_ref[...].reshape(bt * Lq, hid).astype(mm_dtype)
    out = jnp.dot(ctx, wf_ref[...], preferred_element_type=jnp.float32) + bf_ref[...]
    o_ref[...] = out.reshape(bt, Lq, hid).astype(o_ref.dtype)


def _pick_b_tile(bsz, Lq, Lk, La, hid, ha, itemsize):
    """Pick the batch tile: fill the MXU sublane dim (target M = B_TILE*Lq ~ 256,
    a multiple of 128 so it also suits v5e), keep >= 2 grid steps for v7x's two
    TensorCores, and stay well under the smallest scoped-VMEM default."""
    target_m = 256
    bt = max(1, pl.cdiv(target_m, max(Lq, 1)))
    bt = max(1, min(bt, bsz))
    if bsz >= 2:
        bt = min(bt, pl.cdiv(bsz, 2))          # keep at least 2 grid steps

    def vmem_bytes(b):
        tiles = b * (Lq + 2 * Lk + La) * hid * itemsize     # input blocks
        tiles += b * Lq * hid * 4                            # output block (f32)
        w = (4 * hid * hid + hid * ha) * itemsize + (4 * hid + ha) * 4
        scratch = b * Lq * hid * 4
        return 2 * tiles + w + scratch                       # 2x: double buffering

    while bt > 1 and vmem_bytes(bt) > 12 * 1024 * 1024:
        bt //= 2
    return bt


def self_attention(query, key, value, atten, params, *, n_heads,
                   compute_dtype=jnp.float32, b_tile=None):
    """query/key/value/atten: (B, L, hid) float32.  params: PyTorch-layout
    Linear weights (out, in) and biases (out,).  Returns (B, Lq, hid).

    compute_dtype: matmul operand dtype (jnp.float32 or jnp.bfloat16); all
    matmuls accumulate in f32 and the softmax runs in f32 either way.
    """
    out_dtype = query.dtype
    bsz = query.shape[0] if query.ndim > key.ndim else key.shape[0]
    Lq, Lk, La = query.shape[1], key.shape[1], atten.shape[1]
    hid = query.shape[-1]
    hd = hid // n_heads

    # Branch exactly as the PyTorch module does on atten.shape[1] == 20.
    if atten.shape[1] == 20:
        wa, ba = params["att_case_w"], params["att_case_b"]    # (160, hid)
    else:
        wa, ba = params["att_w"], params["att_b"]              # (hid, hid)
    ha = wa.shape[0]
    hd_a = ha // n_heads

    # The module's `energy + atten_out` broadcast requires these to line up.
    assert La == Lq and hd_a == Lk, (
        "atten shape incompatible with energy (same constraint as the "
        "original PyTorch module's broadcast)")

    inv_scale = 1.0 / math.sqrt(hd)
    cdt = jnp.dtype(compute_dtype)
    itemsize = cdt.itemsize

    if b_tile is None:
        b_tile = _pick_b_tile(bsz, Lq, Lk, La, hid, ha, itemsize)
    bt = int(b_tile)

    # Zero-pad the batch so the grid tiles it exactly; padded rows are dropped.
    pad_b = (-bsz) % bt

    def padb(x):
        if pad_b:
            return jnp.pad(x, ((0, pad_b),) + ((0, 0),) * (x.ndim - 1))
        return x

    q = padb(query).astype(cdt)
    k = padb(key).astype(cdt)
    v = padb(value).astype(cdt)
    a = padb(atten).astype(cdt)
    bsz_p = bsz + pad_b
    n_steps = bsz_p // bt

    # Linear weights are (out, in); transpose so the kernel does y = x @ W + b.
    to2d = lambda bias: bias.reshape(1, -1).astype(jnp.float32)
    args = (q, k, v, a,
            params["wq_w"].T.astype(cdt), to2d(params["wq_b"]),
            params["wk_w"].T.astype(cdt), to2d(params["wk_b"]),
            params["wv_w"].T.astype(cdt), to2d(params["wv_b"]),
            wa.T.astype(cdt), to2d(ba),
            params["fc_w"].T.astype(cdt), to2d(params["fc_b"]))

    # Constant-index blocks: Pallas only re-DMAs a block when its block index
    # changes between grid steps, so weights/biases stay resident in VMEM.
    def wspec(shape):
        return pl.BlockSpec(shape, lambda b, _n=len(shape): (0,) * _n)

    in_specs = [
        pl.BlockSpec((bt, Lq, hid), lambda b: (b, 0, 0)),
        pl.BlockSpec((bt, Lk, hid), lambda b: (b, 0, 0)),
        pl.BlockSpec((bt, Lk, hid), lambda b: (b, 0, 0)),
        pl.BlockSpec((bt, La, hid), lambda b: (b, 0, 0)),
        wspec((hid, hid)), wspec((1, hid)),      # w_q
        wspec((hid, hid)), wspec((1, hid)),      # w_k
        wspec((hid, hid)), wspec((1, hid)),      # w_v
        wspec((hid, ha)),  wspec((1, ha)),       # att / att_case
        wspec((hid, hid)), wspec((1, hid)),      # fc
    ]
    out_spec = pl.BlockSpec((bt, Lq, hid), lambda b: (b, 0, 0))

    flops = int(2 * bsz_p * (Lq * hid * hid            # w_q
                             + 2 * Lk * hid * hid      # w_k, w_v
                             + La * hid * ha           # att
                             + n_heads * 2 * Lq * Lk * hd   # QK^T and attn@V
                             + Lq * hid * hid))        # fc
    bytes_accessed = int(itemsize * (q.size + k.size + v.size + a.size
                                     + 4 * hid * hid + hid * ha)
                         + 4 * (4 * hid + ha + bsz_p * Lq * hid))

    kernel = functools.partial(_self_attention_kernel,
                               n_heads=n_heads, inv_scale=inv_scale)

    out = pl.pallas_call(
        kernel,
        out_shape=jax.ShapeDtypeStruct((bsz_p, Lq, hid), out_dtype),
        grid=(n_steps,),
        in_specs=in_specs,
        out_specs=out_spec,
        scratch_shapes=[pltpu.VMEM((bt, Lq, hid), jnp.float32)],
        compiler_params=pltpu.CompilerParams(
            dimension_semantics=("parallel",),        # shard batch tiles across TCs (v7x)
            vmem_limit_bytes=32 * 1024 * 1024,
        ),
        cost_estimate=pl.CostEstimate(
            flops=flops,
            transcendentals=int(bsz_p * n_heads * Lq * Lk),
            bytes_accessed=bytes_accessed,
        ),
    )(*args)
    return out[:bsz] if pad_b else out


def self_attention_ref(query, key, value, atten, params, *, n_heads):
    """Pure-JAX reference mirroring the PyTorch forward (mask=None)."""
    hid = query.shape[-1]
    hd = hid // n_heads
    bsz = query.shape[0] if query.ndim > key.ndim else key.shape[0]

    if atten.shape[1] == 20:
        a = atten @ params["att_case_w"].T + params["att_case_b"]
        ha = params["att_case_w"].shape[0]
    else:
        a = atten @ params["att_w"].T + params["att_b"]
        ha = params["att_w"].shape[0]
    a = a.reshape(bsz, -1, n_heads, ha // n_heads).transpose(0, 2, 1, 3)

    def proj(x, wn, bn):
        y = x @ params[wn].T + params[bn]
        return y.reshape(bsz, -1, n_heads, hd).transpose(0, 2, 1, 3)

    Q = proj(query, "wq_w", "wq_b")
    K = proj(key, "wk_w", "wk_b")
    V = proj(value, "wv_w", "wv_b")

    scale = jnp.sqrt(jnp.float32(hd))
    energy = jnp.einsum("bhqd,bhkd->bhqk", Q, K) / scale + a
    attn = jax.nn.softmax(energy, axis=-1)
    x = jnp.einsum("bhqk,bhkd->bhqd", attn, V)
    x = x.transpose(0, 2, 1, 3).reshape(bsz, -1, hid)
    return x @ params["fc_w"].T + params["fc_b"]


if __name__ == "__main__":
    # hid_dim=32, n_heads=4 -> head_dim=8.  Key length must equal head_dim (8)
    # for the module's `energy + atten_out` add to be well-formed, and the
    # atten sequence length must equal the query length.
    B, L, HID, NH = 16, 8, 32, 4

    key0 = jax.random.PRNGKey(0)
    keys = jax.random.split(key0, 16)

    def w(k, o, i):
        return jax.random.normal(k, (o, i), dtype=jnp.float32) * 0.1

    def b(k, o):
        return jax.random.normal(k, (o,), dtype=jnp.float32) * 0.1

    params = {
        "wq_w": w(keys[0], HID, HID), "wq_b": b(keys[1], HID),
        "wk_w": w(keys[2], HID, HID), "wk_b": b(keys[3], HID),
        "wv_w": w(keys[4], HID, HID), "wv_b": b(keys[5], HID),
        "fc_w": w(keys[6], HID, HID), "fc_b": b(keys[7], HID),
        "att_w": w(keys[8], HID, HID), "att_b": b(keys[9], HID),
        "att_case_w": w(keys[10], 160, HID), "att_case_b": b(keys[11], 160),
    }

    query = jax.random.normal(keys[12], (B, L, HID), dtype=jnp.float32)
    key_ = jax.random.normal(keys[13], (B, L, HID), dtype=jnp.float32)
    value = jax.random.normal(keys[14], (B, L, HID), dtype=jnp.float32)
    atten = jax.random.normal(keys[15], (B, L, HID), dtype=jnp.float32)

    ref = self_attention_ref(query, key_, value, atten, params, n_heads=NH)

    # 1) f32 path (B_TILE batching, 2 grid steps, EUP-approx softmax normalize).
    out = self_attention(query, key_, value, atten, params, n_heads=NH)
    out = jax.block_until_ready(out)
    assert out.shape == (B, L, HID)
    assert jnp.allclose(out, ref, atol=5e-3, rtol=5e-3), \
        float(jnp.max(jnp.abs(out - ref)))

    # 2) bf16 matmul operands (v6e/v7x MXU path), f32 accumulation + softmax.
    out_bf = self_attention(query, key_, value, atten, params, n_heads=NH,
                            compute_dtype=jnp.bfloat16)
    out_bf = jax.block_until_ready(out_bf)
    assert jnp.allclose(out_bf, ref, atol=3e-2, rtol=3e-2), \
        float(jnp.max(jnp.abs(out_bf - ref)))

    # 3) batch not divisible by the tile (exercises the zero-pad path).
    out3 = self_attention(query[:3], key_[:3], value[:3], atten[:3], params,
                          n_heads=NH)
    out3 = jax.block_until_ready(out3)
    assert out3.shape == (3, L, HID)
    assert jnp.allclose(out3, ref[:3], atol=5e-3, rtol=5e-3), \
        float(jnp.max(jnp.abs(out3 - ref[:3])))

    print("KERNEL_OK")
</pallas_src>

<mosaic_0001>
module attributes {stable_mosaic.version = 11 : i64} {
  func.func @_self_attention_kernel(%arg0: i32, %arg1: memref<8x8x32xf32, #tpu.memory_space<vmem>>, %arg2: memref<8x8x32xf32, #tpu.memory_space<vmem>>, %arg3: memref<8x8x32xf32, #tpu.memory_space<vmem>>, %arg4: memref<8x8x32xf32, #tpu.memory_space<vmem>>, %arg5: memref<32x32xf32, #tpu.memory_space<vmem>>, %arg6: memref<1x32xf32, #tpu.memory_space<vmem>>, %arg7: memref<32x32xf32, #tpu.memory_space<vmem>>, %arg8: memref<1x32xf32, #tpu.memory_space<vmem>>, %arg9: memref<32x32xf32, #tpu.memory_space<vmem>>, %arg10: memref<1x32xf32, #tpu.memory_space<vmem>>, %arg11: memref<32x32xf32, #tpu.memory_space<vmem>>, %arg12: memref<1x32xf32, #tpu.memory_space<vmem>>, %arg13: memref<32x32xf32, #tpu.memory_space<vmem>>, %arg14: memref<1x32xf32, #tpu.memory_space<vmem>>, %arg15: memref<8x8x32xf32, #tpu.memory_space<vmem>>, %arg16: memref<8x8x32xf32, #tpu.memory_space<vmem>>) attributes {dimension_semantics = [#tpu.dimension_semantics<parallel>], iteration_bounds = array<i64: 2>, scalar_prefetch = 0 : i64, scratch_operands = 1 : i64, tpu.core_type = #tpu.core_type<tc>, window_params = [{transform_indices = @transform_0, window_bounds = array<i64: 8, 8, 32>}, {transform_indices = @transform_1, window_bounds = array<i64: 8, 8, 32>}, {transform_indices = @transform_2, window_bounds = array<i64: 8, 8, 32>}, {transform_indices = @transform_3, window_bounds = array<i64: 8, 8, 32>}, {pipeline_mode = #tpu.pipeline_mode<synchronous>, transform_indices = @transform_4, window_bounds = array<i64: 32, 32>}, {pipeline_mode = #tpu.pipeline_mode<synchronous>, transform_indices = @transform_5, window_bounds = array<i64: 1, 32>}, {pipeline_mode = #tpu.pipeline_mode<synchronous>, transform_indices = @transform_6, window_bounds = array<i64: 32, 32>}, {pipeline_mode = #tpu.pipeline_mode<synchronous>, transform_indices = @transform_7, window_bounds = array<i64: 1, 32>}, {pipeline_mode = #tpu.pipeline_mode<synchronous>, transform_indices = @transform_8, window_bounds = array<i64: 32, 32>}, {pipeline_mode = #tpu.pipeline_mode<synchronous>, transform_indices = @transform_9, window_bounds = array<i64: 1, 32>}, {pipeline_mode = #tpu.pipeline_mode<synchronous>, transform_indices = @transform_10, window_bounds = array<i64: 32, 32>}, {pipeline_mode = #tpu.pipeline_mode<synchronous>, transform_indices = @transform_11, window_bounds = array<i64: 1, 32>}, {pipeline_mode = #tpu.pipeline_mode<synchronous>, transform_indices = @transform_12, window_bounds = array<i64: 32, 32>}, {pipeline_mode = #tpu.pipeline_mode<synchronous>, transform_indices = @transform_13, window_bounds = array<i64: 1, 32>}, {transform_indices = @transform_14, window_bounds = array<i64: 8, 8, 32>}]} {
    %c0 = arith.constant 0 : index
    %c0_0 = arith.constant 0 : index
    %c0_1 = arith.constant 0 : index
    %0 = vector.load %arg1[%c0, %c0_0, %c0_1] : memref<8x8x32xf32, #tpu.memory_space<vmem>>, vector<8x8x32xf32>
    %1 = vector.shape_cast %0 : vector<8x8x32xf32> to vector<64x32xf32>
    %c0_2 = arith.constant 0 : index
    %c0_3 = arith.constant 0 : index
    %c0_4 = arith.constant 0 : index
    %2 = vector.load %arg2[%c0_2, %c0_3, %c0_4] : memref<8x8x32xf32, #tpu.memory_space<vmem>>, vector<8x8x32xf32>
    %3 = vector.shape_cast %2 : vector<8x8x32xf32> to vector<64x32xf32>
    %c0_5 = arith.constant 0 : index
    %c0_6 = arith.constant 0 : index
    %c0_7 = arith.constant 0 : index
    %4 = vector.load %arg3[%c0_5, %c0_6, %c0_7] : memref<8x8x32xf32, #tpu.memory_space<vmem>>, vector<8x8x32xf32>
    %5 = vector.shape_cast %4 : vector<8x8x32xf32> to vector<64x32xf32>
    %c0_8 = arith.constant 0 : index
    %c0_9 = arith.constant 0 : index
    %c0_10 = arith.constant 0 : index
    %6 = vector.load %arg4[%c0_8, %c0_9, %c0_10] : memref<8x8x32xf32, #tpu.memory_space<vmem>>, vector<8x8x32xf32>
    %7 = vector.shape_cast %6 : vector<8x8x32xf32> to vector<64x32xf32>
    %c0_11 = arith.constant 0 : index
    %c0_12 = arith.constant 0 : index
    %8 = vector.load %arg5[%c0_11, %c0_12] : memref<32x32xf32, #tpu.memory_space<vmem>>, vector<32x32xf32>
    %cst = arith.constant dense<0.000000e+00> : vector<64x32xf32>
    %9 = tpu.matmul %1, %8, %cst {dimension_numbers = #tpu.dot_dimension_numbers<[1], [0], [0], [1], [0, 0, 1, 1], [], []>} : vector<64x32xf32>, vector<32x32xf32>, vector<64x32xf32> -> vector<64x32xf32>
    %c0_13 = arith.constant 0 : index
    %c0_14 = arith.constant 0 : index
    %10 = vector.load %arg6[%c0_13, %c0_14] : memref<1x32xf32, #tpu.memory_space<vmem>>, vector<1x32xf32>
    %11 = vector.broadcast %10 : vector<1x32xf32> to vector<64x32xf32>
    %12 = arith.addf %9, %11 : vector<64x32xf32>
    %c0_15 = arith.constant 0 : index
    %c0_16 = arith.constant 0 : index
    %13 = vector.load %arg7[%c0_15, %c0_16] : memref<32x32xf32, #tpu.memory_space<vmem>>, vector<32x32xf32>
    %cst_17 = arith.constant dense<0.000000e+00> : vector<64x32xf32>
    %14 = tpu.matmul %3, %13, %cst_17 {dimension_numbers = #tpu.dot_dimension_numbers<[1], [0], [0], [1], [0, 0, 1, 1], [], []>} : vector<64x32xf32>, vector<32x32xf32>, vector<64x32xf32> -> vector<64x32xf32>
    %c0_18 = arith.constant 0 : index
    %c0_19 = arith.constant 0 : index
    %15 = vector.load %arg8[%c0_18, %c0_19] : memref<1x32xf32, #tpu.memory_space<vmem>>, vector<1x32xf32>
    %16 = vector.broadcast %15 : vector<1x32xf32> to vector<64x32xf32>
    %17 = arith.addf %14, %16 : vector<64x32xf32>
    %c0_20 = arith.constant 0 : index
    %c0_21 = arith.constant 0 : index
    %18 = vector.load %arg9[%c0_20, %c0_21] : memref<32x32xf32, #tpu.memory_space<vmem>>, vector<32x32xf32>
    %cst_22 = arith.constant dense<0.000000e+00> : vector<64x32xf32>
    %19 = tpu.matmul %5, %18, %cst_22 {dimension_numbers = #tpu.dot_dimension_numbers<[1], [0], [0], [1], [0, 0, 1, 1], [], []>} : vector<64x32xf32>, vector<32x32xf32>, vector<64x32xf32> -> vector<64x32xf32>
    %c0_23 = arith.constant 0 : index
    %c0_24 = arith.constant 0 : index
    %20 = vector.load %arg10[%c0_23, %c0_24] : memref<1x32xf32, #tpu.memory_space<vmem>>, vector<1x32xf32>
    %21 = vector.broadcast %20 : vector<1x32xf32> to vector<64x32xf32>
    %22 = arith.addf %19, %21 : vector<64x32xf32>
    %c0_25 = arith.constant 0 : index
    %c0_26 = arith.constant 0 : index
    %23 = vector.load %arg11[%c0_25, %c0_26] : memref<32x32xf32, #tpu.memory_space<vmem>>, vector<32x32xf32>
    %cst_27 = arith.constant dense<0.000000e+00> : vector<64x32xf32>
    %24 = tpu.matmul %7, %23, %cst_27 {dimension_numbers = #tpu.dot_dimension_numbers<[1], [0], [0], [1], [0, 0, 1, 1], [], []>} : vector<64x32xf32>, vector<32x32xf32>, vector<64x32xf32> -> vector<64x32xf32>
    %c0_28 = arith.constant 0 : index
    %c0_29 = arith.constant 0 : index
    %25 = vector.load %arg12[%c0_28, %c0_29] : memref<1x32xf32, #tpu.memory_space<vmem>>, vector<1x32xf32>
    %26 = vector.broadcast %25 : vector<1x32xf32> to vector<64x32xf32>
    %27 = arith.addf %24, %26 : vector<64x32xf32>
    %cst_30 = arith.constant 0.353553385 : f32
    %28 = vector.broadcast %cst_30 : f32 to vector<64x32xf32>
    %29 = arith.mulf %12, %28 : vector<64x32xf32>
    %30 = vector.shape_cast %29 : vector<64x32xf32> to vector<8x8x32xf32>
    %31 = vector.shape_cast %17 : vector<64x32xf32> to vector<8x8x32xf32>
    %32 = vector.shape_cast %22 : vector<64x32xf32> to vector<8x8x32xf32>
    %33 = vector.shape_cast %27 : vector<64x32xf32> to vector<8x8x32xf32>
    %34 = vector.extract_strided_slice %30 {offsets = [0, 0, 0], sizes = [8, 8, 8], strides = [1, 1, 1]} : vector<8x8x32xf32> to vector<8x8x8xf32>
    %35 = vector.extract_strided_slice %31 {offsets = [0, 0, 0], sizes = [8, 8, 8], strides = [1, 1, 1]} : vector<8x8x32xf32> to vector<8x8x8xf32>
    %36 = vector.extract_strided_slice %32 {offsets = [0, 0, 0], sizes = [8, 8, 8], strides = [1, 1, 1]} : vector<8x8x32xf32> to vector<8x8x8xf32>
    %37 = vector.extract_strided_slice %33 {offsets = [0, 0, 0], sizes = [8, 8, 8], strides = [1, 1, 1]} : vector<8x8x32xf32> to vector<8x8x8xf32>
    "tpu.trace_start"() <{level = 10 : i32, message = "bqd,bkd->bqk"}> : () -> ()
    %cst_31 = arith.constant dense<0.000000e+00> : vector<8x8x8xf32>
    %38 = tpu.matmul %34, %35, %cst_31 {dimension_numbers = #tpu.dot_dimension_numbers<[2], [2], [1], [1], [0, 0, 0, 1, 1, 1], [0], [0]>} : vector<8x8x8xf32>, vector<8x8x8xf32>, vector<8x8x8xf32> -> vector<8x8x8xf32>
    "tpu.trace_stop"() : () -> ()
    %39 = arith.addf %38, %37 : vector<8x8x8xf32>
    %cst_32 = arith.constant dense<0xFF800000> : vector<8x8xf32>
    %40 = vector.multi_reduction <maximumf>, %39, %cst_32 [2] : vector<8x8x8xf32> to vector<8x8xf32>
    %41 = vector.shape_cast %40 : vector<8x8xf32> to vector<8x8x1xf32>
    %42 = vector.broadcast %41 : vector<8x8x1xf32> to vector<8x8x8xf32>
    %43 = arith.subf %39, %42 : vector<8x8x8xf32>
    %44 = math.exp %43 : vector<8x8x8xf32>
    %cst_33 = arith.constant dense<0.000000e+00> : vector<8x8xf32>
    %45 = vector.multi_reduction <add>, %44, %cst_33 [2] : vector<8x8x8xf32> to vector<8x8xf32>
    %46 = vector.shape_cast %45 : vector<8x8xf32> to vector<8x8x1xf32>
    %47 = tpu.reciprocal %46 {approx = true} : vector<8x8x1xf32> -> vector<8x8x1xf32>
    %48 = vector.broadcast %47 : vector<8x8x1xf32> to vector<8x8x8xf32>
    %49 = arith.mulf %44, %48 : vector<8x8x8xf32>
    "tpu.trace_start"() <{level = 10 : i32, message = "bqk,bkd->bqd"}> : () -> ()
    %cst_34 = arith.constant dense<0.000000e+00> : vector<8x8x8xf32>
    %50 = tpu.matmul %49, %36, %cst_34 {dimension_numbers = #tpu.dot_dimension_numbers<[2], [1], [1], [2], [0, 0, 0, 1, 1, 2], [0], [0]>} : vector<8x8x8xf32>, vector<8x8x8xf32>, vector<8x8x8xf32> -> vector<8x8x8xf32>
    "tpu.trace_stop"() : () -> ()
    %c0_35 = arith.constant 0 : index
    %c0_36 = arith.constant 0 : index
    %c0_37 = arith.constant 0 : index
    %51 = vector.load %arg16[%c0_35, %c0_36, %c0_37] : memref<8x8x32xf32, #tpu.memory_space<vmem>>, vector<8x8x8xf32>
    tpu.vector_store %arg16[%c0_35, %c0_36, %c0_37], %50 {strides = array<i32>} : memref<8x8x32xf32, #tpu.memory_space<vmem>>, vector<8x8x8xf32>,
    %52 = vector.extract_strided_slice %30 {offsets = [0, 0, 8], sizes = [8, 8, 8], strides = [1, 1, 1]} : vector<8x8x32xf32> to vector<8x8x8xf32>
    %53 = vector.extract_strided_slice %31 {offsets = [0, 0, 8], sizes = [8, 8, 8], strides = [1, 1, 1]} : vector<8x8x32xf32> to vector<8x8x8xf32>
    %54 = vector.extract_strided_slice %32 {offsets = [0, 0, 8], sizes = [8, 8, 8], strides = [1, 1, 1]} : vector<8x8x32xf32> to vector<8x8x8xf32>
    %55 = vector.extract_strided_slice %33 {offsets = [0, 0, 8], sizes = [8, 8, 8], strides = [1, 1, 1]} : vector<8x8x32xf32> to vector<8x8x8xf32>
    "tpu.trace_start"() <{level = 10 : i32, message = "bqd,bkd->bqk"}> : () -> ()
    %cst_38 = arith.constant dense<0.000000e+00> : vector<8x8x8xf32>
    %56 = tpu.matmul %52, %53, %cst_38 {dimension_numbers = #tpu.dot_dimension_numbers<[2], [2], [1], [1], [0, 0, 0, 1, 1, 1], [0], [0]>} : vector<8x8x8xf32>, vector<8x8x8xf32>, vector<8x8x8xf32> -> vector<8x8x8xf32>
    "tpu.trace_stop"() : () -> ()
    %57 = arith.addf %56, %55 : vector<8x8x8xf32>
    %cst_39 = arith.constant dense<0xFF800000> : vector<8x8xf32>
    %58 = vector.multi_reduction <maximumf>, %57, %cst_39 [2] : vector<8x8x8xf32> to vector<8x8xf32>
    %59 = vector.shape_cast %58 : vector<8x8xf32> to vector<8x8x1xf32>
    %60 = vector.broadcast %59 : vector<8x8x1xf32> to vector<8x8x8xf32>
    %61 = arith.subf %57, %60 : vector<8x8x8xf32>
    %62 = math.exp %61 : vector<8x8x8xf32>
    %cst_40 = arith.constant dense<0.000000e+00> : vector<8x8xf32>
    %63 = vector.multi_reduction <add>, %62, %cst_40 [2] : vector<8x8x8xf32> to vector<8x8xf32>
    %64 = vector.shape_cast %63 : vector<8x8xf32> to vector<8x8x1xf32>
    %65 = tpu.reciprocal %64 {approx = true} : vector<8x8x1xf32> -> vector<8x8x1xf32>
    %66 = vector.broadcast %65 : vector<8x8x1xf32> to vector<8x8x8xf32>
    %67 = arith.mulf %62, %66 : vector<8x8x8xf32>
    "tpu.trace_start"() <{level = 10 : i32, message = "bqk,bkd->bqd"}> : () -> ()
    %cst_41 = arith.constant dense<0.000000e+00> : vector<8x8x8xf32>
    %68 = tpu.matmul %67, %54, %cst_41 {dimension_numbers = #tpu.dot_dimension_numbers<[2], [1], [1], [2], [0, 0, 0, 1, 1, 2], [0], [0]>} : vector<8x8x8xf32>, vector<8x8x8xf32>, vector<8x8x8xf32> -> vector<8x8x8xf32>
    "tpu.trace_stop"() : () -> ()
    %c0_42 = arith.constant 0 : index
    %c0_43 = arith.constant 0 : index
    %c8 = arith.constant 8 : index
    %69 = vector.load %arg16[%c0_42, %c0_43, %c8] : memref<8x8x32xf32, #tpu.memory_space<vmem>>, vector<8x8x8xf32>
    tpu.vector_store %arg16[%c0_42, %c0_43, %c8], %68 {strides = array<i32>} : memref<8x8x32xf32, #tpu.memory_space<vmem>>, vector<8x8x8xf32>,
    %70 = vector.extract_strided_slice %30 {offsets = [0, 0, 16], sizes = [8, 8, 8], strides = [1, 1, 1]} : vector<8x8x32xf32> to vector<8x8x8xf32>
    %71 = vector.extract_strided_slice %31 {offsets = [0, 0, 16], sizes = [8, 8, 8], strides = [1, 1, 1]} : vector<8x8x32xf32> to vector<8x8x8xf32>
    %72 = vector.extract_strided_slice %32 {offsets = [0, 0, 16], sizes = [8, 8, 8], strides = [1, 1, 1]} : vector<8x8x32xf32> to vector<8x8x8xf32>
    %73 = vector.extract_strided_slice %33 {offsets = [0, 0, 16], sizes = [8, 8, 8], strides = [1, 1, 1]} : vector<8x8x32xf32> to vector<8x8x8xf32>
    "tpu.trace_start"() <{level = 10 : i32, message = "bqd,bkd->bqk"}> : () -> ()
    %cst_44 = arith.constant dense<0.000000e+00> : vector<8x8x8xf32>
    %74 = tpu.matmul %70, %71, %cst_44 {dimension_numbers = #tpu.dot_dimension_numbers<[2], [2], [1], [1], [0, 0, 0, 1, 1, 1], [0], [0]>} : vector<8x8x8xf32>, vector<8x8x8xf32>, vector<8x8x8xf32> -> vector<8x8x8xf32>
    "tpu.trace_stop"() : () -> ()
    %75 = arith.addf %74, %73 : vector<8x8x8xf32>
    %cst_45 = arith.constant dense<0xFF800000> : vector<8x8xf32>
    %76 = vector.multi_reduction <maximumf>, %75, %cst_45 [2] : vector<8x8x8xf32> to vector<8x8xf32>
    %77 = vector.shape_cast %76 : vector<8x8xf32> to vector<8x8x1xf32>
    %78 = vector.broadcast %77 : vector<8x8x1xf32> to vector<8x8x8xf32>
    %79 = arith.subf %75, %78 : vector<8x8x8xf32>
    %80 = math.exp %79 : vector<8x8x8xf32>
    %cst_46 = arith.constant dense<0.000000e+00> : vector<8x8xf32>
    %81 = vector.multi_reduction <add>, %80, %cst_46 [2] : vector<8x8x8xf32> to vector<8x8xf32>
    %82 = vector.shape_cast %81 : vector<8x8xf32> to vector<8x8x1xf32>
    %83 = tpu.reciprocal %82 {approx = true} : vector<8x8x1xf32> -> vector<8x8x1xf32>
    %84 = vector.broadcast %83 : vector<8x8x1xf32> to vector<8x8x8xf32>
    %85 = arith.mulf %80, %84 : vector<8x8x8xf32>
    "tpu.trace_start"() <{level = 10 : i32, message = "bqk,bkd->bqd"}> : () -> ()
    %cst_47 = arith.constant dense<0.000000e+00> : vector<8x8x8xf32>
    %86 = tpu.matmul %85, %72, %cst_47 {dimension_numbers = #tpu.dot_dimension_numbers<[2], [1], [1], [2], [0, 0, 0, 1, 1, 2], [0], [0]>} : vector<8x8x8xf32>, vector<8x8x8xf32>, vector<8x8x8xf32> -> vector<8x8x8xf32>
    "tpu.trace_stop"() : () -> ()
    %c0_48 = arith.constant 0 : index
    %c0_49 = arith.constant 0 : index
    %c16 = arith.constant 16 : index
    %87 = vector.load %arg16[%c0_48, %c0_49, %c16] : memref<8x8x32xf32, #tpu.memory_space<vmem>>, vector<8x8x8xf32>
    tpu.vector_store %arg16[%c0_48, %c0_49, %c16], %86 {strides = array<i32>} : memref<8x8x32xf32, #tpu.memory_space<vmem>>, vector<8x8x8xf32>,
    %88 = vector.extract_strided_slice %30 {offsets = [0, 0, 24], sizes = [8, 8, 8], strides = [1, 1, 1]} : vector<8x8x32xf32> to vector<8x8x8xf32>
    %89 = vector.extract_strided_slice %31 {offsets = [0, 0, 24], sizes = [8, 8, 8], strides = [1, 1, 1]} : vector<8x8x32xf32> to vector<8x8x8xf32>
    %90 = vector.extract_strided_slice %32 {offsets = [0, 0, 24], sizes = [8, 8, 8], strides = [1, 1, 1]} : vector<8x8x32xf32> to vector<8x8x8xf32>
    %91 = vector.extract_strided_slice %33 {offsets = [0, 0, 24], sizes = [8, 8, 8], strides = [1, 1, 1]} : vector<8x8x32xf32> to vector<8x8x8xf32>
    "tpu.trace_start"() <{level = 10 : i32, message = "bqd,bkd->bqk"}> : () -> ()
    %cst_50 = arith.constant dense<0.000000e+00> : vector<8x8x8xf32>
    %92 = tpu.matmul %88, %89, %cst_50 {dimension_numbers = #tpu.dot_dimension_numbers<[2], [2], [1], [1], [0, 0, 0, 1, 1, 1], [0], [0]>} : vector<8x8x8xf32>, vector<8x8x8xf32>, vector<8x8x8xf32> -> vector<8x8x8xf32>
    "tpu.trace_stop"() : () -> ()
    %93 = arith.addf %92, %91 : vector<8x8x8xf32>
    %cst_51 = arith.constant dense<0xFF800000> : vector<8x8xf32>
    %94 = vector.multi_reduction <maximumf>, %93, %cst_51 [2] : vector<8x8x8xf32> to vector<8x8xf32>
    %95 = vector.shape_cast %94 : vector<8x8xf32> to vector<8x8x1xf32>
    %96 = vector.broadcast %95 : vector<8x8x1xf32> to vector<8x8x8xf32>
    %97 = arith.subf %93, %96 : vector<8x8x8xf32>
    %98 = math.exp %97 : vector<8x8x8xf32>
    %cst_52 = arith.constant dense<0.000000e+00> : vector<8x8xf32>
    %99 = vector.multi_reduction <add>, %98, %cst_52 [2] : vector<8x8x8xf32> to vector<8x8xf32>
    %100 = vector.shape_cast %99 : vector<8x8xf32> to vector<8x8x1xf32>
    %101 = tpu.reciprocal %100 {approx = true} : vector<8x8x1xf32> -> vector<8x8x1xf32>
    %102 = vector.broadcast %101 : vector<8x8x1xf32> to vector<8x8x8xf32>
    %103 = arith.mulf %98, %102 : vector<8x8x8xf32>
    "tpu.trace_start"() <{level = 10 : i32, message = "bqk,bkd->bqd"}> : () -> ()
    %cst_53 = arith.constant dense<0.000000e+00> : vector<8x8x8xf32>
    %104 = tpu.matmul %103, %90, %cst_53 {dimension_numbers = #tpu.dot_dimension_numbers<[2], [1], [1], [2], [0, 0, 0, 1, 1, 2], [0], [0]>} : vector<8x8x8xf32>, vector<8x8x8xf32>, vector<8x8x8xf32> -> vector<8x8x8xf32>
    "tpu.trace_stop"() : () -> ()
    %c0_54 = arith.constant 0 : index
    %c0_55 = arith.constant 0 : index
    %c24 = arith.constant 24 : index
    %105 = vector.load %arg16[%c0_54, %c0_55, %c24] : memref<8x8x32xf32, #tpu.memory_space<vmem>>, vector<8x8x8xf32>
    tpu.vector_store %arg16[%c0_54, %c0_55, %c24], %104 {strides = array<i32>} : memref<8x8x32xf32, #tpu.memory_space<vmem>>, vector<8x8x8xf32>,
    %c0_56 = arith.constant 0 : index
    %c0_57 = arith.constant 0 : index
    %c0_58 = arith.constant 0 : index
    %106 = vector.load %arg16[%c0_56, %c0_57, %c0_58] : memref<8x8x32xf32, #tpu.memory_space<vmem>>, vector<8x8x32xf32>
    %107 = vector.shape_cast %106 : vector<8x8x32xf32> to vector<64x32xf32>
    %c0_59 = arith.constant 0 : index
    %c0_60 = arith.constant 0 : index
    %108 = vector.load %arg13[%c0_59, %c0_60] : memref<32x32xf32, #tpu.memory_space<vmem>>, vector<32x32xf32>
    %cst_61 = arith.constant dense<0.000000e+00> : vector<64x32xf32>
    %109 = tpu.matmul %107, %108, %cst_61 {dimension_numbers = #tpu.dot_dimension_numbers<[1], [0], [0], [1], [0, 0, 1, 1], [], []>} : vector<64x32xf32>, vector<32x32xf32>, vector<64x32xf32> -> vector<64x32xf32>
    %c0_62 = arith.constant 0 : index
    %c0_63 = arith.constant 0 : index
    %110 = vector.load %arg14[%c0_62, %c0_63] : memref<1x32xf32, #tpu.memory_space<vmem>>, vector<1x32xf32>
    %111 = vector.broadcast %110 : vector<1x32xf32> to vector<64x32xf32>
    %112 = arith.addf %109, %111 : vector<64x32xf32>
    %113 = vector.shape_cast %112 : vector<64x32xf32> to vector<8x8x32xf32>
    %c0_64 = arith.constant 0 : index
    %c0_65 = arith.constant 0 : index
    %c0_66 = arith.constant 0 : index
    %114 = vector.load %arg15[%c0_64, %c0_65, %c0_66] : memref<8x8x32xf32, #tpu.memory_space<vmem>>, vector<8x8x32xf32>
    tpu.vector_store %arg15[%c0_64, %c0_65, %c0_66], %113 {strides = array<i32>} : memref<8x8x32xf32, #tpu.memory_space<vmem>>, vector<8x8x32xf32>,
    return
  }
  func.func @transform_0(%arg0: i32) -> (i32, i32, i32) {
    %c0_i32 = arith.constant 0 : i32
    %c0_i32_0 = arith.constant 0 : i32
    %c0_i32_1 = arith.constant 0 : i32
    return %arg0, %c0_i32, %c0_i32_0 : i32, i32, i32
  }
  func.func @transform_1(%arg0: i32) -> (i32, i32, i32) {
    %c0_i32 = arith.constant 0 : i32
    %c0_i32_0 = arith.constant 0 : i32
    %c0_i32_1 = arith.constant 0 : i32
    return %arg0, %c0_i32, %c0_i32_0 : i32, i32, i32
  }
  func.func @transform_2(%arg0: i32) -> (i32, i32, i32) {
    %c0_i32 = arith.constant 0 : i32
    %c0_i32_0 = arith.constant 0 : i32
    %c0_i32_1 = arith.constant 0 : i32
    return %arg0, %c0_i32, %c0_i32_0 : i32, i32, i32
  }
  func.func @transform_3(%arg0: i32) -> (i32, i32, i32) {
    %c0_i32 = arith.constant 0 : i32
    %c0_i32_0 = arith.constant 0 : i32
    %c0_i32_1 = arith.constant 0 : i32
    return %arg0, %c0_i32, %c0_i32_0 : i32, i32, i32
  }
  func.func @transform_4(%arg0: i32) -> (i32, i32) {
    %c0_i32 = arith.constant 0 : i32
    %c0_i32_0 = arith.constant 0 : i32
    %c0_i32_1 = arith.constant 0 : i32
    return %c0_i32, %c0_i32_0 : i32, i32
  }
  func.func @transform_5(%arg0: i32) -> (i32, i32) {
    %c0_i32 = arith.constant 0 : i32
    %c0_i32_0 = arith.constant 0 : i32
    %c0_i32_1 = arith.constant 0 : i32
    return %c0_i32, %c0_i32_0 : i32, i32
  }
  func.func @transform_6(%arg0: i32) -> (i32, i32) {
    %c0_i32 = arith.constant 0 : i32
    %c0_i32_0 = arith.constant 0 : i32
    %c0_i32_1 = arith.constant 0 : i32
    return %c0_i32, %c0_i32_0 : i32, i32
  }
  func.func @transform_7(%arg0: i32) -> (i32, i32) {
    %c0_i32 = arith.constant 0 : i32
    %c0_i32_0 = arith.constant 0 : i32
    %c0_i32_1 = arith.constant 0 : i32
    return %c0_i32, %c0_i32_0 : i32, i32
  }
  func.func @transform_8(%arg0: i32) -> (i32, i32) {
    %c0_i32 = arith.constant 0 : i32
    %c0_i32_0 = arith.constant 0 : i32
    %c0_i32_1 = arith.constant 0 : i32
    return %c0_i32, %c0_i32_0 : i32, i32
  }
  func.func @transform_9(%arg0: i32) -> (i32, i32) {
    %c0_i32 = arith.constant 0 : i32
    %c0_i32_0 = arith.constant 0 : i32
    %c0_i32_1 = arith.constant 0 : i32
    return %c0_i32, %c0_i32_0 : i32, i32
  }
  func.func @transform_10(%arg0: i32) -> (i32, i32) {
    %c0_i32 = arith.constant 0 : i32
    %c0_i32_0 = arith.constant 0 : i32
    %c0_i32_1 = arith.constant 0 : i32
    return %c0_i32, %c0_i32_0 : i32, i32
  }
  func.func @transform_11(%arg0: i32) -> (i32, i32) {
    %c0_i32 = arith.constant 0 : i32
    %c0_i32_0 = arith.constant 0 : i32
    %c0_i32_1 = arith.constant 0 : i32
    return %c0_i32, %c0_i32_0 : i32, i32
  }
  func.func @transform_12(%arg0: i32) -> (i32, i32) {
    %c0_i32 = arith.constant 0 : i32
    %c0_i32_0 = arith.constant 0 : i32
    %c0_i32_1 = arith.constant 0 : i32
    return %c0_i32, %c0_i32_0 : i32, i32
  }
  func.func @transform_13(%arg0: i32) -> (i32, i32) {
    %c0_i32 = arith.constant 0 : i32
    %c0_i32_0 = arith.constant 0 : i32
    %c0_i32_1 = arith.constant 0 : i32
    return %c0_i32, %c0_i32_0 : i32, i32
  }
  func.func @transform_14(%arg0: i32) -> (i32, i32, i32) {
    %c0_i32 = arith.constant 0 : i32
    %c0_i32_0 = arith.constant 0 : i32
    %c0_i32_1 = arith.constant 0 : i32
    return %arg0, %c0_i32, %c0_i32_0 : i32, i32, i32
  }
}

</mosaic_0001>

<llo_original>
// kernel: tpu_custom_call.1
$region0: #{tpu_custom_call.1}
  #allocation0 [shape = 'u32[]', space=smem, size = 0x4, offset = 0x4, fixed_abs, tag = 'smem constant byte address 0x4 - core index']
  #allocation1 [shape = 'u32[72,128]{1,0:T(1,128)}', space=vmem, size = 0x9000, scoped, tag = 'internal scratch']
  #allocation2 [shape = 'f32[8,8,32]{2,1,0:T(8,128)}', space=vmem, size = 0x8000, scoped, tag = 'scratch operand']
  %s0 = inlined_call_operand.hbm [shape: f32[16,8,32], index: 0, kind: input, shape index: {}]
  %s1 = inlined_call_operand.hbm [shape: f32[16,8,32], index: 1, kind: input, shape index: {}]
  %s2 = inlined_call_operand.hbm [shape: f32[16,8,32], index: 2, kind: input, shape index: {}]
  %s3 = inlined_call_operand.hbm [shape: f32[16,8,32], index: 3, kind: input, shape index: {}]
  %s4 = inlined_call_operand.hbm [shape: f32[32,32], index: 4, kind: input, shape index: {}]
  %s5 = inlined_call_operand.vmem [shape: f32[1,32], index: 5, kind: input, shape index: {}]
  %s6 = inlined_call_operand.hbm [shape: f32[32,32], index: 6, kind: input, shape index: {}]
  %s7 = inlined_call_operand.vmem [shape: f32[1,32], index: 7, kind: input, shape index: {}]
  %s8 = inlined_call_operand.hbm [shape: f32[32,32], index: 8, kind: input, shape index: {}]
  %s9 = inlined_call_operand.vmem [shape: f32[1,32], index: 9, kind: input, shape index: {}]
  %s10 = inlined_call_operand.hbm [shape: f32[32,32], index: 10, kind: input, shape index: {}]
  %s11 = inlined_call_operand.vmem [shape: f32[1,32], index: 11, kind: input, shape index: {}]
  %s12 = inlined_call_operand.hbm [shape: f32[32,32], index: 12, kind: input, shape index: {}]
  %s13 = inlined_call_operand.vmem [shape: f32[1,32], index: 13, kind: input, shape index: {}]
  %s14 = inlined_call_operand.hbm [shape: f32[16,8,32], index: 14, kind: output, shape index: {}]
  %s15 = sld [smem:[#allocation0]]
  $region125: #{tpu_custom_call.1} parent=0
    _
  %s17 = ssub.s32 1, %s15
  %s18 = scalar_select 0, %s17, %s15
  $region1: #{tpu_custom_call.1} parent=0
    #allocation3 [shape = 'u8[65536]{0}', space=vmem, size = 0x10000, scoped, tag = 'input window, operand 0']
    #allocation4 [shape = 's32[2]{0}', space=sflag, size = 0x8, scoped, tag = 'scoped memory for tpu_custom_call.1']
    #allocation5 [shape = 's32[2]{0}', space=sflag, size = 0x8, scoped, tag = 'scoped memory for tpu_custom_call.1']
    #allocation6 [shape = 'u8[65536]{0}', space=vmem, size = 0x10000, scoped, tag = 'input window, operand 1']
    #allocation7 [shape = 's32[2]{0}', space=sflag, size = 0x8, scoped, tag = 'scoped memory for tpu_custom_call.1']
    #allocation8 [shape = 'u8[65536]{0}', space=vmem, size = 0x10000, scoped, tag = 'input window, operand 2']
    #allocation9 [shape = 'u8[65536]{0}', space=vmem, size = 0x10000, scoped, tag = 'input window, operand 3']
    #allocation10 [shape = 's32[2]{0}', space=sflag, size = 0x8, scoped, tag = 'scoped memory for tpu_custom_call.1']
    #allocation11 [shape = 'u8[16384]{0}', space=vmem, size = 0x4000, scoped, tag = 'input window, operand 4, single buffered']
    #allocation12 [shape = 'u8[16384]{0}', space=vmem, size = 0x4000, scoped, tag = 'input window, operand 6, single buffered']
    #allocation13 [shape = 's32[1]{0}', space=sflag, size = 0x4, scoped, tag = 'scoped memory for tpu_custom_call.1']
    #allocation14 [shape = 'u8[16384]{0}', space=vmem, size = 0x4000, scoped, tag = 'input window, operand 8, single buffered']
    #allocation15 [shape = 'u8[16384]{0}', space=vmem, size = 0x4000, scoped, tag = 'input window, operand 10, single buffered']
    #allocation16 [shape = 's32[1]{0}', space=sflag, size = 0x4, scoped, tag = 'scoped memory for tpu_custom_call.1']
    #allocation17 [shape = 'u8[16384]{0}', space=vmem, size = 0x4000, scoped, tag = 'input window, operand 12, single buffered']
    #allocation18 [shape = 'u8[65536]{0}', space=vmem, size = 0x10000, scoped, tag = 'output window, operand 0']
    %19 = vsyncpa [#allocation4], 0
    %s20 = scalar_lea.sflag [#allocation4], 1
    %21 = vsyncpa %s20, 0
    %22 = vsyncpa [#allocation7], 0
    %s23 = scalar_lea.sflag [#allocation7], 1
    %24 = vsyncpa %s23, 0
    %25 = vsyncpa [#allocation10], 0
    %s26 = scalar_lea.sflag [#allocation10], 1
    %27 = vsyncpa %s26, 0
    %28 = vsyncpa [#allocation13], 0
    %29 = vsyncpa [#allocation16], 0
    %30 = vsyncpa [#allocation5], 0
    %s31 = scalar_lea.sflag [#allocation5], 1
    %32 = vsyncpa %s31, 0
    loop: start=0, step=1, limit=4
    $region2: #{tpu_custom_call.1} parent=1 // loop_pre_header
      _
    $region3: #{tpu_custom_call.1} parent=1 // loop_header
      %s34 = sphi 0, %s38
      %p35 = scmp.ge.s32.totalorder %s34, 4
      %s44 = sphi 0, %s46
      %s47 = sphi 0, %s44
      %s48 = sphi 0, %s47
      %s64 = sphi 0, %s48
      %s70 = sphi 0, %s72
      %s73 = sphi 0, %s70
      %s74 = sphi 0, %s73
      %s90 = sphi 0, %s74
      %s96 = sphi 0, %s98
      %s99 = sphi 0, %s96
      %s100 = sphi 0, %s99
      %s116 = sphi 0, %s100
      %s122 = sphi 0, %s124
      %s125 = sphi 0, %s122
      %s126 = sphi 0, %s125
      %s142 = sphi 0, %s126
      %s146 = sphi 0, %s146
      %s148 = sphi 0, %s146
      %s149 = sphi 0, %s148
      %s163 = sphi 0, %s149
      %s167 = sphi 0, %s167
      %s169 = sphi 0, %s167
      %s170 = sphi 0, %s169
      %s184 = sphi 0, %s170
      %s188 = sphi 0, %s188
      %s190 = sphi 0, %s188
      %s191 = sphi 0, %s190
      %s205 = sphi 0, %s191
      %s209 = sphi 0, %s209
      %s211 = sphi 0, %s209
      %s212 = sphi 0, %s211
      %s226 = sphi 0, %s212
      %s230 = sphi 0, %s230
      %s232 = sphi 0, %s230
      %s233 = sphi 0, %s232
      %s247 = sphi 0, %s233
      %s251 = sphi 0, %s251
      %s253 = sphi 0, %s251
      %s254 = sphi 0, %s253
      %s268 = sphi 0, %s254
      %s272 = sphi 0, %s272
      %s274 = sphi 0, %s272
      %s275 = sphi 0, %s274
      %s289 = sphi 0, %s275
      %s293 = sphi 0, %s293
      %s295 = sphi 0, %s293
      %s296 = sphi 0, %s295
      %s310 = sphi 0, %s296
      %s314 = sphi 0, %s314
      %s316 = sphi 0, %s314
      %s317 = sphi 0, %s316
      %s331 = sphi 0, %s317
      %s335 = sphi 0, %s335
      %s337 = sphi 0, %s335
      %s338 = sphi 0, %s337
      %s352 = sphi 0, %s338
      %s358 = sphi 0, %s360
      %s361 = sphi 0, %s358
      %s362 = sphi 0, %s361
      %s378 = sphi 0, %s362
    $region4: #{tpu_custom_call.1} parent=1 // loop_header_branch
      %37 = sbr.rel (%p35) target = $region8
    $region5: #{tpu_custom_call.1} parent=1 // loop_body
      %s39 = ssub.s32 %s34, 1
      %s40 = ssub.s32 %s34, 2
      %s41 = sadd.s32 %s34, 1
      %s42 = ssub.s32 %s34, %s41
      %p43 = scmp.eq.s32.totalorder %s42, 0
      %s45 = sadd.s32 %s44, 1
      %s46 = scalar_select %p43, %s44, %s45
      %p49 = pneg %p43
      %p50 = scmp.eq.s32.totalorder %s34, 1
      %p51 = por %p49, %p50
      %p52 = scmp.ne.s32.totalorder %s44, %s47
      %p53 = scmp.eq.s32.totalorder %s34, 0
      %p54 = por %p52, %p53
      %p55 = scmp.ne.s32.totalorder %s44, %s47
      %p56 = scmp.eq.s32.totalorder %s39, 1
      %p57 = por %p55, %p56
      %p58 = scmp.ne.s32.totalorder %s47, %s48
      %p59 = scmp.eq.s32.totalorder %s39, 0
      %p60 = por %p58, %p59
      %p61 = scmp.ne.s32.totalorder %s47, %s48
      %p62 = scmp.eq.s32.totalorder %s40, 1
      %p63 = por %p61, %p62
      %p65 = scmp.ne.s32.totalorder %s48, %s64
      %p66 = scmp.eq.s32.totalorder %s40, 0
      %p67 = por %p65, %p66
      %s68 = ssub.s32 %s34, %s41
      %p69 = scmp.eq.s32.totalorder %s68, 0
      %s71 = sadd.s32 %s70, 1
      %s72 = scalar_select %p69, %s70, %s71
      %p75 = pneg %p69
      %p76 = scmp.eq.s32.totalorder %s34, 1
      %p77 = por %p75, %p76
      %p78 = scmp.ne.s32.totalorder %s70, %s73
      %p79 = scmp.eq.s32.totalorder %s34, 0
      %p80 = por %p78, %p79
      %p81 = scmp.ne.s32.totalorder %s70, %s73
      %p82 = scmp.eq.s32.totalorder %s39, 1
      %p83 = por %p81, %p82
      %p84 = scmp.ne.s32.totalorder %s73, %s74
      %p85 = scmp.eq.s32.totalorder %s39, 0
      %p86 = por %p84, %p85
      %p87 = scmp.ne.s32.totalorder %s73, %s74
      %p88 = scmp.eq.s32.totalorder %s40, 1
      %p89 = por %p87, %p88
      %p91 = scmp.ne.s32.totalorder %s74, %s90
      %p92 = scmp.eq.s32.totalorder %s40, 0
      %p93 = por %p91, %p92
      %s94 = ssub.s32 %s34, %s41
      %p95 = scmp.eq.s32.totalorder %s94, 0
      %s97 = sadd.s32 %s96, 1
      %s98 = scalar_select %p95, %s96, %s97
      %p101 = pneg %p95
      %p102 = scmp.eq.s32.totalorder %s34, 1
      %p103 = por %p101, %p102
      %p104 = scmp.ne.s32.totalorder %s96, %s99
      %p105 = scmp.eq.s32.totalorder %s34, 0
      %p106 = por %p104, %p105
      %p107 = scmp.ne.s32.totalorder %s96, %s99
      %p108 = scmp.eq.s32.totalorder %s39, 1
      %p109 = por %p107, %p108
      %p110 = scmp.ne.s32.totalorder %s99, %s100
      %p111 = scmp.eq.s32.totalorder %s39, 0
      %p112 = por %p110, %p111
      %p113 = scmp.ne.s32.totalorder %s99, %s100
      %p114 = scmp.eq.s32.totalorder %s40, 1
      %p115 = por %p113, %p114
      %p117 = scmp.ne.s32.totalorder %s100, %s116
      %p118 = scmp.eq.s32.totalorder %s40, 0
      %p119 = por %p117, %p118
      %s120 = ssub.s32 %s34, %s41
      %p121 = scmp.eq.s32.totalorder %s120, 0
      %s123 = sadd.s32 %s122, 1
      %s124 = scalar_select %p121, %s122, %s123
      %p127 = pneg %p121
      %p128 = scmp.eq.s32.totalorder %s34, 1
      %p129 = por %p127, %p128
      %p130 = scmp.ne.s32.totalorder %s122, %s125
      %p131 = scmp.eq.s32.totalorder %s34, 0
      %p132 = por %p130, %p131
      %p133 = scmp.ne.s32.totalorder %s122, %s125
      %p134 = scmp.eq.s32.totalorder %s39, 1
      %p135 = por %p133, %p134
      %p136 = scmp.ne.s32.totalorder %s125, %s126
      %p137 = scmp.eq.s32.totalorder %s39, 0
      %p138 = por %p136, %p137
      %p139 = scmp.ne.s32.totalorder %s125, %s126
      %p140 = scmp.eq.s32.totalorder %s40, 1
      %p141 = por %p139, %p140
      %p143 = scmp.ne.s32.totalorder %s126, %s142
      %p144 = scmp.eq.s32.totalorder %s40, 0
      %p145 = por %p143, %p144
      %s147 = sadd.s32 %s146, 1
      %p150 = scmp.eq.s32.totalorder %s34, 1
      %p151 = scmp.ne.s32.totalorder %s146, %s148
      %p152 = scmp.eq.s32.totalorder %s34, 0
      %p153 = por %p151, %p152
      %p154 = scmp.ne.s32.totalorder %s146, %s148
      %p155 = scmp.eq.s32.totalorder %s39, 1
      %p156 = por %p154, %p155
      %p157 = scmp.ne.s32.totalorder %s148, %s149
      %p158 = scmp.eq.s32.totalorder %s39, 0
      %p159 = por %p157, %p158
      %p160 = scmp.ne.s32.totalorder %s148, %s149
      %p161 = scmp.eq.s32.totalorder %s40, 1
      %p162 = por %p160, %p161
      %p164 = scmp.ne.s32.totalorder %s149, %s163
      %p165 = scmp.eq.s32.totalorder %s40, 0
      %p166 = por %p164, %p165
      %s168 = sadd.s32 %s167, 1
      %p171 = scmp.eq.s32.totalorder %s34, 1
      %p172 = scmp.ne.s32.totalorder %s167, %s169
      %p173 = scmp.eq.s32.totalorder %s34, 0
      %p174 = por %p172, %p173
      %p175 = scmp.ne.s32.totalorder %s167, %s169
      %p176 = scmp.eq.s32.totalorder %s39, 1
      %p177 = por %p175, %p176
      %p178 = scmp.ne.s32.totalorder %s169, %s170
      %p179 = scmp.eq.s32.totalorder %s39, 0
      %p180 = por %p178, %p179
      %p181 = scmp.ne.s32.totalorder %s169, %s170
      %p182 = scmp.eq.s32.totalorder %s40, 1
      %p183 = por %p181, %p182
      %p185 = scmp.ne.s32.totalorder %s170, %s184
      %p186 = scmp.eq.s32.totalorder %s40, 0
      %p187 = por %p185, %p186
      %s189 = sadd.s32 %s188, 1
      %p192 = scmp.eq.s32.totalorder %s34, 1
      %p193 = scmp.ne.s32.totalorder %s188, %s190
      %p194 = scmp.eq.s32.totalorder %s34, 0
      %p195 = por %p193, %p194
      %p196 = scmp.ne.s32.totalorder %s188, %s190
      %p197 = scmp.eq.s32.totalorder %s39, 1
      %p198 = por %p196, %p197
      %p199 = scmp.ne.s32.totalorder %s190, %s191
      %p200 = scmp.eq.s32.totalorder %s39, 0
      %p201 = por %p199, %p200
      %p202 = scmp.ne.s32.totalorder %s190, %s191
      %p203 = scmp.eq.s32.totalorder %s40, 1
      %p204 = por %p202, %p203
      %p206 = scmp.ne.s32.totalorder %s191, %s205
      %p207 = scmp.eq.s32.totalorder %s40, 0
      %p208 = por %p206, %p207
      %s210 = sadd.s32 %s209, 1
      %p213 = scmp.eq.s32.totalorder %s34, 1
      %p214 = scmp.ne.s32.totalorder %s209, %s211
      %p215 = scmp.eq.s32.totalorder %s34, 0
      %p216 = por %p214, %p215
      %p217 = scmp.ne.s32.totalorder %s209, %s211
      %p218 = scmp.eq.s32.totalorder %s39, 1
      %p219 = por %p217, %p218
      %p220 = scmp.ne.s32.totalorder %s211, %s212
      %p221 = scmp.eq.s32.totalorder %s39, 0
      %p222 = por %p220, %p221
      %p223 = scmp.ne.s32.totalorder %s211, %s212
      %p224 = scmp.eq.s32.totalorder %s40, 1
      %p225 = por %p223, %p224
      %p227 = scmp.ne.s32.totalorder %s212, %s226
      %p228 = scmp.eq.s32.totalorder %s40, 0
      %p229 = por %p227, %p228
      %s231 = sadd.s32 %s230, 1
      %p234 = scmp.eq.s32.totalorder %s34, 1
      %p235 = scmp.ne.s32.totalorder %s230, %s232
      %p236 = scmp.eq.s32.totalorder %s34, 0
      %p237 = por %p235, %p236
      %p238 = scmp.ne.s32.totalorder %s230, %s232
      %p239 = scmp.eq.s32.totalorder %s39, 1
      %p240 = por %p238, %p239
      %p241 = scmp.ne.s32.totalorder %s232, %s233
      %p242 = scmp.eq.s32.totalorder %s39, 0
      %p243 = por %p241, %p242
      %p244 = scmp.ne.s32.totalorder %s232, %s233
      %p245 = scmp.eq.s32.totalorder %s40, 1
      %p246 = por %p244, %p245
      %p248 = scmp.ne.s32.totalorder %s233, %s247
      %p249 = scmp.eq.s32.totalorder %s40, 0
      %p250 = por %p248, %p249
      %s252 = sadd.s32 %s251, 1
      %p255 = scmp.eq.s32.totalorder %s34, 1
      %p256 = scmp.ne.s32.totalorder %s251, %s253
      %p257 = scmp.eq.s32.totalorder %s34, 0
      %p258 = por %p256, %p257
      %p259 = scmp.ne.s32.totalorder %s251, %s253
      %p260 = scmp.eq.s32.totalorder %s39, 1
      %p261 = por %p259, %p260
      %p262 = scmp.ne.s32.totalorder %s253, %s254
      %p263 = scmp.eq.s32.totalorder %s39, 0
      %p264 = por %p262, %p263
      %p265 = scmp.ne.s32.totalorder %s253, %s254
      %p266 = scmp.eq.s32.totalorder %s40, 1
      %p267 = por %p265, %p266
      %p269 = scmp.ne.s32.totalorder %s254, %s268
      %p270 = scmp.eq.s32.totalorder %s40, 0
      %p271 = por %p269, %p270
      %s273 = sadd.s32 %s272, 1
      %p276 = scmp.eq.s32.totalorder %s34, 1
      %p277 = scmp.ne.s32.totalorder %s272, %s274
      %p278 = scmp.eq.s32.totalorder %s34, 0
      %p279 = por %p277, %p278
      %p280 = scmp.ne.s32.totalorder %s272, %s274
      %p281 = scmp.eq.s32.totalorder %s39, 1
      %p282 = por %p280, %p281
      %p283 = scmp.ne.s32.totalorder %s274, %s275
      %p284 = scmp.eq.s32.totalorder %s39, 0
      %p285 = por %p283, %p284
      %p286 = scmp.ne.s32.totalorder %s274, %s275
      %p287 = scmp.eq.s32.totalorder %s40, 1
      %p288 = por %p286, %p287
      %p290 = scmp.ne.s32.totalorder %s275, %s289
      %p291 = scmp.eq.s32.totalorder %s40, 0
      %p292 = por %p290, %p291
      %s294 = sadd.s32 %s293, 1
      %p297 = scmp.eq.s32.totalorder %s34, 1
      %p298 = scmp.ne.s32.totalorder %s293, %s295
      %p299 = scmp.eq.s32.totalorder %s34, 0
      %p300 = por %p298, %p299
      %p301 = scmp.ne.s32.totalorder %s293, %s295
      %p302 = scmp.eq.s32.totalorder %s39, 1
      %p303 = por %p301, %p302
      %p304 = scmp.ne.s32.totalorder %s295, %s296
      %p305 = scmp.eq.s32.totalorder %s39, 0
      %p306 = por %p304, %p305
      %p307 = scmp.ne.s32.totalorder %s295, %s296
      %p308 = scmp.eq.s32.totalorder %s40, 1
      %p309 = por %p307, %p308
      %p311 = scmp.ne.s32.totalorder %s296, %s310
      %p312 = scmp.eq.s32.totalorder %s40, 0
      %p313 = por %p311, %p312
      %s315 = sadd.s32 %s314, 1
      %p318 = scmp.eq.s32.totalorder %s34, 1
      %p319 = scmp.ne.s32.totalorder %s314, %s316
      %p320 = scmp.eq.s32.totalorder %s34, 0
      %p321 = por %p319, %p320
      %p322 = scmp.ne.s32.totalorder %s314, %s316
      %p323 = scmp.eq.s32.totalorder %s39, 1
      %p324 = por %p322, %p323
      %p325 = scmp.ne.s32.totalorder %s316, %s317
      %p326 = scmp.eq.s32.totalorder %s39, 0
      %p327 = por %p325, %p326
      %p328 = scmp.ne.s32.totalorder %s316, %s317
      %p329 = scmp.eq.s32.totalorder %s40, 1
      %p330 = por %p328, %p329
      %p332 = scmp.ne.s32.totalorder %s317, %s331
      %p333 = scmp.eq.s32.totalorder %s40, 0
      %p334 = por %p332, %p333
      %s336 = sadd.s32 %s335, 1
      %p339 = scmp.eq.s32.totalorder %s34, 1
      %p340 = scmp.ne.s32.totalorder %s335, %s337
      %p341 = scmp.eq.s32.totalorder %s34, 0
      %p342 = por %p340, %p341
      %p343 = scmp.ne.s32.totalorder %s335, %s337
      %p344 = scmp.eq.s32.totalorder %s39, 1
      %p345 = por %p343, %p344
      %p346 = scmp.ne.s32.totalorder %s337, %s338
      %p347 = scmp.eq.s32.totalorder %s39, 0
      %p348 = por %p346, %p347
      %p349 = scmp.ne.s32.totalorder %s337, %s338
      %p350 = scmp.eq.s32.totalorder %s40, 1
      %p351 = por %p349, %p350
      %p353 = scmp.ne.s32.totalorder %s338, %s352
      %p354 = scmp.eq.s32.totalorder %s40, 0
      %p355 = por %p353, %p354
      %s356 = ssub.s32 %s34, %s41
      %p357 = scmp.eq.s32.totalorder %s356, 0
      %s359 = sadd.s32 %s358, 1
      %s360 = scalar_select %p357, %s358, %s359
      %p363 = pneg %p357
      %p364 = scmp.eq.s32.totalorder %s34, 1
      %p365 = por %p363, %p364
      %p366 = scmp.ne.s32.totalorder %s358, %s361
      %p367 = scmp.eq.s32.totalorder %s34, 0
      %p368 = por %p366, %p367
      %p369 = scmp.ne.s32.totalorder %s358, %s361
      %p370 = scmp.eq.s32.totalorder %s39, 1
      %p371 = por %p369, %p370
      %p372 = scmp.ne.s32.totalorder %s361, %s362
      %p373 = scmp.eq.s32.totalorder %s39, 0
      %p374 = por %p372, %p373
      %p375 = scmp.ne.s32.totalorder %s361, %s362
      %p376 = scmp.eq.s32.totalorder %s40, 1
      %p377 = por %p375, %p376
      %p379 = scmp.ne.s32.totalorder %s362, %s378
      %p380 = scmp.eq.s32.totalorder %s40, 0
      %p381 = por %p379, %p380
      %p382 = scmp.le.s32.totalorder 1, %s34
      %p383 = scmp.lt.s32.totalorder %s34, 3
      %p384 = pnand %p382, %p383
      %p385 = pneg %p384
      // Predicated region
      $region9: #{tpu_custom_call.1} parent=5 // pred_check
        _
      $region10: #{tpu_custom_call.1} parent=5 // pred_check_branch
        %387 = sbr.rel (%p384) target = $region12
      $region11: #{tpu_custom_call.1} parent=5 // pred_region
        %s388 = ssub.s32 %s34, 1
        // Predicated region
        $region13: #{tpu_custom_call.1} parent=11 // pred_check
          %p389 = pneg %p159
        $region14: #{tpu_custom_call.1} parent=11 // pred_check_branch
          %391 = sbr.rel (%p389) target = $region16
        $region15: #{tpu_custom_call.1} parent=11 // pred_region
          %393 = vsyncadd [#allocation10], 0
          %s394 = sshll.u32 %s4, 4
          %s395 = int_to_ptr.hbm [resolvable:$true] %s394
          %s396 = sshll.u32 [#allocation11], 4
          %s397 = int_to_ptr.vmem [resolvable:$true] %s396
          %402 = dma.hbm_to_vmem [thread:$0]  %s395, 512, %s397, [#allocation10], 128, 128, 8
        $region16: #{tpu_custom_call.1} parent=11 // pred_fallthru
          _
        // Predicated region
        $region17: #{tpu_custom_call.1} parent=11 // pred_check
          %p403 = pneg %p180
        $region18: #{tpu_custom_call.1} parent=11 // pred_check_branch
          %405 = sbr.rel (%p403) target = $region20
        $region19: #{tpu_custom_call.1} parent=11 // pred_region
          _
        $region20: #{tpu_custom_call.1} parent=11 // pred_fallthru
          _
        // Predicated region
        $region21: #{tpu_custom_call.1} parent=11 // pred_check
          %p406 = pneg %p201
        $region22: #{tpu_custom_call.1} parent=11 // pred_check_branch
          %408 = sbr.rel (%p406) target = $region24
        $region23: #{tpu_custom_call.1} parent=11 // pred_region
          %410 = vsyncadd [#allocation13], 0
          %s411 = sshll.u32 %s6, 4
          %s412 = int_to_ptr.hbm [resolvable:$true] %s411
          %s413 = sshll.u32 [#allocation12], 4
          %s414 = int_to_ptr.vmem [resolvable:$true] %s413
          %419 = dma.hbm_to_vmem [thread:$0]  %s412, 512, %s414, [#allocation13], 128, 128, 8
        $region24: #{tpu_custom_call.1} parent=11 // pred_fallthru
          _
        // Predicated region
        $region25: #{tpu_custom_call.1} parent=11 // pred_check
          %p420 = pneg %p222
        $region26: #{tpu_custom_call.1} parent=11 // pred_check_branch
          %422 = sbr.rel (%p420) target = $region28
        $region27: #{tpu_custom_call.1} parent=11 // pred_region
          _
        $region28: #{tpu_custom_call.1} parent=11 // pred_fallthru
          _
        // Predicated region
        $region29: #{tpu_custom_call.1} parent=11 // pred_check
          %p423 = pneg %p243
        $region30: #{tpu_custom_call.1} parent=11 // pred_check_branch
          %425 = sbr.rel (%p423) target = $region32
        $region31: #{tpu_custom_call.1} parent=11 // pred_region
          %427 = vsyncadd [#allocation13], 0
          %s428 = sshll.u32 %s8, 4
          %s429 = int_to_ptr.hbm [resolvable:$true] %s428
          %s430 = sshll.u32 [#allocation14], 4
          %s431 = int_to_ptr.vmem [resolvable:$true] %s430
          %436 = dma.hbm_to_vmem [thread:$0]  %s429, 512, %s431, [#allocation13], 128, 128, 8
        $region32: #{tpu_custom_call.1} parent=11 // pred_fallthru
          _
        // Predicated region
        $region33: #{tpu_custom_call.1} parent=11 // pred_check
          %p437 = pneg %p264
        $region34: #{tpu_custom_call.1} parent=11 // pred_check_branch
          %439 = sbr.rel (%p437) target = $region36
        $region35: #{tpu_custom_call.1} parent=11 // pred_region
          _
        $region36: #{tpu_custom_call.1} parent=11 // pred_fallthru
          _
        // Predicated region
        $region37: #{tpu_custom_call.1} parent=11 // pred_check
          %p440 = pneg %p285
        $region38: #{tpu_custom_call.1} parent=11 // pred_check_branch
          %442 = sbr.rel (%p440) target = $region40
        $region39: #{tpu_custom_call.1} parent=11 // pred_region
          %444 = vsyncadd [#allocation16], 0
          %s445 = sshll.u32 %s10, 4
          %s446 = int_to_ptr.hbm [resolvable:$true] %s445
          %s447 = sshll.u32 [#allocation15], 4
          %s448 = int_to_ptr.vmem [resolvable:$true] %s447
          %453 = dma.hbm_to_vmem [thread:$0]  %s446, 512, %s448, [#allocation16], 128, 128, 8
        $region40: #{tpu_custom_call.1} parent=11 // pred_fallthru
          _
        // Predicated region
        $region41: #{tpu_custom_call.1} parent=11 // pred_check
          %p454 = pneg %p306
        $region42: #{tpu_custom_call.1} parent=11 // pred_check_branch
          %456 = sbr.rel (%p454) target = $region44
        $region43: #{tpu_custom_call.1} parent=11 // pred_region
          _
        $region44: #{tpu_custom_call.1} parent=11 // pred_fallthru
          _
        // Predicated region
        $region45: #{tpu_custom_call.1} parent=11 // pred_check
          %p457 = pneg %p327
        $region46: #{tpu_custom_call.1} parent=11 // pred_check_branch
          %459 = sbr.rel (%p457) target = $region48
        $region47: #{tpu_custom_call.1} parent=11 // pred_region
          %461 = vsyncadd [#allocation16], 0
          %s462 = sshll.u32 %s12, 4
          %s463 = int_to_ptr.hbm [resolvable:$true] %s462
          %s464 = sshll.u32 [#allocation17], 4
          %s465 = int_to_ptr.vmem [resolvable:$true] %s464
          %470 = dma.hbm_to_vmem [thread:$0]  %s463, 512, %s465, [#allocation16], 128, 128, 8
        $region48: #{tpu_custom_call.1} parent=11 // pred_fallthru
          _
        // Predicated region
        $region49: #{tpu_custom_call.1} parent=11 // pred_check
          %p471 = pneg %p348
        $region50: #{tpu_custom_call.1} parent=11 // pred_check_branch
          %473 = sbr.rel (%p471) target = $region52
        $region51: #{tpu_custom_call.1} parent=11 // pred_region
          _
        $region52: #{tpu_custom_call.1} parent=11 // pred_fallthru
          _
      $region12: #{tpu_custom_call.1} parent=5 // pred_fallthru
        _
      %p474 = scmp.lt.s32.totalorder %s34, 2
      // Predicated region
      $region53: #{tpu_custom_call.1} parent=5 // pred_check
        %p475 = pneg %p474
      $region54: #{tpu_custom_call.1} parent=5 // pred_check_branch
        %477 = sbr.rel (%p475) target = $region56
      $region55: #{tpu_custom_call.1} parent=5 // pred_region
        // Predicated region
        $region57: #{tpu_custom_call.1} parent=55 // pred_check
          %p478 = pneg %p54
        $region58: #{tpu_custom_call.1} parent=55 // pred_check_branch
          %480 = sbr.rel (%p478) target = $region60
        $region59: #{tpu_custom_call.1} parent=55 // pred_region
          %s481 = sand.u32 %s44, 1
          %s482 = scalar_lea.sflag [#allocation4], %s481
          %s483 = sand.u32 %s44, 1
          %s484 = smul.addr %s483, 64
          %s485 = scalar_lea.vmem [#allocation3], %s484
          %s486 = smul.u32 8, %s34
          %488 = vsyncadd %s482, 0
          %s489 = smul.addr %s486, 8
          %s490 = scalar_lea.hbm %s0, %s489
          %s491 = sshll.u32 %s490, 4
          %s492 = int_to_ptr.hbm [resolvable:$true] %s491
          %s493 = sshll.u32 %s485, 4
          %s494 = int_to_ptr.vmem [resolvable:$true] %s493
          %499 = dma.hbm_to_vmem [thread:$0]  %s492, 1024, %s494, %s482, 128, 128, 8
        $region60: #{tpu_custom_call.1} parent=55 // pred_fallthru
          _
        // Predicated region
        $region61: #{tpu_custom_call.1} parent=55 // pred_check
          %p500 = pneg %p80
        $region62: #{tpu_custom_call.1} parent=55 // pred_check_branch
          %502 = sbr.rel (%p500) target = $region64
        $region63: #{tpu_custom_call.1} parent=55 // pred_region
          %s503 = sand.u32 %s34, 1
          %s504 = scalar_lea.sflag [#allocation7], %s503
          %s505 = sand.u32 %s70, 1
          %s506 = smul.addr %s505, 64
          %s507 = scalar_lea.vmem [#allocation6], %s506
          %s508 = smul.u32 8, %s34
          %510 = vsyncadd %s504, 0
          %s511 = smul.addr %s508, 8
          %s512 = scalar_lea.hbm %s1, %s511
          %s513 = sshll.u32 %s512, 4
          %s514 = int_to_ptr.hbm [resolvable:$true] %s513
          %s515 = sshll.u32 %s507, 4
          %s516 = int_to_ptr.vmem [resolvable:$true] %s515
          %521 = dma.hbm_to_vmem [thread:$0]  %s514, 1024, %s516, %s504, 128, 128, 8
        $region64: #{tpu_custom_call.1} parent=55 // pred_fallthru
          _
        // Predicated region
        $region65: #{tpu_custom_call.1} parent=55 // pred_check
          %p522 = pneg %p106
        $region66: #{tpu_custom_call.1} parent=55 // pred_check_branch
          %524 = sbr.rel (%p522) target = $region68
        $region67: #{tpu_custom_call.1} parent=55 // pred_region
          %s525 = sand.u32 %s34, 1
          %s526 = scalar_lea.sflag [#allocation7], %s525
          %s527 = sand.u32 %s96, 1
          %s528 = smul.addr %s527, 64
          %s529 = scalar_lea.vmem [#allocation8], %s528
          %s530 = smul.u32 8, %s34
          %532 = vsyncadd %s526, 0
          %s533 = smul.addr %s530, 8
          %s534 = scalar_lea.hbm %s2, %s533
          %s535 = sshll.u32 %s534, 4
          %s536 = int_to_ptr.hbm [resolvable:$true] %s535
          %s537 = sshll.u32 %s529, 4
          %s538 = int_to_ptr.vmem [resolvable:$true] %s537
          %543 = dma.hbm_to_vmem [thread:$0]  %s536, 1024, %s538, %s526, 128, 128, 8
        $region68: #{tpu_custom_call.1} parent=55 // pred_fallthru
          _
        // Predicated region
        $region69: #{tpu_custom_call.1} parent=55 // pred_check
          %p544 = pneg %p132
        $region70: #{tpu_custom_call.1} parent=55 // pred_check_branch
          %546 = sbr.rel (%p544) target = $region72
        $region71: #{tpu_custom_call.1} parent=55 // pred_region
          %s547 = sand.u32 %s34, 1
          %s548 = scalar_lea.sflag [#allocation10], %s547
          %s549 = sand.u32 %s122, 1
          %s550 = smul.addr %s549, 64
          %s551 = scalar_lea.vmem [#allocation9], %s550
          %s552 = smul.u32 8, %s34
          %554 = vsyncadd %s548, 0
          %s555 = smul.addr %s552, 8
          %s556 = scalar_lea.hbm %s3, %s555
          %s557 = sshll.u32 %s556, 4
          %s558 = int_to_ptr.hbm [resolvable:$true] %s557
          %s559 = sshll.u32 %s551, 4
          %s560 = int_to_ptr.vmem [resolvable:$true] %s559
          %565 = dma.hbm_to_vmem [thread:$0]  %s558, 1024, %s560, %s548, 128, 128, 8
        $region72: #{tpu_custom_call.1} parent=55 // pred_fallthru
          _
      $region56: #{tpu_custom_call.1} parent=5 // pred_fallthru
        _
      %p566 = scmp.le.s32.totalorder 1, %s34
      %p567 = scmp.lt.s32.totalorder %s34, 3
      %p568 = pnand %p566, %p567
      %p569 = pneg %p568
      // Predicated region
      $region73: #{tpu_custom_call.1} parent=5 // pred_check
        _
      $region74: #{tpu_custom_call.1} parent=5 // pred_check_branch
        %571 = sbr.rel (%p568) target = $region76
      $region75: #{tpu_custom_call.1} parent=5 // pred_region
        %s572 = ssub.s32 %s34, 1
        %s573 = sand.u32 %s47, 1
        %s574 = scalar_lea.sflag [#allocation4], %s573
        %s575 = sand.u32 %s47, 1
        %s576 = smul.addr %s575, 64
        %s577 = scalar_lea.vmem [#allocation3], %s576
        // Predicated region
        $region77: #{tpu_custom_call.1} parent=75 // pred_check
          %p578 = pneg %p60
        $region78: #{tpu_custom_call.1} parent=75 // pred_check_branch
          %580 = sbr.rel (%p578) target = $region80
        $region79: #{tpu_custom_call.1} parent=75 // pred_region
          %582 = dma.done %s574, 1024
        $region80: #{tpu_custom_call.1} parent=75 // pred_fallthru
          _
        %s583 = sand.u32 %s39, 1
        %s584 = scalar_lea.sflag [#allocation7], %s583
        %s585 = sand.u32 %s73, 1
        %s586 = smul.addr %s585, 64
        %s587 = scalar_lea.vmem [#allocation6], %s586
        // Predicated region
        $region81: #{tpu_custom_call.1} parent=75 // pred_check
          %p588 = pneg %p86
        $region82: #{tpu_custom_call.1} parent=75 // pred_check_branch
          %590 = sbr.rel (%p588) target = $region84
        $region83: #{tpu_custom_call.1} parent=75 // pred_region
          %592 = dma.done %s584, 1024
        $region84: #{tpu_custom_call.1} parent=75 // pred_fallthru
          _
        %s593 = sand.u32 %s39, 1
        %s594 = scalar_lea.sflag [#allocation7], %s593
        %s595 = sand.u32 %s99, 1
        %s596 = smul.addr %s595, 64
        %s597 = scalar_lea.vmem [#allocation8], %s596
        // Predicated region
        $region85: #{tpu_custom_call.1} parent=75 // pred_check
          %p598 = pneg %p112
        $region86: #{tpu_custom_call.1} parent=75 // pred_check_branch
          %600 = sbr.rel (%p598) target = $region88
        $region87: #{tpu_custom_call.1} parent=75 // pred_region
          %602 = dma.done %s594, 1024
        $region88: #{tpu_custom_call.1} parent=75 // pred_fallthru
          _
        %s603 = sand.u32 %s39, 1
        %s604 = scalar_lea.sflag [#allocation10], %s603
        %s605 = sand.u32 %s125, 1
        %s606 = smul.addr %s605, 64
        %s607 = scalar_lea.vmem [#allocation9], %s606
        // Predicated region
        $region89: #{tpu_custom_call.1} parent=75 // pred_check
          %p608 = pneg %p138
        $region90: #{tpu_custom_call.1} parent=75 // pred_check_branch
          %610 = sbr.rel (%p608) target = $region92
        $region91: #{tpu_custom_call.1} parent=75 // pred_region
          %612 = dma.done %s604, 1024
        $region92: #{tpu_custom_call.1} parent=75 // pred_fallthru
          _
        // Predicated region
        $region93: #{tpu_custom_call.1} parent=75 // pred_check
          %p613 = pneg %p159
        $region94: #{tpu_custom_call.1} parent=75 // pred_check_branch
          %615 = sbr.rel (%p613) target = $region96
        $region95: #{tpu_custom_call.1} parent=75 // pred_region
          %617 = dma.done [#allocation10], 512
        $region96: #{tpu_custom_call.1} parent=75 // pred_fallthru
          _
        // Predicated region
        $region97: #{tpu_custom_call.1} parent=75 // pred_check
          %p618 = pneg %p201
        $region98: #{tpu_custom_call.1} parent=75 // pred_check_branch
          %620 = sbr.rel (%p618) target = $region100
        $region99: #{tpu_custom_call.1} parent=75 // pred_region
          %622 = dma.done [#allocation13], 512
        $region100: #{tpu_custom_call.1} parent=75 // pred_fallthru
          _
        // Predicated region
        $region101: #{tpu_custom_call.1} parent=75 // pred_check
          %p623 = pneg %p243
        $region102: #{tpu_custom_call.1} parent=75 // pred_check_branch
          %625 = sbr.rel (%p623) target = $region104
        $region103: #{tpu_custom_call.1} parent=75 // pred_region
          %627 = dma.done [#allocation13], 512
        $region104: #{tpu_custom_call.1} parent=75 // pred_fallthru
          _
        // Predicated region
        $region105: #{tpu_custom_call.1} parent=75 // pred_check
          %p628 = pneg %p285
        $region106: #{tpu_custom_call.1} parent=75 // pred_check_branch
          %630 = sbr.rel (%p628) target = $region108
        $region107: #{tpu_custom_call.1} parent=75 // pred_region
          %632 = dma.done [#allocation16], 512
        $region108: #{tpu_custom_call.1} parent=75 // pred_fallthru
          _
        // Predicated region
        $region109: #{tpu_custom_call.1} parent=75 // pred_check
          %p633 = pneg %p327
        $region110: #{tpu_custom_call.1} parent=75 // pred_check_branch
          %635 = sbr.rel (%p633) target = $region112
        $region111: #{tpu_custom_call.1} parent=75 // pred_region
          %637 = dma.done [#allocation16], 512
        $region112: #{tpu_custom_call.1} parent=75 // pred_fallthru
          _
        %s638 = sand.u32 %s47, 1
        %s639 = scalar_lea.sflag [#allocation4], %s638
        %s640 = sand.u32 %s47, 1
        %s641 = smul.addr %s640, 64
        %s642 = scalar_lea.vmem [#allocation3], %s641
        %p643 = pneg %p60
        %p644 = pneg %p57
        %s645 = sand.u32 %s39, 1
        %s646 = scalar_lea.sflag [#allocation7], %s645
        %s647 = sand.u32 %s73, 1
        %s648 = smul.addr %s647, 64
        %s649 = scalar_lea.vmem [#allocation6], %s648
        %p650 = pneg %p86
        %p651 = pneg %p83
        %s652 = sand.u32 %s39, 1
        %s653 = scalar_lea.sflag [#allocation7], %s652
        %s654 = sand.u32 %s99, 1
        %s655 = smul.addr %s654, 64
        %s656 = scalar_lea.vmem [#allocation8], %s655
        %p657 = pneg %p112
        %p658 = pneg %p109
        %s659 = sand.u32 %s39, 1
        %s660 = scalar_lea.sflag [#allocation10], %s659
        %s661 = sand.u32 %s125, 1
        %s662 = smul.addr %s661, 64
        %s663 = scalar_lea.vmem [#allocation9], %s662
        %p664 = pneg %p138
        %p665 = pneg %p135
        %p666 = pneg %p159
        %p667 = pneg %p156
        %p668 = pneg %p180
        %p669 = pneg %p177
        %p670 = pneg %p201
        %p671 = pneg %p198
        %p672 = pneg %p222
        %p673 = pneg %p219
        %p674 = pneg %p243
        %p675 = pneg %p240
        %p676 = pneg %p264
        %p677 = pneg %p261
        %p678 = pneg %p285
        %p679 = pneg %p282
        %p680 = pneg %p306
        %p681 = pneg %p303
        %p682 = pneg %p327
        %p683 = pneg %p324
        %p684 = pneg %p348
        %p685 = pneg %p345
        %p686 = pneg %p374
        %p687 = pneg %p371
        %s688 = sand.u32 %s361, 1
        %s689 = scalar_lea.sflag [#allocation5], %s688
        %s690 = sand.u32 %s361, 1
        %s691 = smul.addr %s690, 64
        %s692 = scalar_lea.vmem [#allocation18], %s691
        %s693 = smul.u32 8, %s39
        %s694 = smul.u32 8, %s39
        %s695 = smul.u32 8, %s39
        %s696 = smul.u32 8, %s39
        %s697 = smul.u32 8, %s39
        %v698 = vld [vmem:[%s577] sm:$0xff]
        %v699 = vld [vmem:[%s577 + $0x8] sm:$0xff]
        %v700 = vld [vmem:[%s577 + $0x10] sm:$0xff]
        %v701 = vld [vmem:[%s577 + $0x18] sm:$0xff]
        %v702 = vld [vmem:[%s577 + $0x20] sm:$0xff]
        %v703 = vld [vmem:[%s577 + $0x28] sm:$0xff]
        %v704 = vld [vmem:[%s577 + $0x30] sm:$0xff]
        %v705 = vld [vmem:[%s577 + $0x38] sm:$0xff]
        %v706 = vld [vmem:[%s587] sm:$0xff]
        %v707 = vld [vmem:[%s587 + $0x8] sm:$0xff]
        %v708 = vld [vmem:[%s587 + $0x10] sm:$0xff]
        %v709 = vld [vmem:[%s587 + $0x18] sm:$0xff]
        %v710 = vld [vmem:[%s587 + $0x20] sm:$0xff]
        %v711 = vld [vmem:[%s587 + $0x28] sm:$0xff]
        %v712 = vld [vmem:[%s587 + $0x30] sm:$0xff]
        %v713 = vld [vmem:[%s587 + $0x38] sm:$0xff]
        %v714 = vld [vmem:[%s597] sm:$0xff]
        %v715 = vld [vmem:[%s597 + $0x8] sm:$0xff]
        %v716 = vld [vmem:[%s597 + $0x10] sm:$0xff]
        %v717 = vld [vmem:[%s597 + $0x18] sm:$0xff]
        %v718 = vld [vmem:[%s597 + $0x20] sm:$0xff]
        %v719 = vld [vmem:[%s597 + $0x28] sm:$0xff]
        %v720 = vld [vmem:[%s597 + $0x30] sm:$0xff]
        %v721 = vld [vmem:[%s597 + $0x38] sm:$0xff]
        %v722 = vld [vmem:[%s607] sm:$0xff]
        %v723 = vld [vmem:[%s607 + $0x8] sm:$0xff]
        %v724 = vld [vmem:[%s607 + $0x10] sm:$0xff]
        %v725 = vld [vmem:[%s607 + $0x18] sm:$0xff]
        %v726 = vld [vmem:[%s607 + $0x20] sm:$0xff]
        %v727 = vld [vmem:[%s607 + $0x28] sm:$0xff]
        %v728 = vld [vmem:[%s607 + $0x30] sm:$0xff]
        %v729 = vld [vmem:[%s607 + $0x38] sm:$0xff]
        %v730 = vld [vmem:[#allocation11] sm:$0xff]
        %v731 = vld [vmem:[#allocation11 + $0x8] sm:$0xff]
        %v732 = vld [vmem:[#allocation11 + $0x10] sm:$0xff]
        %v733 = vld [vmem:[#allocation11 + $0x18] sm:$0xff]
        %v734 = vld [vmem:[%s5] sm:$0x1]
        %v736 = vperm.slane %v734, 0
        %vm738 = vcmask 261120
        %v740 = vsel %vm738, %v698, 0
        %v743 = vsel %vm738, %v699, 0
        %v746 = vsel %vm738, %v700, 0
        %v749 = vsel %vm738, %v701, 0
        %v752 = vsel %vm738, %v702, 0
        %v755 = vsel %vm738, %v703, 0
        %v758 = vsel %vm738, %v704, 0
        %v761 = vsel %vm738, %v705, 0
        %763 = vmatpush.msra.mxu0 0.0
        %764 = vmatpush.msra.mxu0 0.0
        %765 = vmatpush.msra.mxu0 0.0
        %766 = vmatpush.msra.mxu0 0.0
        %767 = vmatpush.msra.mxu0 0.0
        %768 = vmatpush.msra.mxu0 0.0
        %769 = vmatpush.msra.mxu0 0.0
        %770 = vmatpush.msra.mxu0 0.0
        %771 = vmatpush.msra.mxu0 0.0
        %772 = vmatpush.msra.mxu0 0.0
        %773 = vmatpush.msra.mxu0 0.0
        %774 = vmatpush.msra.mxu0 0.0
        %775 = vmatpush.msra.mxu0 %v733
        %776 = vmatpush.msra.mxu0 %v732
        %777 = vmatpush.msra.mxu0 %v731
        %778 = vmatpush.msra.mxu0 %v730
        %779 = vmatmul.f32.gmra.mxu0 %v740
        %v780 = vpop.f32.mrf.mxu0
        %v781 = vadd.f32 %v736, %v780
        %782 = vmatmul.f32.gmra.mxu0 %v743
        %v783 = vpop.f32.mrf.mxu0
        %v784 = vadd.f32 %v736, %v783
        %785 = vmatmul.f32.gmra.mxu0 %v746
        %v786 = vpop.f32.mrf.mxu0
        %v787 = vadd.f32 %v736, %v786
        %788 = vmatmul.f32.gmra.mxu0 %v749
        %v789 = vpop.f32.mrf.mxu0
        %v790 = vadd.f32 %v736, %v789
        %791 = vmatmul.f32.gmra.mxu0 %v752
        %v792 = vpop.f32.mrf.mxu0
        %v793 = vadd.f32 %v736, %v792
        %794 = vmatmul.f32.gmra.mxu0 %v755
        %v795 = vpop.f32.mrf.mxu0
        %v796 = vadd.f32 %v736, %v795
        %797 = vmatmul.f32.gmra.mxu0 %v758
        %v798 = vpop.f32.mrf.mxu0
        %v799 = vadd.f32 %v736, %v798
        %800 = vmatmul.f32.gmra.mxu0 %v761
        %v801 = vpop.f32.mrf.mxu0
        %v802 = vadd.f32 %v736, %v801
        %803 = vdwg.mxu0
        %v804 = vld [vmem:[#allocation12] sm:$0xff]
        %v805 = vld [vmem:[#allocation12 + $0x8] sm:$0xff]
        %v806 = vld [vmem:[#allocation12 + $0x10] sm:$0xff]
        %v807 = vld [vmem:[#allocation12 + $0x18] sm:$0xff]
        %v808 = vld [vmem:[%s7] sm:$0x1]
        %v810 = vperm.slane %v808, 0
        %v813 = vsel %vm738, %v706, 0
        %v816 = vsel %vm738, %v707, 0
        %v819 = vsel %vm738, %v708, 0
        %v822 = vsel %vm738, %v709, 0
        %v825 = vsel %vm738, %v710, 0
        %v828 = vsel %vm738, %v711, 0
        %v831 = vsel %vm738, %v712, 0
        %v834 = vsel %vm738, %v713, 0
        %836 = vmatpush.msra.mxu0 0.0
        %837 = vmatpush.msra.mxu0 0.0
        %838 = vmatpush.msra.mxu0 0.0
        %839 = vmatpush.msra.mxu0 0.0
        %840 = vmatpush.msra.mxu0 0.0
        %841 = vmatpush.msra.mxu0 0.0
        %842 = vmatpush.msra.mxu0 0.0
        %843 = vmatpush.msra.mxu0 0.0
        %844 = vmatpush.msra.mxu0 0.0
        %845 = vmatpush.msra.mxu0 0.0
        %846 = vmatpush.msra.mxu0 0.0
        %847 = vmatpush.msra.mxu0 0.0
        %848 = vmatpush.msra.mxu0 %v807
        %849 = vmatpush.msra.mxu0 %v806
        %850 = vmatpush.msra.mxu0 %v805
        %851 = vmatpush.msra.mxu0 %v804
        %852 = vmatmul.f32.gmra.mxu0 %v813
        %v853 = vpop.f32.mrf.mxu0
        %v854 = vadd.f32 %v810, %v853
        %855 = vmatmul.f32.gmra.mxu0 %v816
        %v856 = vpop.f32.mrf.mxu0
        %v857 = vadd.f32 %v810, %v856
        %858 = vmatmul.f32.gmra.mxu0 %v819
        %v859 = vpop.f32.mrf.mxu0
        %v860 = vadd.f32 %v810, %v859
        %861 = vmatmul.f32.gmra.mxu0 %v822
        %v862 = vpop.f32.mrf.mxu0
        %v863 = vadd.f32 %v810, %v862
        %864 = vmatmul.f32.gmra.mxu0 %v825
        %v865 = vpop.f32.mrf.mxu0
        %v866 = vadd.f32 %v810, %v865
        %867 = vmatmul.f32.gmra.mxu0 %v828
        %v868 = vpop.f32.mrf.mxu0
        %v869 = vadd.f32 %v810, %v868
        %870 = vmatmul.f32.gmra.mxu0 %v831
        %v871 = vpop.f32.mrf.mxu0
        %v872 = vadd.f32 %v810, %v871
        %873 = vmatmul.f32.gmra.mxu0 %v834
        %v874 = vpop.f32.mrf.mxu0
        %v875 = vadd.f32 %v810, %v874
        %876 = vdwg.mxu0
        %v877 = vld [vmem:[#allocation14] sm:$0xff]
        %v878 = vld [vmem:[#allocation14 + $0x8] sm:$0xff]
        %v879 = vld [vmem:[#allocation14 + $0x10] sm:$0xff]
        %v880 = vld [vmem:[#allocation14 + $0x18] sm:$0xff]
        %v881 = vld [vmem:[%s9] sm:$0x1]
        %v883 = vperm.slane %v881, 0
        %v886 = vsel %vm738, %v714, 0
        %v889 = vsel %vm738, %v715, 0
        %v892 = vsel %vm738, %v716, 0
        %v895 = vsel %vm738, %v717, 0
        %v898 = vsel %vm738, %v718, 0
        %v901 = vsel %vm738, %v719, 0
        %v904 = vsel %vm738, %v720, 0
        %v907 = vsel %vm738, %v721, 0
        %909 = vmatpush.msra.mxu0 0.0
        %910 = vmatpush.msra.mxu0 0.0
        %911 = vmatpush.msra.mxu0 0.0
        %912 = vmatpush.msra.mxu0 0.0
        %913 = vmatpush.msra.mxu0 0.0
        %914 = vmatpush.msra.mxu0 0.0
        %915 = vmatpush.msra.mxu0 0.0
        %916 = vmatpush.msra.mxu0 0.0
        %917 = vmatpush.msra.mxu0 0.0
        %918 = vmatpush.msra.mxu0 0.0
        %919 = vmatpush.msra.mxu0 0.0
        %920 = vmatpush.msra.mxu0 0.0
        %921 = vmatpush.msra.mxu0 %v880
        %922 = vmatpush.msra.mxu0 %v879
        %923 = vmatpush.msra.mxu0 %v878
        %924 = vmatpush.msra.mxu0 %v877
        %925 = vmatmul.f32.gmra.mxu0 %v886
        %v926 = vpop.f32.mrf.mxu0
        %v927 = vadd.f32 %v883, %v926
        %928 = vmatmul.f32.gmra.mxu0 %v889
        %v929 = vpop.f32.mrf.mxu0
        %v930 = vadd.f32 %v883, %v929
        %931 = vmatmul.f32.gmra.mxu0 %v892
        %v932 = vpop.f32.mrf.mxu0
        %v933 = vadd.f32 %v883, %v932
        %934 = vmatmul.f32.gmra.mxu0 %v895
        %v935 = vpop.f32.mrf.mxu0
        %v936 = vadd.f32 %v883, %v935
        %937 = vmatmul.f32.gmra.mxu0 %v898
        %v938 = vpop.f32.mrf.mxu0
        %v939 = vadd.f32 %v883, %v938
        %940 = vmatmul.f32.gmra.mxu0 %v901
        %v941 = vpop.f32.mrf.mxu0
        %v942 = vadd.f32 %v883, %v941
        %943 = vmatmul.f32.gmra.mxu0 %v904
        %v944 = vpop.f32.mrf.mxu0
        %v945 = vadd.f32 %v883, %v944
        %946 = vmatmul.f32.gmra.mxu0 %v907
        %v947 = vpop.f32.mrf.mxu0
        %v948 = vadd.f32 %v883, %v947
        %949 = vdwg.mxu0
        %v950 = vld [vmem:[#allocation15] sm:$0xff]
        %v951 = vld [vmem:[#allocation15 + $0x8] sm:$0xff]
        %v952 = vld [vmem:[#allocation15 + $0x10] sm:$0xff]
        %v953 = vld [vmem:[#allocation15 + $0x18] sm:$0xff]
        %v954 = vld [vmem:[%s11] sm:$0x1]
        %v956 = vperm.slane %v954, 0
        %v959 = vsel %vm738, %v722, 0
        %v962 = vsel %vm738, %v723, 0
        %v965 = vsel %vm738, %v724, 0
        %v968 = vsel %vm738, %v725, 0
        %v971 = vsel %vm738, %v726, 0
        %v974 = vsel %vm738, %v727, 0
        %v977 = vsel %vm738, %v728, 0
        %v980 = vsel %vm738, %v729, 0
        %982 = vmatpush.msra.mxu0 0.0
        %983 = vmatpush.msra.mxu0 0.0
        %984 = vmatpush.msra.mxu0 0.0
        %985 = vmatpush.msra.mxu0 0.0
        %986 = vmatpush.msra.mxu0 0.0
        %987 = vmatpush.msra.mxu0 0.0
        %988 = vmatpush.msra.mxu0 0.0
        %989 = vmatpush.msra.mxu0 0.0
        %990 = vmatpush.msra.mxu0 0.0
        %991 = vmatpush.msra.mxu0 0.0
        %992 = vmatpush.msra.mxu0 0.0
        %993 = vmatpush.msra.mxu0 0.0
        %994 = vmatpush.msra.mxu0 %v953
        %995 = vmatpush.msra.mxu0 %v952
        %996 = vmatpush.msra.mxu0 %v951
        %997 = vmatpush.msra.mxu0 %v950
        %998 = vmatmul.f32.gmra.mxu0 %v959
        %v999 = vpop.f32.mrf.mxu0
        %v1000 = vadd.f32 %v956, %v999
        %1001 = vmatmul.f32.gmra.mxu0 %v962
        %v1002 = vpop.f32.mrf.mxu0
        %v1003 = vadd.f32 %v956, %v1002
        %1004 = vmatmul.f32.gmra.mxu0 %v965
        %v1005 = vpop.f32.mrf.mxu0
        %v1006 = vadd.f32 %v956, %v1005
        %1007 = vmatmul.f32.gmra.mxu0 %v968
        %v1008 = vpop.f32.mrf.mxu0
        %v1009 = vadd.f32 %v956, %v1008
        %1010 = vmatmul.f32.gmra.mxu0 %v971
        %v1011 = vpop.f32.mrf.mxu0
        %v1012 = vadd.f32 %v956, %v1011
        %1013 = vmatmul.f32.gmra.mxu0 %v974
        %v1014 = vpop.f32.mrf.mxu0
        %v1015 = vadd.f32 %v956, %v1014
        %1016 = vmatmul.f32.gmra.mxu0 %v977
        %v1017 = vpop.f32.mrf.mxu0
        %v1018 = vadd.f32 %v956, %v1017
        %1019 = vmatmul.f32.gmra.mxu0 %v980
        %v1020 = vpop.f32.mrf.mxu0
        %v1021 = vadd.f32 %v956, %v1020
        %1022 = vdwg.mxu0
        %v1023 = vmul.f32 %v781, 0.35355338
        %v1024 = vmul.f32 %v784, 0.35355338
        %v1025 = vmul.f32 %v787, 0.35355338
        %v1026 = vmul.f32 %v790, 0.35355338
        %v1027 = vmul.f32 %v793, 0.35355338
        %v1028 = vmul.f32 %v796, 0.35355338
        %v1029 = vmul.f32 %v799, 0.35355338
        %v1030 = vmul.f32 %v802, 0.35355338
        %vm1031 = vcmask 64512
        %v1033 = vsel %vm1031, %v1023, 0
        %v1036 = vsel %vm1031, %v854, 0
        %1038 = vmatpush.xpose.msra.mxu0 0.0
        %1039 = vmatpush.xpose.msra.mxu0 0.0
        %1040 = vmatpush.xpose.msra.mxu0 0.0
        %1041 = vmatpush.xpose.msra.mxu0 0.0
        %1042 = vmatpush.xpose.msra.mxu0 0.0
        %1043 = vmatpush.xpose.msra.mxu0 0.0
        %1044 = vmatpush.xpose.msra.mxu0 0.0
        %1045 = vmatpush.xpose.msra.mxu0 0.0
        %1046 = vmatpush.xpose.msra.mxu0 0.0
        %1047 = vmatpush.xpose.msra.mxu0 0.0
        %1048 = vmatpush.xpose.msra.mxu0 0.0
        %1049 = vmatpush.xpose.msra.mxu0 0.0
        %1050 = vmatpush.xpose.msra.mxu0 0.0
        %1051 = vmatpush.xpose.msra.mxu0 0.0
        %1052 = vmatpush.xpose.msra.mxu0 0.0
        %1053 = vmatpush.xpose.msra.mxu0 %v1036
        %1054 = vmatmul.f32.gmra.mxu0 %v1033
        %v1055 = vpop.f32.mrf.mxu0
        %v1056 = vadd.f32 %v1000, %v1055
        %1057 = vdwg.mxu0
        %v1059 = vsel %vm1031, %v1024, 0
        %v1062 = vsel %vm1031, %v857, 0
        %1064 = vmatpush.xpose.msra.mxu0 0.0
        %1065 = vmatpush.xpose.msra.mxu0 0.0
        %1066 = vmatpush.xpose.msra.mxu0 0.0
        %1067 = vmatpush.xpose.msra.mxu0 0.0
        %1068 = vmatpush.xpose.msra.mxu0 0.0
        %1069 = vmatpush.xpose.msra.mxu0 0.0
        %1070 = vmatpush.xpose.msra.mxu0 0.0
        %1071 = vmatpush.xpose.msra.mxu0 0.0
        %1072 = vmatpush.xpose.msra.mxu0 0.0
        %1073 = vmatpush.xpose.msra.mxu0 0.0
        %1074 = vmatpush.xpose.msra.mxu0 0.0
        %1075 = vmatpush.xpose.msra.mxu0 0.0
        %1076 = vmatpush.xpose.msra.mxu0 0.0
        %1077 = vmatpush.xpose.msra.mxu0 0.0
        %1078 = vmatpush.xpose.msra.mxu0 0.0
        %1079 = vmatpush.xpose.msra.mxu0 %v1062
        %1080 = vmatmul.f32.gmra.mxu0 %v1059
        %v1081 = vpop.f32.mrf.mxu0
        %v1082 = vadd.f32 %v1003, %v1081
        %1083 = vdwg.mxu0
        %v1085 = vsel %vm1031, %v1025, 0
        %v1088 = vsel %vm1031, %v860, 0
        %1090 = vmatpush.xpose.msra.mxu0 0.0
        %1091 = vmatpush.xpose.msra.mxu0 0.0
        %1092 = vmatpush.xpose.msra.mxu0 0.0
        %1093 = vmatpush.xpose.msra.mxu0 0.0
        %1094 = vmatpush.xpose.msra.mxu0 0.0
        %1095 = vmatpush.xpose.msra.mxu0 0.0
        %1096 = vmatpush.xpose.msra.mxu0 0.0
        %1097 = vmatpush.xpose.msra.mxu0 0.0
        %1098 = vmatpush.xpose.msra.mxu0 0.0
        %1099 = vmatpush.xpose.msra.mxu0 0.0
        %1100 = vmatpush.xpose.msra.mxu0 0.0
        %1101 = vmatpush.xpose.msra.mxu0 0.0
        %1102 = vmatpush.xpose.msra.mxu0 0.0
        %1103 = vmatpush.xpose.msra.mxu0 0.0
        %1104 = vmatpush.xpose.msra.mxu0 0.0
        %1105 = vmatpush.xpose.msra.mxu0 %v1088
        %1106 = vmatmul.f32.gmra.mxu0 %v1085
        %v1107 = vpop.f32.mrf.mxu0
        %v1108 = vadd.f32 %v1006, %v1107
        %1109 = vdwg.mxu0
        %v1111 = vsel %vm1031, %v1026, 0
        %v1114 = vsel %vm1031, %v863, 0
        %1116 = vmatpush.xpose.msra.mxu0 0.0
        %1117 = vmatpush.xpose.msra.mxu0 0.0
        %1118 = vmatpush.xpose.msra.mxu0 0.0
        %1119 = vmatpush.xpose.msra.mxu0 0.0
        %1120 = vmatpush.xpose.msra.mxu0 0.0
        %1121 = vmatpush.xpose.msra.mxu0 0.0
        %1122 = vmatpush.xpose.msra.mxu0 0.0
        %1123 = vmatpush.xpose.msra.mxu0 0.0
        %1124 = vmatpush.xpose.msra.mxu0 0.0
        %1125 = vmatpush.xpose.msra.mxu0 0.0
        %1126 = vmatpush.xpose.msra.mxu0 0.0
        %1127 = vmatpush.xpose.msra.mxu0 0.0
        %1128 = vmatpush.xpose.msra.mxu0 0.0
        %1129 = vmatpush.xpose.msra.mxu0 0.0
        %1130 = vmatpush.xpose.msra.mxu0 0.0
        %1131 = vmatpush.xpose.msra.mxu0 %v1114
        %1132 = vmatmul.f32.gmra.mxu0 %v1111
        %v1133 = vpop.f32.mrf.mxu0
        %v1134 = vadd.f32 %v1009, %v1133
        %1135 = vdwg.mxu0
        %v1137 = vsel %vm1031, %v1027, 0
        %v1140 = vsel %vm1031, %v866, 0
        %1142 = vmatpush.xpose.msra.mxu0 0.0
        %1143 = vmatpush.xpose.msra.mxu0 0.0
        %1144 = vmatpush.xpose.msra.mxu0 0.0
        %1145 = vmatpush.xpose.msra.mxu0 0.0
        %1146 = vmatpush.xpose.msra.mxu0 0.0
        %1147 = vmatpush.xpose.msra.mxu0 0.0
        %1148 = vmatpush.xpose.msra.mxu0 0.0
        %1149 = vmatpush.xpose.msra.mxu0 0.0
        %1150 = vmatpush.xpose.msra.mxu0 0.0
        %1151 = vmatpush.xpose.msra.mxu0 0.0
        %1152 = vmatpush.xpose.msra.mxu0 0.0
        %1153 = vmatpush.xpose.msra.mxu0 0.0
        %1154 = vmatpush.xpose.msra.mxu0 0.0
        %1155 = vmatpush.xpose.msra.mxu0 0.0
        %1156 = vmatpush.xpose.msra.mxu0 0.0
        %1157 = vmatpush.xpose.msra.mxu0 %v1140
        %1158 = vmatmul.f32.gmra.mxu0 %v1137
        %v1159 = vpop.f32.mrf.mxu0
        %v1160 = vadd.f32 %v1012, %v1159
        %1161 = vdwg.mxu0
        %v1163 = vsel %vm1031, %v1028, 0
        %v1166 = vsel %vm1031, %v869, 0
        %1168 = vmatpush.xpose.msra.mxu0 0.0
        %1169 = vmatpush.xpose.msra.mxu0 0.0
        %1170 = vmatpush.xpose.msra.mxu0 0.0
        %1171 = vmatpush.xpose.msra.mxu0 0.0
        %1172 = vmatpush.xpose.msra.mxu0 0.0
        %1173 = vmatpush.xpose.msra.mxu0 0.0
        %1174 = vmatpush.xpose.msra.mxu0 0.0
        %1175 = vmatpush.xpose.msra.mxu0 0.0
        %1176 = vmatpush.xpose.msra.mxu0 0.0
        %1177 = vmatpush.xpose.msra.mxu0 0.0
        %1178 = vmatpush.xpose.msra.mxu0 0.0
        %1179 = vmatpush.xpose.msra.mxu0 0.0
        %1180 = vmatpush.xpose.msra.mxu0 0.0
        %1181 = vmatpush.xpose.msra.mxu0 0.0
        %1182 = vmatpush.xpose.msra.mxu0 0.0
        %1183 = vmatpush.xpose.msra.mxu0 %v1166
        %1184 = vmatmul.f32.gmra.mxu0 %v1163
        %v1185 = vpop.f32.mrf.mxu0
        %v1186 = vadd.f32 %v1015, %v1185
        %1187 = vdwg.mxu0
        %v1189 = vsel %vm1031, %v1029, 0
        %v1192 = vsel %vm1031, %v872, 0
        %1194 = vmatpush.xpose.msra.mxu0 0.0
        %1195 = vmatpush.xpose.msra.mxu0 0.0
        %1196 = vmatpush.xpose.msra.mxu0 0.0
        %1197 = vmatpush.xpose.msra.mxu0 0.0
        %1198 = vmatpush.xpose.msra.mxu0 0.0
        %1199 = vmatpush.xpose.msra.mxu0 0.0
        %1200 = vmatpush.xpose.msra.mxu0 0.0
        %1201 = vmatpush.xpose.msra.mxu0 0.0
        %1202 = vmatpush.xpose.msra.mxu0 0.0
        %1203 = vmatpush.xpose.msra.mxu0 0.0
        %1204 = vmatpush.xpose.msra.mxu0 0.0
        %1205 = vmatpush.xpose.msra.mxu0 0.0
        %1206 = vmatpush.xpose.msra.mxu0 0.0
        %1207 = vmatpush.xpose.msra.mxu0 0.0
        %1208 = vmatpush.xpose.msra.mxu0 0.0
        %1209 = vmatpush.xpose.msra.mxu0 %v1192
        %1210 = vmatmul.f32.gmra.mxu0 %v1189
        %v1211 = vpop.f32.mrf.mxu0
        %v1212 = vadd.f32 %v1018, %v1211
        %1213 = vdwg.mxu0
        %v1215 = vsel %vm1031, %v1030, 0
        %v1218 = vsel %vm1031, %v875, 0
        %1220 = vmatpush.xpose.msra.mxu0 0.0
        %1221 = vmatpush.xpose.msra.mxu0 0.0
        %1222 = vmatpush.xpose.msra.mxu0 0.0
        %1223 = vmatpush.xpose.msra.mxu0 0.0
        %1224 = vmatpush.xpose.msra.mxu0 0.0
        %1225 = vmatpush.xpose.msra.mxu0 0.0
        %1226 = vmatpush.xpose.msra.mxu0 0.0
        %1227 = vmatpush.xpose.msra.mxu0 0.0
        %1228 = vmatpush.xpose.msra.mxu0 0.0
        %1229 = vmatpush.xpose.msra.mxu0 0.0
        %1230 = vmatpush.xpose.msra.mxu0 0.0
        %1231 = vmatpush.xpose.msra.mxu0 0.0
        %1232 = vmatpush.xpose.msra.mxu0 0.0
        %1233 = vmatpush.xpose.msra.mxu0 0.0
        %1234 = vmatpush.xpose.msra.mxu0 0.0
        %1235 = vmatpush.xpose.msra.mxu0 %v1218
        %1236 = vmatmul.f32.gmra.mxu0 %v1215
        %v1237 = vpop.f32.mrf.mxu0
        %v1238 = vadd.f32 %v1021, %v1237
        %1239 = vdwg.mxu0
        %v1240 = vsel %vm1031, %v1056, -inf
        %1241 = vmax.xlane.f32.xlu0 %v1240
        %v1242 = vpop.xlane.xlu0 %1241
        %v1243 = vsel %vm1031, %v1082, -inf
        %1244 = vmax.xlane.f32.xlu0 %v1243
        %v1245 = vpop.xlane.xlu0 %1244
        %v1246 = vsel %vm1031, %v1108, -inf
        %1247 = vmax.xlane.f32.xlu0 %v1246
        %v1248 = vpop.xlane.xlu0 %1247
        %v1249 = vsel %vm1031, %v1134, -inf
        %1250 = vmax.xlane.f32.xlu0 %v1249
        %v1251 = vpop.xlane.xlu0 %1250
        %v1252 = vsel %vm1031, %v1160, -inf
        %1253 = vmax.xlane.f32.xlu0 %v1252
        %v1254 = vpop.xlane.xlu0 %1253
        %v1255 = vsel %vm1031, %v1186, -inf
        %1256 = vmax.xlane.f32.xlu0 %v1255
        %v1257 = vpop.xlane.xlu0 %1256
        %v1258 = vsel %vm1031, %v1212, -inf
        %1259 = vmax.xlane.f32.xlu0 %v1258
        %v1260 = vpop.xlane.xlu0 %1259
        %v1261 = vsel %vm1031, %v1238, -inf
        %1262 = vmax.xlane.f32.xlu0 %v1261
        %v1263 = vpop.xlane.xlu0 %1262
        %v1264 = vsub.f32 %v1056, %v1242
        %v1265 = vsub.f32 %v1082, %v1245
        %v1266 = vsub.f32 %v1108, %v1248
        %v1267 = vsub.f32 %v1134, %v1251
        %v1268 = vsub.f32 %v1160, %v1254
        %v1269 = vsub.f32 %v1186, %v1257
        %v1270 = vsub.f32 %v1212, %v1260
        %v1271 = vsub.f32 %v1238, %v1263
        %v1272 = vmul.f32 %v1264, 1.442695
        %v1273 = vpow.pop %v1272
        %v1274 = vmul.f32 %v1265, 1.442695
        %v1275 = vpow.pop %v1274
        %v1276 = vmul.f32 %v1266, 1.442695
        %v1277 = vpow.pop %v1276
        %v1278 = vmul.f32 %v1267, 1.442695
        %v1279 = vpow.pop %v1278
        %v1280 = vmul.f32 %v1268, 1.442695
        %v1281 = vpow.pop %v1280
        %v1282 = vmul.f32 %v1269, 1.442695
        %v1283 = vpow.pop %v1282
        %v1284 = vmul.f32 %v1270, 1.442695
        %v1285 = vpow.pop %v1284
        %v1286 = vmul.f32 %v1271, 1.442695
        %v1287 = vpow.pop %v1286
        %v1288 = vsel %vm1031, %v1273, 0.0
        %1289 = vadd.xlane.f32.xlu0 %v1288
        %v1290 = vpop.xlane.xlu0 %1289
        %v1291 = vsel %vm1031, %v1275, 0.0
        %1292 = vadd.xlane.f32.xlu0 %v1291
        %v1293 = vpop.xlane.xlu0 %1292
        %v1294 = vsel %vm1031, %v1277, 0.0
        %1295 = vadd.xlane.f32.xlu0 %v1294
        %v1296 = vpop.xlane.xlu0 %1295
        %v1297 = vsel %vm1031, %v1279, 0.0
        %1298 = vadd.xlane.f32.xlu0 %v1297
        %v1299 = vpop.xlane.xlu0 %1298
        %v1300 = vsel %vm1031, %v1281, 0.0
        %1301 = vadd.xlane.f32.xlu0 %v1300
        %v1302 = vpop.xlane.xlu0 %1301
        %v1303 = vsel %vm1031, %v1283, 0.0
        %1304 = vadd.xlane.f32.xlu0 %v1303
        %v1305 = vpop.xlane.xlu0 %1304
        %v1306 = vsel %vm1031, %v1285, 0.0
        %1307 = vadd.xlane.f32.xlu0 %v1306
        %v1308 = vpop.xlane.xlu0 %1307
        %v1309 = vsel %vm1031, %v1287, 0.0
        %1310 = vadd.xlane.f32.xlu0 %v1309
        %v1311 = vpop.xlane.xlu0 %1310
        %v1312 = vrcp.pop %v1290
        %v1313 = vrcp.pop %v1293
        %v1314 = vrcp.pop %v1296
        %v1315 = vrcp.pop %v1299
        %v1316 = vrcp.pop %v1302
        %v1317 = vrcp.pop %v1305
        %v1318 = vrcp.pop %v1308
        %v1319 = vrcp.pop %v1311
        %v1320 = vmul.f32 %v1273, %v1312
        %v1321 = vmul.f32 %v1275, %v1313
        %v1322 = vmul.f32 %v1277, %v1314
        %v1323 = vmul.f32 %v1279, %v1315
        %v1324 = vmul.f32 %v1281, %v1316
        %v1325 = vmul.f32 %v1283, %v1317
        %v1326 = vmul.f32 %v1285, %v1318
        %v1327 = vmul.f32 %v1287, %v1319
        %v1329 = vsel %vm1031, %v1320, 0
        %1331 = vmatpush.msra.mxu0 0.0
        %1332 = vmatpush.msra.mxu0 0.0
        %1333 = vmatpush.msra.mxu0 0.0
        %1334 = vmatpush.msra.mxu0 0.0
        %1335 = vmatpush.msra.mxu0 0.0
        %1336 = vmatpush.msra.mxu0 0.0
        %1337 = vmatpush.msra.mxu0 0.0
        %1338 = vmatpush.msra.mxu0 0.0
        %1339 = vmatpush.msra.mxu0 0.0
        %1340 = vmatpush.msra.mxu0 0.0
        %1341 = vmatpush.msra.mxu0 0.0
        %1342 = vmatpush.msra.mxu0 0.0
        %1343 = vmatpush.msra.mxu0 0.0
        %1344 = vmatpush.msra.mxu0 0.0
        %1345 = vmatpush.msra.mxu0 0.0
        %1346 = vmatpush.msra.mxu0 %v927
        %1347 = vmatmul.f32.gmra.mxu0 %v1329
        %v1348 = vpop.f32.mrf.mxu0
        %v1349 = vadd.f32 0.0, %v1348
        %1350 = vdwg.mxu0
        %v1352 = vsel %vm1031, %v1321, 0
        %1354 = vmatpush.msra.mxu0 0.0
        %1355 = vmatpush.msra.mxu0 0.0
        %1356 = vmatpush.msra.mxu0 0.0
        %1357 = vmatpush.msra.mxu0 0.0
        %1358 = vmatpush.msra.mxu0 0.0
        %1359 = vmatpush.msra.mxu0 0.0
        %1360 = vmatpush.msra.mxu0 0.0
        %1361 = vmatpush.msra.mxu0 0.0
        %1362 = vmatpush.msra.mxu0 0.0
        %1363 = vmatpush.msra.mxu0 0.0
        %1364 = vmatpush.msra.mxu0 0.0
        %1365 = vmatpush.msra.mxu0 0.0
        %1366 = vmatpush.msra.mxu0 0.0
        %1367 = vmatpush.msra.mxu0 0.0
        %1368 = vmatpush.msra.mxu0 0.0
        %1369 = vmatpush.msra.mxu0 %v930
        %1370 = vmatmul.f32.gmra.mxu0 %v1352
        %v1371 = vpop.f32.mrf.mxu0
        %v1372 = vadd.f32 0.0, %v1371
        %1373 = vdwg.mxu0
        %v1375 = vsel %vm1031, %v1322, 0
        %1377 = vmatpush.msra.mxu0 0.0
        %1378 = vmatpush.msra.mxu0 0.0
        %1379 = vmatpush.msra.mxu0 0.0
        %1380 = vmatpush.msra.mxu0 0.0
        %1381 = vmatpush.msra.mxu0 0.0
        %1382 = vmatpush.msra.mxu0 0.0
        %1383 = vmatpush.msra.mxu0 0.0
        %1384 = vmatpush.msra.mxu0 0.0
        %1385 = vmatpush.msra.mxu0 0.0
        %1386 = vmatpush.msra.mxu0 0.0
        %1387 = vmatpush.msra.mxu0 0.0
        %1388 = vmatpush.msra.mxu0 0.0
        %1389 = vmatpush.msra.mxu0 0.0
        %1390 = vmatpush.msra.mxu0 0.0
        %1391 = vmatpush.msra.mxu0 0.0
        %1392 = vmatpush.msra.mxu0 %v933
        %1393 = vmatmul.f32.gmra.mxu0 %v1375
        %v1394 = vpop.f32.mrf.mxu0
        %v1395 = vadd.f32 0.0, %v1394
        %1396 = vdwg.mxu0
        %v1398 = vsel %vm1031, %v1323, 0
        %1400 = vmatpush.msra.mxu0 0.0
        %1401 = vmatpush.msra.mxu0 0.0
        %1402 = vmatpush.msra.mxu0 0.0
        %1403 = vmatpush.msra.mxu0 0.0
        %1404 = vmatpush.msra.mxu0 0.0
        %1405 = vmatpush.msra.mxu0 0.0
        %1406 = vmatpush.msra.mxu0 0.0
        %1407 = vmatpush.msra.mxu0 0.0
        %1408 = vmatpush.msra.mxu0 0.0
        %1409 = vmatpush.msra.mxu0 0.0
        %1410 = vmatpush.msra.mxu0 0.0
        %1411 = vmatpush.msra.mxu0 0.0
        %1412 = vmatpush.msra.mxu0 0.0
        %1413 = vmatpush.msra.mxu0 0.0
        %1414 = vmatpush.msra.mxu0 0.0
        %1415 = vmatpush.msra.mxu0 %v936
        %1416 = vmatmul.f32.gmra.mxu0 %v1398
        %v1417 = vpop.f32.mrf.mxu0
        %v1418 = vadd.f32 0.0, %v1417
        %1419 = vdwg.mxu0
        %v1421 = vsel %vm1031, %v1324, 0
        %1423 = vmatpush.msra.mxu0 0.0
        %1424 = vmatpush.msra.mxu0 0.0
        %1425 = vmatpush.msra.mxu0 0.0
        %1426 = vmatpush.msra.mxu0 0.0
        %1427 = vmatpush.msra.mxu0 0.0
        %1428 = vmatpush.msra.mxu0 0.0
        %1429 = vmatpush.msra.mxu0 0.0
        %1430 = vmatpush.msra.mxu0 0.0
        %1431 = vmatpush.msra.mxu0 0.0
        %1432 = vmatpush.msra.mxu0 0.0
        %1433 = vmatpush.msra.mxu0 0.0
        %1434 = vmatpush.msra.mxu0 0.0
        %1435 = vmatpush.msra.mxu0 0.0
        %1436 = vmatpush.msra.mxu0 0.0
        %1437 = vmatpush.msra.mxu0 0.0
        %1438 = vmatpush.msra.mxu0 %v939
        %1439 = vmatmul.f32.gmra.mxu0 %v1421
        %v1440 = vpop.f32.mrf.mxu0
        %v1441 = vadd.f32 0.0, %v1440
        %1442 = vdwg.mxu0
        %v1444 = vsel %vm1031, %v1325, 0
        %1446 = vmatpush.msra.mxu0 0.0
        %1447 = vmatpush.msra.mxu0 0.0
        %1448 = vmatpush.msra.mxu0 0.0
        %1449 = vmatpush.msra.mxu0 0.0
        %1450 = vmatpush.msra.mxu0 0.0
        %1451 = vmatpush.msra.mxu0 0.0
        %1452 = vmatpush.msra.mxu0 0.0
        %1453 = vmatpush.msra.mxu0 0.0
        %1454 = vmatpush.msra.mxu0 0.0
        %1455 = vmatpush.msra.mxu0 0.0
        %1456 = vmatpush.msra.mxu0 0.0
        %1457 = vmatpush.msra.mxu0 0.0
        %1458 = vmatpush.msra.mxu0 0.0
        %1459 = vmatpush.msra.mxu0 0.0
        %1460 = vmatpush.msra.mxu0 0.0
        %1461 = vmatpush.msra.mxu0 %v942
        %1462 = vmatmul.f32.gmra.mxu0 %v1444
        %v1463 = vpop.f32.mrf.mxu0
        %v1464 = vadd.f32 0.0, %v1463
        %1465 = vdwg.mxu0
        %v1467 = vsel %vm1031, %v1326, 0
        %1469 = vmatpush.msra.mxu0 0.0
        %1470 = vmatpush.msra.mxu0 0.0
        %1471 = vmatpush.msra.mxu0 0.0
        %1472 = vmatpush.msra.mxu0 0.0
        %1473 = vmatpush.msra.mxu0 0.0
        %1474 = vmatpush.msra.mxu0 0.0
        %1475 = vmatpush.msra.mxu0 0.0
        %1476 = vmatpush.msra.mxu0 0.0
        %1477 = vmatpush.msra.mxu0 0.0
        %1478 = vmatpush.msra.mxu0 0.0
        %1479 = vmatpush.msra.mxu0 0.0
        %1480 = vmatpush.msra.mxu0 0.0
        %1481 = vmatpush.msra.mxu0 0.0
        %1482 = vmatpush.msra.mxu0 0.0
        %1483 = vmatpush.msra.mxu0 0.0
        %1484 = vmatpush.msra.mxu0 %v945
        %1485 = vmatmul.f32.gmra.mxu0 %v1467
        %v1486 = vpop.f32.mrf.mxu0
        %v1487 = vadd.f32 0.0, %v1486
        %1488 = vdwg.mxu0
        %v1490 = vsel %vm1031, %v1327, 0
        %1492 = vmatpush.msra.mxu0 0.0
        %1493 = vmatpush.msra.mxu0 0.0
        %1494 = vmatpush.msra.mxu0 0.0
        %1495 = vmatpush.msra.mxu0 0.0
        %1496 = vmatpush.msra.mxu0 0.0
        %1497 = vmatpush.msra.mxu0 0.0
        %1498 = vmatpush.msra.mxu0 0.0
        %1499 = vmatpush.msra.mxu0 0.0
        %1500 = vmatpush.msra.mxu0 0.0
        %1501 = vmatpush.msra.mxu0 0.0
        %1502 = vmatpush.msra.mxu0 0.0
        %1503 = vmatpush.msra.mxu0 0.0
        %1504 = vmatpush.msra.mxu0 0.0
        %1505 = vmatpush.msra.mxu0 0.0
        %1506 = vmatpush.msra.mxu0 0.0
        %1507 = vmatpush.msra.mxu0 %v948
        %1508 = vmatmul.f32.gmra.mxu0 %v1490
        %v1509 = vpop.f32.mrf.mxu0
        %v1510 = vadd.f32 0.0, %v1509
        %1511 = vdwg.mxu0
        %1512 = vst.msk [vmem:[#allocation2] sm:$0xff] %vm1031, %v1349
        %1513 = vst.msk [vmem:[#allocation2 + $0x8] sm:$0xff] %vm1031, %v1372
        %1514 = vst.msk [vmem:[#allocation2 + $0x10] sm:$0xff] %vm1031, %v1395
        %1515 = vst.msk [vmem:[#allocation2 + $0x18] sm:$0xff] %vm1031, %v1418
        %1516 = vst.msk [vmem:[#allocation2 + $0x20] sm:$0xff] %vm1031, %v1441
        %1517 = vst.msk [vmem:[#allocation2 + $0x28] sm:$0xff] %vm1031, %v1464
        %1518 = vst.msk [vmem:[#allocation2 + $0x30] sm:$0xff] %vm1031, %v1487
        %1519 = vst.msk [vmem:[#allocation2 + $0x38] sm:$0xff] %vm1031, %v1510
        %1520 = vrot.lane.b32.xlu0 %v1023, 120
        %v1521 = vpop.permute.xlu0 %1520
        %1522 = vrot.lane.b32.xlu0 %v854, 120
        %v1523 = vpop.permute.xlu0 %1522
        %1525 = vrot.lane.b32.xlu0 %v1000, 120
        %v1526 = vpop.permute.xlu0 %1525
        %v1528 = vsel %vm1031, %v1521, 0
        %v1530 = vsel %vm1031, %v1523, 0
        %1532 = vmatpush.xpose.msra.mxu0 0.0
        %1533 = vmatpush.xpose.msra.mxu0 0.0
        %1534 = vmatpush.xpose.msra.mxu0 0.0
        %1535 = vmatpush.xpose.msra.mxu0 0.0
        %1536 = vmatpush.xpose.msra.mxu0 0.0
        %1537 = vmatpush.xpose.msra.mxu0 0.0
        %1538 = vmatpush.xpose.msra.mxu0 0.0
        %1539 = vmatpush.xpose.msra.mxu0 0.0
        %1540 = vmatpush.xpose.msra.mxu0 0.0
        %1541 = vmatpush.xpose.msra.mxu0 0.0
        %1542 = vmatpush.xpose.msra.mxu0 0.0
        %1543 = vmatpush.xpose.msra.mxu0 0.0
        %1544 = vmatpush.xpose.msra.mxu0 0.0
        %1545 = vmatpush.xpose.msra.mxu0 0.0
        %1546 = vmatpush.xpose.msra.mxu0 0.0
        %1547 = vmatpush.xpose.msra.mxu0 %v1530
        %1548 = vmatmul.f32.gmra.mxu0 %v1528
        %v1549 = vpop.f32.mrf.mxu0
        %v1550 = vadd.f32 %v1526, %v1549
        %1551 = vdwg.mxu0
        %1552 = vrot.lane.b32.xlu0 %v1024, 120
        %v1553 = vpop.permute.xlu0 %1552
        %1554 = vrot.lane.b32.xlu0 %v857, 120
        %v1555 = vpop.permute.xlu0 %1554
        %1557 = vrot.lane.b32.xlu0 %v1003, 120
        %v1558 = vpop.permute.xlu0 %1557
        %v1560 = vsel %vm1031, %v1553, 0
        %v1562 = vsel %vm1031, %v1555, 0
        %1564 = vmatpush.xpose.msra.mxu0 0.0
        %1565 = vmatpush.xpose.msra.mxu0 0.0
        %1566 = vmatpush.xpose.msra.mxu0 0.0
        %1567 = vmatpush.xpose.msra.mxu0 0.0
        %1568 = vmatpush.xpose.msra.mxu0 0.0
        %1569 = vmatpush.xpose.msra.mxu0 0.0
        %1570 = vmatpush.xpose.msra.mxu0 0.0
        %1571 = vmatpush.xpose.msra.mxu0 0.0
        %1572 = vmatpush.xpose.msra.mxu0 0.0
        %1573 = vmatpush.xpose.msra.mxu0 0.0
        %1574 = vmatpush.xpose.msra.mxu0 0.0
        %1575 = vmatpush.xpose.msra.mxu0 0.0
        %1576 = vmatpush.xpose.msra.mxu0 0.0
        %1577 = vmatpush.xpose.msra.mxu0 0.0
        %1578 = vmatpush.xpose.msra.mxu0 0.0
        %1579 = vmatpush.xpose.msra.mxu0 %v1562
        %1580 = vmatmul.f32.gmra.mxu0 %v1560
        %v1581 = vpop.f32.mrf.mxu0
        %v1582 = vadd.f32 %v1558, %v1581
        %1583 = vdwg.mxu0
        %1584 = vrot.lane.b32.xlu0 %v1025, 120
        %v1585 = vpop.permute.xlu0 %1584
        %1586 = vrot.lane.b32.xlu0 %v860, 120
        %v1587 = vpop.permute.xlu0 %1586
        %1589 = vrot.lane.b32.xlu0 %v1006, 120
        %v1590 = vpop.permute.xlu0 %1589
        %v1592 = vsel %vm1031, %v1585, 0
        %v1594 = vsel %vm1031, %v1587, 0
        %1596 = vmatpush.xpose.msra.mxu0 0.0
        %1597 = vmatpush.xpose.msra.mxu0 0.0
        %1598 = vmatpush.xpose.msra.mxu0 0.0
        %1599 = vmatpush.xpose.msra.mxu0 0.0
        %1600 = vmatpush.xpose.msra.mxu0 0.0
        %1601 = vmatpush.xpose.msra.mxu0 0.0
        %1602 = vmatpush.xpose.msra.mxu0 0.0
        %1603 = vmatpush.xpose.msra.mxu0 0.0
        %1604 = vmatpush.xpose.msra.mxu0 0.0
        %1605 = vmatpush.xpose.msra.mxu0 0.0
        %1606 = vmatpush.xpose.msra.mxu0 0.0
        %1607 = vmatpush.xpose.msra.mxu0 0.0
        %1608 = vmatpush.xpose.msra.mxu0 0.0
        %1609 = vmatpush.xpose.msra.mxu0 0.0
        %1610 = vmatpush.xpose.msra.mxu0 0.0
        %1611 = vmatpush.xpose.msra.mxu0 %v1594
        %1612 = vmatmul.f32.gmra.mxu0 %v1592
        %v1613 = vpop.f32.mrf.mxu0
        %v1614 = vadd.f32 %v1590, %v1613
        %1615 = vdwg.mxu0
        %1616 = vrot.lane.b32.xlu0 %v1026, 120
        %v1617 = vpop.permute.xlu0 %1616
        %1618 = vrot.lane.b32.xlu0 %v863, 120
        %v1619 = vpop.permute.xlu0 %1618
        %1621 = vrot.lane.b32.xlu0 %v1009, 120
        %v1622 = vpop.permute.xlu0 %1621
        %v1624 = vsel %vm1031, %v1617, 0
        %v1626 = vsel %vm1031, %v1619, 0
        %1628 = vmatpush.xpose.msra.mxu0 0.0
        %1629 = vmatpush.xpose.msra.mxu0 0.0
        %1630 = vmatpush.xpose.msra.mxu0 0.0
        %1631 = vmatpush.xpose.msra.mxu0 0.0
        %1632 = vmatpush.xpose.msra.mxu0 0.0
        %1633 = vmatpush.xpose.msra.mxu0 0.0
        %1634 = vmatpush.xpose.msra.mxu0 0.0
        %1635 = vmatpush.xpose.msra.mxu0 0.0
        %1636 = vmatpush.xpose.msra.mxu0 0.0
        %1637 = vmatpush.xpose.msra.mxu0 0.0
        %1638 = vmatpush.xpose.msra.mxu0 0.0
        %1639 = vmatpush.xpose.msra.mxu0 0.0
        %1640 = vmatpush.xpose.msra.mxu0 0.0
        %1641 = vmatpush.xpose.msra.mxu0 0.0
        %1642 = vmatpush.xpose.msra.mxu0 0.0
        %1643 = vmatpush.xpose.msra.mxu0 %v1626
        %1644 = vmatmul.f32.gmra.mxu0 %v1624
        %v1645 = vpop.f32.mrf.mxu0
        %v1646 = vadd.f32 %v1622, %v1645
        %1647 = vdwg.mxu0
        %1648 = vrot.lane.b32.xlu0 %v1027, 120
        %v1649 = vpop.permute.xlu0 %1648
        %1650 = vrot.lane.b32.xlu0 %v866, 120
        %v1651 = vpop.permute.xlu0 %1650
        %1653 = vrot.lane.b32.xlu0 %v1012, 120
        %v1654 = vpop.permute.xlu0 %1653
        %v1656 = vsel %vm1031, %v1649, 0
        %v1658 = vsel %vm1031, %v1651, 0
        %1660 = vmatpush.xpose.msra.mxu0 0.0
        %1661 = vmatpush.xpose.msra.mxu0 0.0
        %1662 = vmatpush.xpose.msra.mxu0 0.0
        %1663 = vmatpush.xpose.msra.mxu0 0.0
        %1664 = vmatpush.xpose.msra.mxu0 0.0
        %1665 = vmatpush.xpose.msra.mxu0 0.0
        %1666 = vmatpush.xpose.msra.mxu0 0.0
        %1667 = vmatpush.xpose.msra.mxu0 0.0
        %1668 = vmatpush.xpose.msra.mxu0 0.0
        %1669 = vmatpush.xpose.msra.mxu0 0.0
        %1670 = vmatpush.xpose.msra.mxu0 0.0
        %1671 = vmatpush.xpose.msra.mxu0 0.0
        %1672 = vmatpush.xpose.msra.mxu0 0.0
        %1673 = vmatpush.xpose.msra.mxu0 0.0
        %1674 = vmatpush.xpose.msra.mxu0 0.0
        %1675 = vmatpush.xpose.msra.mxu0 %v1658
        %1676 = vmatmul.f32.gmra.mxu0 %v1656
        %v1677 = vpop.f32.mrf.mxu0
        %v1678 = vadd.f32 %v1654, %v1677
        %1679 = vdwg.mxu0
        %1680 = vrot.lane.b32.xlu0 %v1028, 120
        %v1681 = vpop.permute.xlu0 %1680
        %1682 = vrot.lane.b32.xlu0 %v869, 120
        %v1683 = vpop.permute.xlu0 %1682
        %1685 = vrot.lane.b32.xlu0 %v1015, 120
        %v1686 = vpop.permute.xlu0 %1685
        %v1688 = vsel %vm1031, %v1681, 0
        %v1690 = vsel %vm1031, %v1683, 0
        %1692 = vmatpush.xpose.msra.mxu0 0.0
        %1693 = vmatpush.xpose.msra.mxu0 0.0
        %1694 = vmatpush.xpose.msra.mxu0 0.0
        %1695 = vmatpush.xpose.msra.mxu0 0.0
        %1696 = vmatpush.xpose.msra.mxu0 0.0
        %1697 = vmatpush.xpose.msra.mxu0 0.0
        %1698 = vmatpush.xpose.msra.mxu0 0.0
        %1699 = vmatpush.xpose.msra.mxu0 0.0
        %1700 = vmatpush.xpose.msra.mxu0 0.0
        %1701 = vmatpush.xpose.msra.mxu0 0.0
        %1702 = vmatpush.xpose.msra.mxu0 0.0
        %1703 = vmatpush.xpose.msra.mxu0 0.0
        %1704 = vmatpush.xpose.msra.mxu0 0.0
        %1705 = vmatpush.xpose.msra.mxu0 0.0
        %1706 = vmatpush.xpose.msra.mxu0 0.0
        %1707 = vmatpush.xpose.msra.mxu0 %v1690
        %1708 = vmatmul.f32.gmra.mxu0 %v1688
        %v1709 = vpop.f32.mrf.mxu0
        %v1710 = vadd.f32 %v1686, %v1709
        %1711 = vdwg.mxu0
        %1712 = vrot.lane.b32.xlu0 %v1029, 120
        %v1713 = vpop.permute.xlu0 %1712
        %1714 = vrot.lane.b32.xlu0 %v872, 120
        %v1715 = vpop.permute.xlu0 %1714
        %1717 = vrot.lane.b32.xlu0 %v1018, 120
        %v1718 = vpop.permute.xlu0 %1717
        %v1720 = vsel %vm1031, %v1713, 0
        %v1722 = vsel %vm1031, %v1715, 0
        %1724 = vmatpush.xpose.msra.mxu0 0.0
        %1725 = vmatpush.xpose.msra.mxu0 0.0
        %1726 = vmatpush.xpose.msra.mxu0 0.0
        %1727 = vmatpush.xpose.msra.mxu0 0.0
        %1728 = vmatpush.xpose.msra.mxu0 0.0
        %1729 = vmatpush.xpose.msra.mxu0 0.0
        %1730 = vmatpush.xpose.msra.mxu0 0.0
        %1731 = vmatpush.xpose.msra.mxu0 0.0
        %1732 = vmatpush.xpose.msra.mxu0 0.0
        %1733 = vmatpush.xpose.msra.mxu0 0.0
        %1734 = vmatpush.xpose.msra.mxu0 0.0
        %1735 = vmatpush.xpose.msra.mxu0 0.0
        %1736 = vmatpush.xpose.msra.mxu0 0.0
        %1737 = vmatpush.xpose.msra.mxu0 0.0
        %1738 = vmatpush.xpose.msra.mxu0 0.0
        %1739 = vmatpush.xpose.msra.mxu0 %v1722
        %1740 = vmatmul.f32.gmra.mxu0 %v1720
        %v1741 = vpop.f32.mrf.mxu0
        %v1742 = vadd.f32 %v1718, %v1741
        %1743 = vdwg.mxu0
        %1744 = vrot.lane.b32.xlu0 %v1030, 120
        %v1745 = vpop.permute.xlu0 %1744
        %1746 = vrot.lane.b32.xlu0 %v875, 120
        %v1747 = vpop.permute.xlu0 %1746
        %1749 = vrot.lane.b32.xlu0 %v1021, 120
        %v1750 = vpop.permute.xlu0 %1749
        %v1752 = vsel %vm1031, %v1745, 0
        %v1754 = vsel %vm1031, %v1747, 0
        %1756 = vmatpush.xpose.msra.mxu0 0.0
        %1757 = vmatpush.xpose.msra.mxu0 0.0
        %1758 = vmatpush.xpose.msra.mxu0 0.0
        %1759 = vmatpush.xpose.msra.mxu0 0.0
        %1760 = vmatpush.xpose.msra.mxu0 0.0
        %1761 = vmatpush.xpose.msra.mxu0 0.0
        %1762 = vmatpush.xpose.msra.mxu0 0.0
        %1763 = vmatpush.xpose.msra.mxu0 0.0
        %1764 = vmatpush.xpose.msra.mxu0 0.0
        %1765 = vmatpush.xpose.msra.mxu0 0.0
        %1766 = vmatpush.xpose.msra.mxu0 0.0
        %1767 = vmatpush.xpose.msra.mxu0 0.0
        %1768 = vmatpush.xpose.msra.mxu0 0.0
        %1769 = vmatpush.xpose.msra.mxu0 0.0
        %1770 = vmatpush.xpose.msra.mxu0 0.0
        %1771 = vmatpush.xpose.msra.mxu0 %v1754
        %1772 = vmatmul.f32.gmra.mxu0 %v1752
        %v1773 = vpop.f32.mrf.mxu0
        %v1774 = vadd.f32 %v1750, %v1773
        %1775 = vdwg.mxu0
        %v1776 = vsel %vm1031, %v1550, -inf
        %1777 = vmax.xlane.f32.xlu0 %v1776
        %v1778 = vpop.xlane.xlu0 %1777
        %v1779 = vsel %vm1031, %v1582, -inf
        %1780 = vmax.xlane.f32.xlu0 %v1779
        %v1781 = vpop.xlane.xlu0 %1780
        %v1782 = vsel %vm1031, %v1614, -inf
        %1783 = vmax.xlane.f32.xlu0 %v1782
        %v1784 = vpop.xlane.xlu0 %1783
        %v1785 = vsel %vm1031, %v1646, -inf
        %1786 = vmax.xlane.f32.xlu0 %v1785
        %v1787 = vpop.xlane.xlu0 %1786
        %v1788 = vsel %vm1031, %v1678, -inf
        %1789 = vmax.xlane.f32.xlu0 %v1788
        %v1790 = vpop.xlane.xlu0 %1789
        %v1791 = vsel %vm1031, %v1710, -inf
        %1792 = vmax.xlane.f32.xlu0 %v1791
        %v1793 = vpop.xlane.xlu0 %1792
        %v1794 = vsel %vm1031, %v1742, -inf
        %1795 = vmax.xlane.f32.xlu0 %v1794
        %v1796 = vpop.xlane.xlu0 %1795
        %v1797 = vsel %vm1031, %v1774, -inf
        %1798 = vmax.xlane.f32.xlu0 %v1797
        %v1799 = vpop.xlane.xlu0 %1798
        %v1800 = vsub.f32 %v1550, %v1778
        %v1801 = vsub.f32 %v1582, %v1781
        %v1802 = vsub.f32 %v1614, %v1784
        %v1803 = vsub.f32 %v1646, %v1787
        %v1804 = vsub.f32 %v1678, %v1790
        %v1805 = vsub.f32 %v1710, %v1793
        %v1806 = vsub.f32 %v1742, %v1796
        %v1807 = vsub.f32 %v1774, %v1799
        %v1808 = vmul.f32 %v1800, 1.442695
        %v1809 = vpow.pop %v1808
        %v1810 = vmul.f32 %v1801, 1.442695
        %v1811 = vpow.pop %v1810
        %v1812 = vmul.f32 %v1802, 1.442695
        %v1813 = vpow.pop %v1812
        %v1814 = vmul.f32 %v1803, 1.442695
        %v1815 = vpow.pop %v1814
        %v1816 = vmul.f32 %v1804, 1.442695
        %v1817 = vpow.pop %v1816
        %v1818 = vmul.f32 %v1805, 1.442695
        %v1819 = vpow.pop %v1818
        %v1820 = vmul.f32 %v1806, 1.442695
        %v1821 = vpow.pop %v1820
        %v1822 = vmul.f32 %v1807, 1.442695
        %v1823 = vpow.pop %v1822
        %v1824 = vsel %vm1031, %v1809, 0.0
        %1825 = vadd.xlane.f32.xlu0 %v1824
        %v1826 = vpop.xlane.xlu0 %1825
        %v1827 = vsel %vm1031, %v1811, 0.0
        %1828 = vadd.xlane.f32.xlu0 %v1827
        %v1829 = vpop.xlane.xlu0 %1828
        %v1830 = vsel %vm1031, %v1813, 0.0
        %1831 = vadd.xlane.f32.xlu0 %v1830
        %v1832 = vpop.xlane.xlu0 %1831
        %v1833 = vsel %vm1031, %v1815, 0.0
        %1834 = vadd.xlane.f32.xlu0 %v1833
        %v1835 = vpop.xlane.xlu0 %1834
        %v1836 = vsel %vm1031, %v1817, 0.0
        %1837 = vadd.xlane.f32.xlu0 %v1836
        %v1838 = vpop.xlane.xlu0 %1837
        %v1839 = vsel %vm1031, %v1819, 0.0
        %1840 = vadd.xlane.f32.xlu0 %v1839
        %v1841 = vpop.xlane.xlu0 %1840
        %v1842 = vsel %vm1031, %v1821, 0.0
        %1843 = vadd.xlane.f32.xlu0 %v1842
        %v1844 = vpop.xlane.xlu0 %1843
        %v1845 = vsel %vm1031, %v1823, 0.0
        %1846 = vadd.xlane.f32.xlu0 %v1845
        %v1847 = vpop.xlane.xlu0 %1846
        %v1848 = vrcp.pop %v1826
        %v1849 = vrcp.pop %v1829
        %v1850 = vrcp.pop %v1832
        %v1851 = vrcp.pop %v1835
        %v1852 = vrcp.pop %v1838
        %v1853 = vrcp.pop %v1841
        %v1854 = vrcp.pop %v1844
        %v1855 = vrcp.pop %v1847
        %v1856 = vmul.f32 %v1809, %v1848
        %v1857 = vmul.f32 %v1811, %v1849
        %v1858 = vmul.f32 %v1813, %v1850
        %v1859 = vmul.f32 %v1815, %v1851
        %v1860 = vmul.f32 %v1817, %v1852
        %v1861 = vmul.f32 %v1819, %v1853
        %v1862 = vmul.f32 %v1821, %v1854
        %v1863 = vmul.f32 %v1823, %v1855
        %1865 = vrot.lane.b32.xlu0 %v927, 120
        %v1866 = vpop.permute.xlu0 %1865
        %v1869 = vsel %vm1031, %v1856, 0
        %1871 = vmatpush.msra.mxu0 0.0
        %1872 = vmatpush.msra.mxu0 0.0
        %1873 = vmatpush.msra.mxu0 0.0
        %1874 = vmatpush.msra.mxu0 0.0
        %1875 = vmatpush.msra.mxu0 0.0
        %1876 = vmatpush.msra.mxu0 0.0
        %1877 = vmatpush.msra.mxu0 0.0
        %1878 = vmatpush.msra.mxu0 0.0
        %1879 = vmatpush.msra.mxu0 0.0
        %1880 = vmatpush.msra.mxu0 0.0
        %1881 = vmatpush.msra.mxu0 0.0
        %1882 = vmatpush.msra.mxu0 0.0
        %1883 = vmatpush.msra.mxu0 0.0
        %1884 = vmatpush.msra.mxu0 0.0
        %1885 = vmatpush.msra.mxu0 0.0
        %1886 = vmatpush.msra.mxu0 %v1866
        %1887 = vmatmul.f32.gmra.mxu0 %v1869
        %v1888 = vpop.f32.mrf.mxu0
        %v1889 = vadd.f32 0.0, %v1888
        %1890 = vdwg.mxu0
        %1892 = vrot.lane.b32.xlu0 %v930, 120
        %v1893 = vpop.permute.xlu0 %1892
        %v1896 = vsel %vm1031, %v1857, 0
        %1898 = vmatpush.msra.mxu0 0.0
        %1899 = vmatpush.msra.mxu0 0.0
        %1900 = vmatpush.msra.mxu0 0.0
        %1901 = vmatpush.msra.mxu0 0.0
        %1902 = vmatpush.msra.mxu0 0.0
        %1903 = vmatpush.msra.mxu0 0.0
        %1904 = vmatpush.msra.mxu0 0.0
        %1905 = vmatpush.msra.mxu0 0.0
        %1906 = vmatpush.msra.mxu0 0.0
        %1907 = vmatpush.msra.mxu0 0.0
        %1908 = vmatpush.msra.mxu0 0.0
        %1909 = vmatpush.msra.mxu0 0.0
        %1910 = vmatpush.msra.mxu0 0.0
        %1911 = vmatpush.msra.mxu0 0.0
        %1912 = vmatpush.msra.mxu0 0.0
        %1913 = vmatpush.msra.mxu0 %v1893
        %1914 = vmatmul.f32.gmra.mxu0 %v1896
        %v1915 = vpop.f32.mrf.mxu0
        %v1916 = vadd.f32 0.0, %v1915
        %1917 = vdwg.mxu0
        %1919 = vrot.lane.b32.xlu0 %v933, 120
        %v1920 = vpop.permute.xlu0 %1919
        %v1923 = vsel %vm1031, %v1858, 0
        %1925 = vmatpush.msra.mxu0 0.0
        %1926 = vmatpush.msra.mxu0 0.0
        %1927 = vmatpush.msra.mxu0 0.0
        %1928 = vmatpush.msra.mxu0 0.0
        %1929 = vmatpush.msra.mxu0 0.0
        %1930 = vmatpush.msra.mxu0 0.0
        %1931 = vmatpush.msra.mxu0 0.0
        %1932 = vmatpush.msra.mxu0 0.0
        %1933 = vmatpush.msra.mxu0 0.0
        %1934 = vmatpush.msra.mxu0 0.0
        %1935 = vmatpush.msra.mxu0 0.0
        %1936 = vmatpush.msra.mxu0 0.0
        %1937 = vmatpush.msra.mxu0 0.0
        %1938 = vmatpush.msra.mxu0 0.0
        %1939 = vmatpush.msra.mxu0 0.0
        %1940 = vmatpush.msra.mxu0 %v1920
        %1941 = vmatmul.f32.gmra.mxu0 %v1923
        %v1942 = vpop.f32.mrf.mxu0
        %v1943 = vadd.f32 0.0, %v1942
        %1944 = vdwg.mxu0
        %1946 = vrot.lane.b32.xlu0 %v936, 120
        %v1947 = vpop.permute.xlu0 %1946
        %v1950 = vsel %vm1031, %v1859, 0
        %1952 = vmatpush.msra.mxu0 0.0
        %1953 = vmatpush.msra.mxu0 0.0
        %1954 = vmatpush.msra.mxu0 0.0
        %1955 = vmatpush.msra.mxu0 0.0
        %1956 = vmatpush.msra.mxu0 0.0
        %1957 = vmatpush.msra.mxu0 0.0
        %1958 = vmatpush.msra.mxu0 0.0
        %1959 = vmatpush.msra.mxu0 0.0
        %1960 = vmatpush.msra.mxu0 0.0
        %1961 = vmatpush.msra.mxu0 0.0
        %1962 = vmatpush.msra.mxu0 0.0
        %1963 = vmatpush.msra.mxu0 0.0
        %1964 = vmatpush.msra.mxu0 0.0
        %1965 = vmatpush.msra.mxu0 0.0
        %1966 = vmatpush.msra.mxu0 0.0
        %1967 = vmatpush.msra.mxu0 %v1947
        %1968 = vmatmul.f32.gmra.mxu0 %v1950
        %v1969 = vpop.f32.mrf.mxu0
        %v1970 = vadd.f32 0.0, %v1969
        %1971 = vdwg.mxu0
        %1973 = vrot.lane.b32.xlu0 %v939, 120
        %v1974 = vpop.permute.xlu0 %1973
        %v1977 = vsel %vm1031, %v1860, 0
        %1979 = vmatpush.msra.mxu0 0.0
        %1980 = vmatpush.msra.mxu0 0.0
        %1981 = vmatpush.msra.mxu0 0.0
        %1982 = vmatpush.msra.mxu0 0.0
        %1983 = vmatpush.msra.mxu0 0.0
        %1984 = vmatpush.msra.mxu0 0.0
        %1985 = vmatpush.msra.mxu0 0.0
        %1986 = vmatpush.msra.mxu0 0.0
        %1987 = vmatpush.msra.mxu0 0.0
        %1988 = vmatpush.msra.mxu0 0.0
        %1989 = vmatpush.msra.mxu0 0.0
        %1990 = vmatpush.msra.mxu0 0.0
        %1991 = vmatpush.msra.mxu0 0.0
        %1992 = vmatpush.msra.mxu0 0.0
        %1993 = vmatpush.msra.mxu0 0.0
        %1994 = vmatpush.msra.mxu0 %v1974
        %1995 = vmatmul.f32.gmra.mxu0 %v1977
        %v1996 = vpop.f32.mrf.mxu0
        %v1997 = vadd.f32 0.0, %v1996
        %1998 = vdwg.mxu0
        %2000 = vrot.lane.b32.xlu0 %v942, 120
        %v2001 = vpop.permute.xlu0 %2000
        %v2004 = vsel %vm1031, %v1861, 0
        %2006 = vmatpush.msra.mxu0 0.0
        %2007 = vmatpush.msra.mxu0 0.0
        %2008 = vmatpush.msra.mxu0 0.0
        %2009 = vmatpush.msra.mxu0 0.0
        %2010 = vmatpush.msra.mxu0 0.0
        %2011 = vmatpush.msra.mxu0 0.0
        %2012 = vmatpush.msra.mxu0 0.0
        %2013 = vmatpush.msra.mxu0 0.0
        %2014 = vmatpush.msra.mxu0 0.0
        %2015 = vmatpush.msra.mxu0 0.0
        %2016 = vmatpush.msra.mxu0 0.0
        %2017 = vmatpush.msra.mxu0 0.0
        %2018 = vmatpush.msra.mxu0 0.0
        %2019 = vmatpush.msra.mxu0 0.0
        %2020 = vmatpush.msra.mxu0 0.0
        %2021 = vmatpush.msra.mxu0 %v2001
        %2022 = vmatmul.f32.gmra.mxu0 %v2004
        %v2023 = vpop.f32.mrf.mxu0
        %v2024 = vadd.f32 0.0, %v2023
        %2025 = vdwg.mxu0
        %2027 = vrot.lane.b32.xlu0 %v945, 120
        %v2028 = vpop.permute.xlu0 %2027
        %v2031 = vsel %vm1031, %v1862, 0
        %2033 = vmatpush.msra.mxu0 0.0
        %2034 = vmatpush.msra.mxu0 0.0
        %2035 = vmatpush.msra.mxu0 0.0
        %2036 = vmatpush.msra.mxu0 0.0
        %2037 = vmatpush.msra.mxu0 0.0
        %2038 = vmatpush.msra.mxu0 0.0
        %2039 = vmatpush.msra.mxu0 0.0
        %2040 = vmatpush.msra.mxu0 0.0
        %2041 = vmatpush.msra.mxu0 0.0
        %2042 = vmatpush.msra.mxu0 0.0
        %2043 = vmatpush.msra.mxu0 0.0
        %2044 = vmatpush.msra.mxu0 0.0
        %2045 = vmatpush.msra.mxu0 0.0
        %2046 = vmatpush.msra.mxu0 0.0
        %2047 = vmatpush.msra.mxu0 0.0
        %2048 = vmatpush.msra.mxu0 %v2028
        %2049 = vmatmul.f32.gmra.mxu0 %v2031
        %v2050 = vpop.f32.mrf.mxu0
        %v2051 = vadd.f32 0.0, %v2050
        %2052 = vdwg.mxu0
        %2054 = vrot.lane.b32.xlu0 %v948, 120
        %v2055 = vpop.permute.xlu0 %2054
        %v2058 = vsel %vm1031, %v1863, 0
        %2060 = vmatpush.msra.mxu0 0.0
        %2061 = vmatpush.msra.mxu0 0.0
        %2062 = vmatpush.msra.mxu0 0.0
        %2063 = vmatpush.msra.mxu0 0.0
        %2064 = vmatpush.msra.mxu0 0.0
        %2065 = vmatpush.msra.mxu0 0.0
        %2066 = vmatpush.msra.mxu0 0.0
        %2067 = vmatpush.msra.mxu0 0.0
        %2068 = vmatpush.msra.mxu0 0.0
        %2069 = vmatpush.msra.mxu0 0.0
        %2070 = vmatpush.msra.mxu0 0.0
        %2071 = vmatpush.msra.mxu0 0.0
        %2072 = vmatpush.msra.mxu0 0.0
        %2073 = vmatpush.msra.mxu0 0.0
        %2074 = vmatpush.msra.mxu0 0.0
        %2075 = vmatpush.msra.mxu0 %v2055
        %2076 = vmatmul.f32.gmra.mxu0 %v2058
        %v2077 = vpop.f32.mrf.mxu0
        %v2078 = vadd.f32 0.0, %v2077
        %2079 = vdwg.mxu0
        %2088 = vrot.lane.b32.xlu0 %v1889, 8
        %v2089 = vpop.permute.xlu0 %2088
        %2090 = vrot.lane.b32.xlu0 %v1916, 8
        %v2091 = vpop.permute.xlu0 %2090
        %2092 = vrot.lane.b32.xlu0 %v1943, 8
        %v2093 = vpop.permute.xlu0 %2092
        %2094 = vrot.lane.b32.xlu0 %v1970, 8
        %v2095 = vpop.permute.xlu0 %2094
        %2096 = vrot.lane.b32.xlu0 %v1997, 8
        %v2097 = vpop.permute.xlu0 %2096
        %2098 = vrot.lane.b32.xlu0 %v2024, 8
        %v2099 = vpop.permute.xlu0 %2098
        %2100 = vrot.lane.b32.xlu0 %v2051, 8
        %v2101 = vpop.permute.xlu0 %2100
        %2102 = vrot.lane.b32.xlu0 %v2078, 8
        %v2103 = vpop.permute.xlu0 %2102
        %vm2112 = vcmask 130112
        %2113 = vst.msk [vmem:[#allocation2] sm:$0xff] %vm2112, %v2089
        %2114 = vst.msk [vmem:[#allocation2 + $0x8] sm:$0xff] %vm2112, %v2091
        %2115 = vst.msk [vmem:[#allocation2 + $0x10] sm:$0xff] %vm2112, %v2093
        %2116 = vst.msk [vmem:[#allocation2 + $0x18] sm:$0xff] %vm2112, %v2095
        %2117 = vst.msk [vmem:[#allocation2 + $0x20] sm:$0xff] %vm2112, %v2097
        %2118 = vst.msk [vmem:[#allocation2 + $0x28] sm:$0xff] %vm2112, %v2099
        %2119 = vst.msk [vmem:[#allocation2 + $0x30] sm:$0xff] %vm2112, %v2101
        %2120 = vst.msk [vmem:[#allocation2 + $0x38] sm:$0xff] %vm2112, %v2103
        %2121 = vrot.lane.b32.xlu0 %v1023, 112
        %v2122 = vpop.permute.xlu0 %2121
        %2123 = vrot.lane.b32.xlu0 %v854, 112
        %v2124 = vpop.permute.xlu0 %2123
        %2125 = vrot.lane.b32.xlu0 %v1000, 112
        %v2126 = vpop.permute.xlu0 %2125
        %v2128 = vsel %vm1031, %v2122, 0
        %v2130 = vsel %vm1031, %v2124, 0
        %2132 = vmatpush.xpose.msra.mxu0 0.0
        %2133 = vmatpush.xpose.msra.mxu0 0.0
        %2134 = vmatpush.xpose.msra.mxu0 0.0
        %2135 = vmatpush.xpose.msra.mxu0 0.0
        %2136 = vmatpush.xpose.msra.mxu0 0.0
        %2137 = vmatpush.xpose.msra.mxu0 0.0
        %2138 = vmatpush.xpose.msra.mxu0 0.0
        %2139 = vmatpush.xpose.msra.mxu0 0.0
        %2140 = vmatpush.xpose.msra.mxu0 0.0
        %2141 = vmatpush.xpose.msra.mxu0 0.0
        %2142 = vmatpush.xpose.msra.mxu0 0.0
        %2143 = vmatpush.xpose.msra.mxu0 0.0
        %2144 = vmatpush.xpose.msra.mxu0 0.0
        %2145 = vmatpush.xpose.msra.mxu0 0.0
        %2146 = vmatpush.xpose.msra.mxu0 0.0
        %2147 = vmatpush.xpose.msra.mxu0 %v2130
        %2148 = vmatmul.f32.gmra.mxu0 %v2128
        %v2149 = vpop.f32.mrf.mxu0
        %v2150 = vadd.f32 %v2126, %v2149
        %2151 = vdwg.mxu0
        %2152 = vrot.lane.b32.xlu0 %v1024, 112
        %v2153 = vpop.permute.xlu0 %2152
        %2154 = vrot.lane.b32.xlu0 %v857, 112
        %v2155 = vpop.permute.xlu0 %2154
        %2156 = vrot.lane.b32.xlu0 %v1003, 112
        %v2157 = vpop.permute.xlu0 %2156
        %v2159 = vsel %vm1031, %v2153, 0
        %v2161 = vsel %vm1031, %v2155, 0
        %2163 = vmatpush.xpose.msra.mxu0 0.0
        %2164 = vmatpush.xpose.msra.mxu0 0.0
        %2165 = vmatpush.xpose.msra.mxu0 0.0
        %2166 = vmatpush.xpose.msra.mxu0 0.0
        %2167 = vmatpush.xpose.msra.mxu0 0.0
        %2168 = vmatpush.xpose.msra.mxu0 0.0
        %2169 = vmatpush.xpose.msra.mxu0 0.0
        %2170 = vmatpush.xpose.msra.mxu0 0.0
        %2171 = vmatpush.xpose.msra.mxu0 0.0
        %2172 = vmatpush.xpose.msra.mxu0 0.0
        %2173 = vmatpush.xpose.msra.mxu0 0.0
        %2174 = vmatpush.xpose.msra.mxu0 0.0
        %2175 = vmatpush.xpose.msra.mxu0 0.0
        %2176 = vmatpush.xpose.msra.mxu0 0.0
        %2177 = vmatpush.xpose.msra.mxu0 0.0
        %2178 = vmatpush.xpose.msra.mxu0 %v2161
        %2179 = vmatmul.f32.gmra.mxu0 %v2159
        %v2180 = vpop.f32.mrf.mxu0
        %v2181 = vadd.f32 %v2157, %v2180
        %2182 = vdwg.mxu0
        %2183 = vrot.lane.b32.xlu0 %v1025, 112
        %v2184 = vpop.permute.xlu0 %2183
        %2185 = vrot.lane.b32.xlu0 %v860, 112
        %v2186 = vpop.permute.xlu0 %2185
        %2187 = vrot.lane.b32.xlu0 %v1006, 112
        %v2188 = vpop.permute.xlu0 %2187
        %v2190 = vsel %vm1031, %v2184, 0
        %v2192 = vsel %vm1031, %v2186, 0
        %2194 = vmatpush.xpose.msra.mxu0 0.0
        %2195 = vmatpush.xpose.msra.mxu0 0.0
        %2196 = vmatpush.xpose.msra.mxu0 0.0
        %2197 = vmatpush.xpose.msra.mxu0 0.0
        %2198 = vmatpush.xpose.msra.mxu0 0.0
        %2199 = vmatpush.xpose.msra.mxu0 0.0
        %2200 = vmatpush.xpose.msra.mxu0 0.0
        %2201 = vmatpush.xpose.msra.mxu0 0.0
        %2202 = vmatpush.xpose.msra.mxu0 0.0
        %2203 = vmatpush.xpose.msra.mxu0 0.0
        %2204 = vmatpush.xpose.msra.mxu0 0.0
        %2205 = vmatpush.xpose.msra.mxu0 0.0
        %2206 = vmatpush.xpose.msra.mxu0 0.0
        %2207 = vmatpush.xpose.msra.mxu0 0.0
        %2208 = vmatpush.xpose.msra.mxu0 0.0
        %2209 = vmatpush.xpose.msra.mxu0 %v2192
        %2210 = vmatmul.f32.gmra.mxu0 %v2190
        %v2211 = vpop.f32.mrf.mxu0
        %v2212 = vadd.f32 %v2188, %v2211
        %2213 = vdwg.mxu0
        %2214 = vrot.lane.b32.xlu0 %v1026, 112
        %v2215 = vpop.permute.xlu0 %2214
        %2216 = vrot.lane.b32.xlu0 %v863, 112
        %v2217 = vpop.permute.xlu0 %2216
        %2218 = vrot.lane.b32.xlu0 %v1009, 112
        %v2219 = vpop.permute.xlu0 %2218
        %v2221 = vsel %vm1031, %v2215, 0
        %v2223 = vsel %vm1031, %v2217, 0
        %2225 = vmatpush.xpose.msra.mxu0 0.0
        %2226 = vmatpush.xpose.msra.mxu0 0.0
        %2227 = vmatpush.xpose.msra.mxu0 0.0
        %2228 = vmatpush.xpose.msra.mxu0 0.0
        %2229 = vmatpush.xpose.msra.mxu0 0.0
        %2230 = vmatpush.xpose.msra.mxu0 0.0
        %2231 = vmatpush.xpose.msra.mxu0 0.0
        %2232 = vmatpush.xpose.msra.mxu0 0.0
        %2233 = vmatpush.xpose.msra.mxu0 0.0
        %2234 = vmatpush.xpose.msra.mxu0 0.0
        %2235 = vmatpush.xpose.msra.mxu0 0.0
        %2236 = vmatpush.xpose.msra.mxu0 0.0
        %2237 = vmatpush.xpose.msra.mxu0 0.0
        %2238 = vmatpush.xpose.msra.mxu0 0.0
        %2239 = vmatpush.xpose.msra.mxu0 0.0
        %2240 = vmatpush.xpose.msra.mxu0 %v2223
        %2241 = vmatmul.f32.gmra.mxu0 %v2221
        %v2242 = vpop.f32.mrf.mxu0
        %v2243 = vadd.f32 %v2219, %v2242
        %2244 = vdwg.mxu0
        %2245 = vrot.lane.b32.xlu0 %v1027, 112
        %v2246 = vpop.permute.xlu0 %2245
        %2247 = vrot.lane.b32.xlu0 %v866, 112
        %v2248 = vpop.permute.xlu0 %2247
        %2249 = vrot.lane.b32.xlu0 %v1012, 112
        %v2250 = vpop.permute.xlu0 %2249
        %v2252 = vsel %vm1031, %v2246, 0
        %v2254 = vsel %vm1031, %v2248, 0
        %2256 = vmatpush.xpose.msra.mxu0 0.0
        %2257 = vmatpush.xpose.msra.mxu0 0.0
        %2258 = vmatpush.xpose.msra.mxu0 0.0
        %2259 = vmatpush.xpose.msra.mxu0 0.0
        %2260 = vmatpush.xpose.msra.mxu0 0.0
        %2261 = vmatpush.xpose.msra.mxu0 0.0
        %2262 = vmatpush.xpose.msra.mxu0 0.0
        %2263 = vmatpush.xpose.msra.mxu0 0.0
        %2264 = vmatpush.xpose.msra.mxu0 0.0
        %2265 = vmatpush.xpose.msra.mxu0 0.0
        %2266 = vmatpush.xpose.msra.mxu0 0.0
        %2267 = vmatpush.xpose.msra.mxu0 0.0
        %2268 = vmatpush.xpose.msra.mxu0 0.0
        %2269 = vmatpush.xpose.msra.mxu0 0.0
        %2270 = vmatpush.xpose.msra.mxu0 0.0
        %2271 = vmatpush.xpose.msra.mxu0 %v2254
        %2272 = vmatmul.f32.gmra.mxu0 %v2252
        %v2273 = vpop.f32.mrf.mxu0
        %v2274 = vadd.f32 %v2250, %v2273
        %2275 = vdwg.mxu0
        %2276 = vrot.lane.b32.xlu0 %v1028, 112
        %v2277 = vpop.permute.xlu0 %2276
        %2278 = vrot.lane.b32.xlu0 %v869, 112
        %v2279 = vpop.permute.xlu0 %2278
        %2280 = vrot.lane.b32.xlu0 %v1015, 112
        %v2281 = vpop.permute.xlu0 %2280
        %v2283 = vsel %vm1031, %v2277, 0
        %v2285 = vsel %vm1031, %v2279, 0
        %2287 = vmatpush.xpose.msra.mxu0 0.0
        %2288 = vmatpush.xpose.msra.mxu0 0.0
        %2289 = vmatpush.xpose.msra.mxu0 0.0
        %2290 = vmatpush.xpose.msra.mxu0 0.0
        %2291 = vmatpush.xpose.msra.mxu0 0.0
        %2292 = vmatpush.xpose.msra.mxu0 0.0
        %2293 = vmatpush.xpose.msra.mxu0 0.0
        %2294 = vmatpush.xpose.msra.mxu0 0.0
        %2295 = vmatpush.xpose.msra.mxu0 0.0
        %2296 = vmatpush.xpose.msra.mxu0 0.0
        %2297 = vmatpush.xpose.msra.mxu0 0.0
        %2298 = vmatpush.xpose.msra.mxu0 0.0
        %2299 = vmatpush.xpose.msra.mxu0 0.0
        %2300 = vmatpush.xpose.msra.mxu0 0.0
        %2301 = vmatpush.xpose.msra.mxu0 0.0
        %2302 = vmatpush.xpose.msra.mxu0 %v2285
        %2303 = vmatmul.f32.gmra.mxu0 %v2283
        %v2304 = vpop.f32.mrf.mxu0
        %v2305 = vadd.f32 %v2281, %v2304
        %2306 = vdwg.mxu0
        %2307 = vrot.lane.b32.xlu0 %v1029, 112
        %v2308 = vpop.permute.xlu0 %2307
        %2309 = vrot.lane.b32.xlu0 %v872, 112
        %v2310 = vpop.permute.xlu0 %2309
        %2311 = vrot.lane.b32.xlu0 %v1018, 112
        %v2312 = vpop.permute.xlu0 %2311
        %v2314 = vsel %vm1031, %v2308, 0
        %v2316 = vsel %vm1031, %v2310, 0
        %2318 = vmatpush.xpose.msra.mxu0 0.0
        %2319 = vmatpush.xpose.msra.mxu0 0.0
        %2320 = vmatpush.xpose.msra.mxu0 0.0
        %2321 = vmatpush.xpose.msra.mxu0 0.0
        %2322 = vmatpush.xpose.msra.mxu0 0.0
        %2323 = vmatpush.xpose.msra.mxu0 0.0
        %2324 = vmatpush.xpose.msra.mxu0 0.0
        %2325 = vmatpush.xpose.msra.mxu0 0.0
        %2326 = vmatpush.xpose.msra.mxu0 0.0
        %2327 = vmatpush.xpose.msra.mxu0 0.0
        %2328 = vmatpush.xpose.msra.mxu0 0.0
        %2329 = vmatpush.xpose.msra.mxu0 0.0
        %2330 = vmatpush.xpose.msra.mxu0 0.0
        %2331 = vmatpush.xpose.msra.mxu0 0.0
        %2332 = vmatpush.xpose.msra.mxu0 0.0
        %2333 = vmatpush.xpose.msra.mxu0 %v2316
        %2334 = vmatmul.f32.gmra.mxu0 %v2314
        %v2335 = vpop.f32.mrf.mxu0
        %v2336 = vadd.f32 %v2312, %v2335
        %2337 = vdwg.mxu0
        %2338 = vrot.lane.b32.xlu0 %v1030, 112
        %v2339 = vpop.permute.xlu0 %2338
        %2340 = vrot.lane.b32.xlu0 %v875, 112
        %v2341 = vpop.permute.xlu0 %2340
        %2342 = vrot.lane.b32.xlu0 %v1021, 112
        %v2343 = vpop.permute.xlu0 %2342
        %v2345 = vsel %vm1031, %v2339, 0
        %v2347 = vsel %vm1031, %v2341, 0
        %2349 = vmatpush.xpose.msra.mxu0 0.0
        %2350 = vmatpush.xpose.msra.mxu0 0.0
        %2351 = vmatpush.xpose.msra.mxu0 0.0
        %2352 = vmatpush.xpose.msra.mxu0 0.0
        %2353 = vmatpush.xpose.msra.mxu0 0.0
        %2354 = vmatpush.xpose.msra.mxu0 0.0
        %2355 = vmatpush.xpose.msra.mxu0 0.0
        %2356 = vmatpush.xpose.msra.mxu0 0.0
        %2357 = vmatpush.xpose.msra.mxu0 0.0
        %2358 = vmatpush.xpose.msra.mxu0 0.0
        %2359 = vmatpush.xpose.msra.mxu0 0.0
        %2360 = vmatpush.xpose.msra.mxu0 0.0
        %2361 = vmatpush.xpose.msra.mxu0 0.0
        %2362 = vmatpush.xpose.msra.mxu0 0.0
        %2363 = vmatpush.xpose.msra.mxu0 0.0
        %2364 = vmatpush.xpose.msra.mxu0 %v2347
        %2365 = vmatmul.f32.gmra.mxu0 %v2345
        %v2366 = vpop.f32.mrf.mxu0
        %v2367 = vadd.f32 %v2343, %v2366
        %2368 = vdwg.mxu0
        %v2369 = vsel %vm1031, %v2150, -inf
        %2370 = vmax.xlane.f32.xlu0 %v2369
        %v2371 = vpop.xlane.xlu0 %2370
        %v2372 = vsel %vm1031, %v2181, -inf
        %2373 = vmax.xlane.f32.xlu0 %v2372
        %v2374 = vpop.xlane.xlu0 %2373
        %v2375 = vsel %vm1031, %v2212, -inf
        %2376 = vmax.xlane.f32.xlu0 %v2375
        %v2377 = vpop.xlane.xlu0 %2376
        %v2378 = vsel %vm1031, %v2243, -inf
        %2379 = vmax.xlane.f32.xlu0 %v2378
        %v2380 = vpop.xlane.xlu0 %2379
        %v2381 = vsel %vm1031, %v2274, -inf
        %2382 = vmax.xlane.f32.xlu0 %v2381
        %v2383 = vpop.xlane.xlu0 %2382
        %v2384 = vsel %vm1031, %v2305, -inf
        %2385 = vmax.xlane.f32.xlu0 %v2384
        %v2386 = vpop.xlane.xlu0 %2385
        %v2387 = vsel %vm1031, %v2336, -inf
        %2388 = vmax.xlane.f32.xlu0 %v2387
        %v2389 = vpop.xlane.xlu0 %2388
        %v2390 = vsel %vm1031, %v2367, -inf
        %2391 = vmax.xlane.f32.xlu0 %v2390
        %v2392 = vpop.xlane.xlu0 %2391
        %v2393 = vsub.f32 %v2150, %v2371
        %v2394 = vsub.f32 %v2181, %v2374
        %v2395 = vsub.f32 %v2212, %v2377
        %v2396 = vsub.f32 %v2243, %v2380
        %v2397 = vsub.f32 %v2274, %v2383
        %v2398 = vsub.f32 %v2305, %v2386
        %v2399 = vsub.f32 %v2336, %v2389
        %v2400 = vsub.f32 %v2367, %v2392
        %v2401 = vmul.f32 %v2393, 1.442695
        %v2402 = vpow.pop %v2401
        %v2403 = vmul.f32 %v2394, 1.442695
        %v2404 = vpow.pop %v2403
        %v2405 = vmul.f32 %v2395, 1.442695
        %v2406 = vpow.pop %v2405
        %v2407 = vmul.f32 %v2396, 1.442695
        %v2408 = vpow.pop %v2407
        %v2409 = vmul.f32 %v2397, 1.442695
        %v2410 = vpow.pop %v2409
        %v2411 = vmul.f32 %v2398, 1.442695
        %v2412 = vpow.pop %v2411
        %v2413 = vmul.f32 %v2399, 1.442695
        %v2414 = vpow.pop %v2413
        %v2415 = vmul.f32 %v2400, 1.442695
        %v2416 = vpow.pop %v2415
        %v2417 = vsel %vm1031, %v2402, 0.0
        %2418 = vadd.xlane.f32.xlu0 %v2417
        %v2419 = vpop.xlane.xlu0 %2418
        %v2420 = vsel %vm1031, %v2404, 0.0
        %2421 = vadd.xlane.f32.xlu0 %v2420
        %v2422 = vpop.xlane.xlu0 %2421
        %v2423 = vsel %vm1031, %v2406, 0.0
        %2424 = vadd.xlane.f32.xlu0 %v2423
        %v2425 = vpop.xlane.xlu0 %2424
        %v2426 = vsel %vm1031, %v2408, 0.0
        %2427 = vadd.xlane.f32.xlu0 %v2426
        %v2428 = vpop.xlane.xlu0 %2427
        %v2429 = vsel %vm1031, %v2410, 0.0
        %2430 = vadd.xlane.f32.xlu0 %v2429
        %v2431 = vpop.xlane.xlu0 %2430
        %v2432 = vsel %vm1031, %v2412, 0.0
        %2433 = vadd.xlane.f32.xlu0 %v2432
        %v2434 = vpop.xlane.xlu0 %2433
        %v2435 = vsel %vm1031, %v2414, 0.0
        %2436 = vadd.xlane.f32.xlu0 %v2435
        %v2437 = vpop.xlane.xlu0 %2436
        %v2438 = vsel %vm1031, %v2416, 0.0
        %2439 = vadd.xlane.f32.xlu0 %v2438
        %v2440 = vpop.xlane.xlu0 %2439
        %v2441 = vrcp.pop %v2419
        %v2442 = vrcp.pop %v2422
        %v2443 = vrcp.pop %v2425
        %v2444 = vrcp.pop %v2428
        %v2445 = vrcp.pop %v2431
        %v2446 = vrcp.pop %v2434
        %v2447 = vrcp.pop %v2437
        %v2448 = vrcp.pop %v2440
        %v2449 = vmul.f32 %v2402, %v2441
        %v2450 = vmul.f32 %v2404, %v2442
        %v2451 = vmul.f32 %v2406, %v2443
        %v2452 = vmul.f32 %v2408, %v2444
        %v2453 = vmul.f32 %v2410, %v2445
        %v2454 = vmul.f32 %v2412, %v2446
        %v2455 = vmul.f32 %v2414, %v2447
        %v2456 = vmul.f32 %v2416, %v2448
        %2457 = vrot.lane.b32.xlu0 %v927, 112
        %v2458 = vpop.permute.xlu0 %2457
        %v2461 = vsel %vm1031, %v2449, 0
        %2463 = vmatpush.msra.mxu0 0.0
        %2464 = vmatpush.msra.mxu0 0.0
        %2465 = vmatpush.msra.mxu0 0.0
        %2466 = vmatpush.msra.mxu0 0.0
        %2467 = vmatpush.msra.mxu0 0.0
        %2468 = vmatpush.msra.mxu0 0.0
        %2469 = vmatpush.msra.mxu0 0.0
        %2470 = vmatpush.msra.mxu0 0.0
        %2471 = vmatpush.msra.mxu0 0.0
        %2472 = vmatpush.msra.mxu0 0.0
        %2473 = vmatpush.msra.mxu0 0.0
        %2474 = vmatpush.msra.mxu0 0.0
        %2475 = vmatpush.msra.mxu0 0.0
        %2476 = vmatpush.msra.mxu0 0.0
        %2477 = vmatpush.msra.mxu0 0.0
        %2478 = vmatpush.msra.mxu0 %v2458
        %2479 = vmatmul.f32.gmra.mxu0 %v2461
        %v2480 = vpop.f32.mrf.mxu0
        %v2481 = vadd.f32 0.0, %v2480
        %2482 = vdwg.mxu0
        %2483 = vrot.lane.b32.xlu0 %v930, 112
        %v2484 = vpop.permute.xlu0 %2483
        %v2487 = vsel %vm1031, %v2450, 0
        %2489 = vmatpush.msra.mxu0 0.0
        %2490 = vmatpush.msra.mxu0 0.0
        %2491 = vmatpush.msra.mxu0 0.0
        %2492 = vmatpush.msra.mxu0 0.0
        %2493 = vmatpush.msra.mxu0 0.0
        %2494 = vmatpush.msra.mxu0 0.0
        %2495 = vmatpush.msra.mxu0 0.0
        %2496 = vmatpush.msra.mxu0 0.0
        %2497 = vmatpush.msra.mxu0 0.0
        %2498 = vmatpush.msra.mxu0 0.0
        %2499 = vmatpush.msra.mxu0 0.0
        %2500 = vmatpush.msra.mxu0 0.0
        %2501 = vmatpush.msra.mxu0 0.0
        %2502 = vmatpush.msra.mxu0 0.0
        %2503 = vmatpush.msra.mxu0 0.0
        %2504 = vmatpush.msra.mxu0 %v2484
        %2505 = vmatmul.f32.gmra.mxu0 %v2487
        %v2506 = vpop.f32.mrf.mxu0
        %v2507 = vadd.f32 0.0, %v2506
        %2508 = vdwg.mxu0
        %2509 = vrot.lane.b32.xlu0 %v933, 112
        %v2510 = vpop.permute.xlu0 %2509
        %v2513 = vsel %vm1031, %v2451, 0
        %2515 = vmatpush.msra.mxu0 0.0
        %2516 = vmatpush.msra.mxu0 0.0
        %2517 = vmatpush.msra.mxu0 0.0
        %2518 = vmatpush.msra.mxu0 0.0
        %2519 = vmatpush.msra.mxu0 0.0
        %2520 = vmatpush.msra.mxu0 0.0
        %2521 = vmatpush.msra.mxu0 0.0
        %2522 = vmatpush.msra.mxu0 0.0
        %2523 = vmatpush.msra.mxu0 0.0
        %2524 = vmatpush.msra.mxu0 0.0
        %2525 = vmatpush.msra.mxu0 0.0
        %2526 = vmatpush.msra.mxu0 0.0
        %2527 = vmatpush.msra.mxu0 0.0
        %2528 = vmatpush.msra.mxu0 0.0
        %2529 = vmatpush.msra.mxu0 0.0
        %2530 = vmatpush.msra.mxu0 %v2510
        %2531 = vmatmul.f32.gmra.mxu0 %v2513
        %v2532 = vpop.f32.mrf.mxu0
        %v2533 = vadd.f32 0.0, %v2532
        %2534 = vdwg.mxu0
        %2535 = vrot.lane.b32.xlu0 %v936, 112
        %v2536 = vpop.permute.xlu0 %2535
        %v2539 = vsel %vm1031, %v2452, 0
        %2541 = vmatpush.msra.mxu0 0.0
        %2542 = vmatpush.msra.mxu0 0.0
        %2543 = vmatpush.msra.mxu0 0.0
        %2544 = vmatpush.msra.mxu0 0.0
        %2545 = vmatpush.msra.mxu0 0.0
        %2546 = vmatpush.msra.mxu0 0.0
        %2547 = vmatpush.msra.mxu0 0.0
        %2548 = vmatpush.msra.mxu0 0.0
        %2549 = vmatpush.msra.mxu0 0.0
        %2550 = vmatpush.msra.mxu0 0.0
        %2551 = vmatpush.msra.mxu0 0.0
        %2552 = vmatpush.msra.mxu0 0.0
        %2553 = vmatpush.msra.mxu0 0.0
        %2554 = vmatpush.msra.mxu0 0.0
        %2555 = vmatpush.msra.mxu0 0.0
        %2556 = vmatpush.msra.mxu0 %v2536
        %2557 = vmatmul.f32.gmra.mxu0 %v2539
        %v2558 = vpop.f32.mrf.mxu0
        %v2559 = vadd.f32 0.0, %v2558
        %2560 = vdwg.mxu0
        %2561 = vrot.lane.b32.xlu0 %v939, 112
        %v2562 = vpop.permute.xlu0 %2561
        %v2565 = vsel %vm1031, %v2453, 0
        %2567 = vmatpush.msra.mxu0 0.0
        %2568 = vmatpush.msra.mxu0 0.0
        %2569 = vmatpush.msra.mxu0 0.0
        %2570 = vmatpush.msra.mxu0 0.0
        %2571 = vmatpush.msra.mxu0 0.0
        %2572 = vmatpush.msra.mxu0 0.0
        %2573 = vmatpush.msra.mxu0 0.0
        %2574 = vmatpush.msra.mxu0 0.0
        %2575 = vmatpush.msra.mxu0 0.0
        %2576 = vmatpush.msra.mxu0 0.0
        %2577 = vmatpush.msra.mxu0 0.0
        %2578 = vmatpush.msra.mxu0 0.0
        %2579 = vmatpush.msra.mxu0 0.0
        %2580 = vmatpush.msra.mxu0 0.0
        %2581 = vmatpush.msra.mxu0 0.0
        %2582 = vmatpush.msra.mxu0 %v2562
        %2583 = vmatmul.f32.gmra.mxu0 %v2565
        %v2584 = vpop.f32.mrf.mxu0
        %v2585 = vadd.f32 0.0, %v2584
        %2586 = vdwg.mxu0
        %2587 = vrot.lane.b32.xlu0 %v942, 112
        %v2588 = vpop.permute.xlu0 %2587
        %v2591 = vsel %vm1031, %v2454, 0
        %2593 = vmatpush.msra.mxu0 0.0
        %2594 = vmatpush.msra.mxu0 0.0
        %2595 = vmatpush.msra.mxu0 0.0
        %2596 = vmatpush.msra.mxu0 0.0
        %2597 = vmatpush.msra.mxu0 0.0
        %2598 = vmatpush.msra.mxu0 0.0
        %2599 = vmatpush.msra.mxu0 0.0
        %2600 = vmatpush.msra.mxu0 0.0
        %2601 = vmatpush.msra.mxu0 0.0
        %2602 = vmatpush.msra.mxu0 0.0
        %2603 = vmatpush.msra.mxu0 0.0
        %2604 = vmatpush.msra.mxu0 0.0
        %2605 = vmatpush.msra.mxu0 0.0
        %2606 = vmatpush.msra.mxu0 0.0
        %2607 = vmatpush.msra.mxu0 0.0
        %2608 = vmatpush.msra.mxu0 %v2588
        %2609 = vmatmul.f32.gmra.mxu0 %v2591
        %v2610 = vpop.f32.mrf.mxu0
        %v2611 = vadd.f32 0.0, %v2610
        %2612 = vdwg.mxu0
        %2613 = vrot.lane.b32.xlu0 %v945, 112
        %v2614 = vpop.permute.xlu0 %2613
        %v2617 = vsel %vm1031, %v2455, 0
        %2619 = vmatpush.msra.mxu0 0.0
        %2620 = vmatpush.msra.mxu0 0.0
        %2621 = vmatpush.msra.mxu0 0.0
        %2622 = vmatpush.msra.mxu0 0.0
        %2623 = vmatpush.msra.mxu0 0.0
        %2624 = vmatpush.msra.mxu0 0.0
        %2625 = vmatpush.msra.mxu0 0.0
        %2626 = vmatpush.msra.mxu0 0.0
        %2627 = vmatpush.msra.mxu0 0.0
        %2628 = vmatpush.msra.mxu0 0.0
        %2629 = vmatpush.msra.mxu0 0.0
        %2630 = vmatpush.msra.mxu0 0.0
        %2631 = vmatpush.msra.mxu0 0.0
        %2632 = vmatpush.msra.mxu0 0.0
        %2633 = vmatpush.msra.mxu0 0.0
        %2634 = vmatpush.msra.mxu0 %v2614
        %2635 = vmatmul.f32.gmra.mxu0 %v2617
        %v2636 = vpop.f32.mrf.mxu0
        %v2637 = vadd.f32 0.0, %v2636
        %2638 = vdwg.mxu0
        %2639 = vrot.lane.b32.xlu0 %v948, 112
        %v2640 = vpop.permute.xlu0 %2639
        %v2643 = vsel %vm1031, %v2456, 0
        %2645 = vmatpush.msra.mxu0 0.0
        %2646 = vmatpush.msra.mxu0 0.0
        %2647 = vmatpush.msra.mxu0 0.0
        %2648 = vmatpush.msra.mxu0 0.0
        %2649 = vmatpush.msra.mxu0 0.0
        %2650 = vmatpush.msra.mxu0 0.0
        %2651 = vmatpush.msra.mxu0 0.0
        %2652 = vmatpush.msra.mxu0 0.0
        %2653 = vmatpush.msra.mxu0 0.0
        %2654 = vmatpush.msra.mxu0 0.0
        %2655 = vmatpush.msra.mxu0 0.0
        %2656 = vmatpush.msra.mxu0 0.0
        %2657 = vmatpush.msra.mxu0 0.0
        %2658 = vmatpush.msra.mxu0 0.0
        %2659 = vmatpush.msra.mxu0 0.0
        %2660 = vmatpush.msra.mxu0 %v2640
        %2661 = vmatmul.f32.gmra.mxu0 %v2643
        %v2662 = vpop.f32.mrf.mxu0
        %v2663 = vadd.f32 0.0, %v2662
        %2664 = vdwg.mxu0
        %2673 = vrot.lane.b32.xlu0 %v2481, 16
        %v2674 = vpop.permute.xlu0 %2673
        %2675 = vrot.lane.b32.xlu0 %v2507, 16
        %v2676 = vpop.permute.xlu0 %2675
        %2677 = vrot.lane.b32.xlu0 %v2533, 16
        %v2678 = vpop.permute.xlu0 %2677
        %2679 = vrot.lane.b32.xlu0 %v2559, 16
        %v2680 = vpop.permute.xlu0 %2679
        %2681 = vrot.lane.b32.xlu0 %v2585, 16
        %v2682 = vpop.permute.xlu0 %2681
        %2683 = vrot.lane.b32.xlu0 %v2611, 16
        %v2684 = vpop.permute.xlu0 %2683
        %2685 = vrot.lane.b32.xlu0 %v2637, 16
        %v2686 = vpop.permute.xlu0 %2685
        %2687 = vrot.lane.b32.xlu0 %v2663, 16
        %v2688 = vpop.permute.xlu0 %2687
        %vm2697 = vcmask 195712
        %2698 = vst.msk [vmem:[#allocation2] sm:$0xff] %vm2697, %v2674
        %2699 = vst.msk [vmem:[#allocation2 + $0x8] sm:$0xff] %vm2697, %v2676
        %2700 = vst.msk [vmem:[#allocation2 + $0x10] sm:$0xff] %vm2697, %v2678
        %2701 = vst.msk [vmem:[#allocation2 + $0x18] sm:$0xff] %vm2697, %v2680
        %2702 = vst.msk [vmem:[#allocation2 + $0x20] sm:$0xff] %vm2697, %v2682
        %2703 = vst.msk [vmem:[#allocation2 + $0x28] sm:$0xff] %vm2697, %v2684
        %2704 = vst.msk [vmem:[#allocation2 + $0x30] sm:$0xff] %vm2697, %v2686
        %2705 = vst.msk [vmem:[#allocation2 + $0x38] sm:$0xff] %vm2697, %v2688
        %2706 = vrot.lane.b32.xlu0 %v1023, 104
        %v2707 = vpop.permute.xlu0 %2706
        %2708 = vrot.lane.b32.xlu0 %v854, 104
        %v2709 = vpop.permute.xlu0 %2708
        %2710 = vrot.lane.b32.xlu0 %v1000, 104
        %v2711 = vpop.permute.xlu0 %2710
        %v2713 = vsel %vm1031, %v2707, 0
        %v2715 = vsel %vm1031, %v2709, 0
        %2717 = vmatpush.xpose.msra.mxu0 0.0
        %2718 = vmatpush.xpose.msra.mxu0 0.0
        %2719 = vmatpush.xpose.msra.mxu0 0.0
        %2720 = vmatpush.xpose.msra.mxu0 0.0
        %2721 = vmatpush.xpose.msra.mxu0 0.0
        %2722 = vmatpush.xpose.msra.mxu0 0.0
        %2723 = vmatpush.xpose.msra.mxu0 0.0
        %2724 = vmatpush.xpose.msra.mxu0 0.0
        %2725 = vmatpush.xpose.msra.mxu0 0.0
        %2726 = vmatpush.xpose.msra.mxu0 0.0
        %2727 = vmatpush.xpose.msra.mxu0 0.0
        %2728 = vmatpush.xpose.msra.mxu0 0.0
        %2729 = vmatpush.xpose.msra.mxu0 0.0
        %2730 = vmatpush.xpose.msra.mxu0 0.0
        %2731 = vmatpush.xpose.msra.mxu0 0.0
        %2732 = vmatpush.xpose.msra.mxu0 %v2715
        %2733 = vmatmul.f32.gmra.mxu0 %v2713
        %v2734 = vpop.f32.mrf.mxu0
        %v2735 = vadd.f32 %v2711, %v2734
        %2736 = vdwg.mxu0
        %2737 = vrot.lane.b32.xlu0 %v1024, 104
        %v2738 = vpop.permute.xlu0 %2737
        %2739 = vrot.lane.b32.xlu0 %v857, 104
        %v2740 = vpop.permute.xlu0 %2739
        %2741 = vrot.lane.b32.xlu0 %v1003, 104
        %v2742 = vpop.permute.xlu0 %2741
        %v2744 = vsel %vm1031, %v2738, 0
        %v2746 = vsel %vm1031, %v2740, 0
        %2748 = vmatpush.xpose.msra.mxu0 0.0
        %2749 = vmatpush.xpose.msra.mxu0 0.0
        %2750 = vmatpush.xpose.msra.mxu0 0.0
        %2751 = vmatpush.xpose.msra.mxu0 0.0
        %2752 = vmatpush.xpose.msra.mxu0 0.0
        %2753 = vmatpush.xpose.msra.mxu0 0.0
        %2754 = vmatpush.xpose.msra.mxu0 0.0
        %2755 = vmatpush.xpose.msra.mxu0 0.0
        %2756 = vmatpush.xpose.msra.mxu0 0.0
        %2757 = vmatpush.xpose.msra.mxu0 0.0
        %2758 = vmatpush.xpose.msra.mxu0 0.0
        %2759 = vmatpush.xpose.msra.mxu0 0.0
        %2760 = vmatpush.xpose.msra.mxu0 0.0
        %2761 = vmatpush.xpose.msra.mxu0 0.0
        %2762 = vmatpush.xpose.msra.mxu0 0.0
        %2763 = vmatpush.xpose.msra.mxu0 %v2746
        %2764 = vmatmul.f32.gmra.mxu0 %v2744
        %v2765 = vpop.f32.mrf.mxu0
        %v2766 = vadd.f32 %v2742, %v2765
        %2767 = vdwg.mxu0
        %2768 = vrot.lane.b32.xlu0 %v1025, 104
        %v2769 = vpop.permute.xlu0 %2768
        %2770 = vrot.lane.b32.xlu0 %v860, 104
        %v2771 = vpop.permute.xlu0 %2770
        %2772 = vrot.lane.b32.xlu0 %v1006, 104
        %v2773 = vpop.permute.xlu0 %2772
        %v2775 = vsel %vm1031, %v2769, 0
        %v2777 = vsel %vm1031, %v2771, 0
        %2779 = vmatpush.xpose.msra.mxu0 0.0
        %2780 = vmatpush.xpose.msra.mxu0 0.0
        %2781 = vmatpush.xpose.msra.mxu0 0.0
        %2782 = vmatpush.xpose.msra.mxu0 0.0
        %2783 = vmatpush.xpose.msra.mxu0 0.0
        %2784 = vmatpush.xpose.msra.mxu0 0.0
        %2785 = vmatpush.xpose.msra.mxu0 0.0
        %2786 = vmatpush.xpose.msra.mxu0 0.0
        %2787 = vmatpush.xpose.msra.mxu0 0.0
        %2788 = vmatpush.xpose.msra.mxu0 0.0
        %2789 = vmatpush.xpose.msra.mxu0 0.0
        %2790 = vmatpush.xpose.msra.mxu0 0.0
        %2791 = vmatpush.xpose.msra.mxu0 0.0
        %2792 = vmatpush.xpose.msra.mxu0 0.0
        %2793 = vmatpush.xpose.msra.mxu0 0.0
        %2794 = vmatpush.xpose.msra.mxu0 %v2777
        %2795 = vmatmul.f32.gmra.mxu0 %v2775
        %v2796 = vpop.f32.mrf.mxu0
        %v2797 = vadd.f32 %v2773, %v2796
        %2798 = vdwg.mxu0
        %2799 = vrot.lane.b32.xlu0 %v1026, 104
        %v2800 = vpop.permute.xlu0 %2799
        %2801 = vrot.lane.b32.xlu0 %v863, 104
        %v2802 = vpop.permute.xlu0 %2801
        %2803 = vrot.lane.b32.xlu0 %v1009, 104
        %v2804 = vpop.permute.xlu0 %2803
        %v2806 = vsel %vm1031, %v2800, 0
        %v2808 = vsel %vm1031, %v2802, 0
        %2810 = vmatpush.xpose.msra.mxu0 0.0
        %2811 = vmatpush.xpose.msra.mxu0 0.0
        %2812 = vmatpush.xpose.msra.mxu0 0.0
        %2813 = vmatpush.xpose.msra.mxu0 0.0
        %2814 = vmatpush.xpose.msra.mxu0 0.0
        %2815 = vmatpush.xpose.msra.mxu0 0.0
        %2816 = vmatpush.xpose.msra.mxu0 0.0
        %2817 = vmatpush.xpose.msra.mxu0 0.0
        %2818 = vmatpush.xpose.msra.mxu0 0.0
        %2819 = vmatpush.xpose.msra.mxu0 0.0
        %2820 = vmatpush.xpose.msra.mxu0 0.0
        %2821 = vmatpush.xpose.msra.mxu0 0.0
        %2822 = vmatpush.xpose.msra.mxu0 0.0
        %2823 = vmatpush.xpose.msra.mxu0 0.0
        %2824 = vmatpush.xpose.msra.mxu0 0.0
        %2825 = vmatpush.xpose.msra.mxu0 %v2808
        %2826 = vmatmul.f32.gmra.mxu0 %v2806
        %v2827 = vpop.f32.mrf.mxu0
        %v2828 = vadd.f32 %v2804, %v2827
        %2829 = vdwg.mxu0
        %2830 = vrot.lane.b32.xlu0 %v1027, 104
        %v2831 = vpop.permute.xlu0 %2830
        %2832 = vrot.lane.b32.xlu0 %v866, 104
        %v2833 = vpop.permute.xlu0 %2832
        %2834 = vrot.lane.b32.xlu0 %v1012, 104
        %v2835 = vpop.permute.xlu0 %2834
        %v2837 = vsel %vm1031, %v2831, 0
        %v2839 = vsel %vm1031, %v2833, 0
        %2841 = vmatpush.xpose.msra.mxu0 0.0
        %2842 = vmatpush.xpose.msra.mxu0 0.0
        %2843 = vmatpush.xpose.msra.mxu0 0.0
        %2844 = vmatpush.xpose.msra.mxu0 0.0
        %2845 = vmatpush.xpose.msra.mxu0 0.0
        %2846 = vmatpush.xpose.msra.mxu0 0.0
        %2847 = vmatpush.xpose.msra.mxu0 0.0
        %2848 = vmatpush.xpose.msra.mxu0 0.0
        %2849 = vmatpush.xpose.msra.mxu0 0.0
        %2850 = vmatpush.xpose.msra.mxu0 0.0
        %2851 = vmatpush.xpose.msra.mxu0 0.0
        %2852 = vmatpush.xpose.msra.mxu0 0.0
        %2853 = vmatpush.xpose.msra.mxu0 0.0
        %2854 = vmatpush.xpose.msra.mxu0 0.0
        %2855 = vmatpush.xpose.msra.mxu0 0.0
        %2856 = vmatpush.xpose.msra.mxu0 %v2839
        %2857 = vmatmul.f32.gmra.mxu0 %v2837
        %v2858 = vpop.f32.mrf.mxu0
        %v2859 = vadd.f32 %v2835, %v2858
        %2860 = vdwg.mxu0
        %2861 = vrot.lane.b32.xlu0 %v1028, 104
        %v2862 = vpop.permute.xlu0 %2861
        %2863 = vrot.lane.b32.xlu0 %v869, 104
        %v2864 = vpop.permute.xlu0 %2863
        %2865 = vrot.lane.b32.xlu0 %v1015, 104
        %v2866 = vpop.permute.xlu0 %2865
        %v2868 = vsel %vm1031, %v2862, 0
        %v2870 = vsel %vm1031, %v2864, 0
        %2872 = vmatpush.xpose.msra.mxu0 0.0
        %2873 = vmatpush.xpose.msra.mxu0 0.0
        %2874 = vmatpush.xpose.msra.mxu0 0.0
        %2875 = vmatpush.xpose.msra.mxu0 0.0
        %2876 = vmatpush.xpose.msra.mxu0 0.0
        %2877 = vmatpush.xpose.msra.mxu0 0.0
        %2878 = vmatpush.xpose.msra.mxu0 0.0
        %2879 = vmatpush.xpose.msra.mxu0 0.0
        %2880 = vmatpush.xpose.msra.mxu0 0.0
        %2881 = vmatpush.xpose.msra.mxu0 0.0
        %2882 = vmatpush.xpose.msra.mxu0 0.0
        %2883 = vmatpush.xpose.msra.mxu0 0.0
        %2884 = vmatpush.xpose.msra.mxu0 0.0
        %2885 = vmatpush.xpose.msra.mxu0 0.0
        %2886 = vmatpush.xpose.msra.mxu0 0.0
        %2887 = vmatpush.xpose.msra.mxu0 %v2870
        %2888 = vmatmul.f32.gmra.mxu0 %v2868
        %v2889 = vpop.f32.mrf.mxu0
        %v2890 = vadd.f32 %v2866, %v2889
        %2891 = vdwg.mxu0
        %2892 = vrot.lane.b32.xlu0 %v1029, 104
        %v2893 = vpop.permute.xlu0 %2892
        %2894 = vrot.lane.b32.xlu0 %v872, 104
        %v2895 = vpop.permute.xlu0 %2894
        %2896 = vrot.lane.b32.xlu0 %v1018, 104
        %v2897 = vpop.permute.xlu0 %2896
        %v2899 = vsel %vm1031, %v2893, 0
        %v2901 = vsel %vm1031, %v2895, 0
        %2903 = vmatpush.xpose.msra.mxu0 0.0
        %2904 = vmatpush.xpose.msra.mxu0 0.0
        %2905 = vmatpush.xpose.msra.mxu0 0.0
        %2906 = vmatpush.xpose.msra.mxu0 0.0
        %2907 = vmatpush.xpose.msra.mxu0 0.0
        %2908 = vmatpush.xpose.msra.mxu0 0.0
        %2909 = vmatpush.xpose.msra.mxu0 0.0
        %2910 = vmatpush.xpose.msra.mxu0 0.0
        %2911 = vmatpush.xpose.msra.mxu0 0.0
        %2912 = vmatpush.xpose.msra.mxu0 0.0
        %2913 = vmatpush.xpose.msra.mxu0 0.0
        %2914 = vmatpush.xpose.msra.mxu0 0.0
        %2915 = vmatpush.xpose.msra.mxu0 0.0
        %2916 = vmatpush.xpose.msra.mxu0 0.0
        %2917 = vmatpush.xpose.msra.mxu0 0.0
        %2918 = vmatpush.xpose.msra.mxu0 %v2901
        %2919 = vmatmul.f32.gmra.mxu0 %v2899
        %v2920 = vpop.f32.mrf.mxu0
        %v2921 = vadd.f32 %v2897, %v2920
        %2922 = vdwg.mxu0
        %2923 = vrot.lane.b32.xlu0 %v1030, 104
        %v2924 = vpop.permute.xlu0 %2923
        %2925 = vrot.lane.b32.xlu0 %v875, 104
        %v2926 = vpop.permute.xlu0 %2925
        %2927 = vrot.lane.b32.xlu0 %v1021, 104
        %v2928 = vpop.permute.xlu0 %2927
        %v2930 = vsel %vm1031, %v2924, 0
        %v2932 = vsel %vm1031, %v2926, 0
        %2934 = vmatpush.xpose.msra.mxu0 0.0
        %2935 = vmatpush.xpose.msra.mxu0 0.0
        %2936 = vmatpush.xpose.msra.mxu0 0.0
        %2937 = vmatpush.xpose.msra.mxu0 0.0
        %2938 = vmatpush.xpose.msra.mxu0 0.0
        %2939 = vmatpush.xpose.msra.mxu0 0.0
        %2940 = vmatpush.xpose.msra.mxu0 0.0
        %2941 = vmatpush.xpose.msra.mxu0 0.0
        %2942 = vmatpush.xpose.msra.mxu0 0.0
        %2943 = vmatpush.xpose.msra.mxu0 0.0
        %2944 = vmatpush.xpose.msra.mxu0 0.0
        %2945 = vmatpush.xpose.msra.mxu0 0.0
        %2946 = vmatpush.xpose.msra.mxu0 0.0
        %2947 = vmatpush.xpose.msra.mxu0 0.0
        %2948 = vmatpush.xpose.msra.mxu0 0.0
        %2949 = vmatpush.xpose.msra.mxu0 %v2932
        %2950 = vmatmul.f32.gmra.mxu0 %v2930
        %v2951 = vpop.f32.mrf.mxu0
        %v2952 = vadd.f32 %v2928, %v2951
        %2953 = vdwg.mxu0
        %v2954 = vsel %vm1031, %v2735, -inf
        %2955 = vmax.xlane.f32.xlu0 %v2954
        %v2956 = vpop.xlane.xlu0 %2955
        %v2957 = vsel %vm1031, %v2766, -inf
        %2958 = vmax.xlane.f32.xlu0 %v2957
        %v2959 = vpop.xlane.xlu0 %2958
        %v2960 = vsel %vm1031, %v2797, -inf
        %2961 = vmax.xlane.f32.xlu0 %v2960
        %v2962 = vpop.xlane.xlu0 %2961
        %v2963 = vsel %vm1031, %v2828, -inf
        %2964 = vmax.xlane.f32.xlu0 %v2963
        %v2965 = vpop.xlane.xlu0 %2964
        %v2966 = vsel %vm1031, %v2859, -inf
        %2967 = vmax.xlane.f32.xlu0 %v2966
        %v2968 = vpop.xlane.xlu0 %2967
        %v2969 = vsel %vm1031, %v2890, -inf
        %2970 = vmax.xlane.f32.xlu0 %v2969
        %v2971 = vpop.xlane.xlu0 %2970
        %v2972 = vsel %vm1031, %v2921, -inf
        %2973 = vmax.xlane.f32.xlu0 %v2972
        %v2974 = vpop.xlane.xlu0 %2973
        %v2975 = vsel %vm1031, %v2952, -inf
        %2976 = vmax.xlane.f32.xlu0 %v2975
        %v2977 = vpop.xlane.xlu0 %2976
        %v2978 = vsub.f32 %v2735, %v2956
        %v2979 = vsub.f32 %v2766, %v2959
        %v2980 = vsub.f32 %v2797, %v2962
        %v2981 = vsub.f32 %v2828, %v2965
        %v2982 = vsub.f32 %v2859, %v2968
        %v2983 = vsub.f32 %v2890, %v2971
        %v2984 = vsub.f32 %v2921, %v2974
        %v2985 = vsub.f32 %v2952, %v2977
        %v2986 = vmul.f32 %v2978, 1.442695
        %v2987 = vpow.pop %v2986
        %v2988 = vmul.f32 %v2979, 1.442695
        %v2989 = vpow.pop %v2988
        %v2990 = vmul.f32 %v2980, 1.442695
        %v2991 = vpow.pop %v2990
        %v2992 = vmul.f32 %v2981, 1.442695
        %v2993 = vpow.pop %v2992
        %v2994 = vmul.f32 %v2982, 1.442695
        %v2995 = vpow.pop %v2994
        %v2996 = vmul.f32 %v2983, 1.442695
        %v2997 = vpow.pop %v2996
        %v2998 = vmul.f32 %v2984, 1.442695
        %v2999 = vpow.pop %v2998
        %v3000 = vmul.f32 %v2985, 1.442695
        %v3001 = vpow.pop %v3000
        %v3002 = vsel %vm1031, %v2987, 0.0
        %3003 = vadd.xlane.f32.xlu0 %v3002
        %v3004 = vpop.xlane.xlu0 %3003
        %v3005 = vsel %vm1031, %v2989, 0.0
        %3006 = vadd.xlane.f32.xlu0 %v3005
        %v3007 = vpop.xlane.xlu0 %3006
        %v3008 = vsel %vm1031, %v2991, 0.0
        %3009 = vadd.xlane.f32.xlu0 %v3008
        %v3010 = vpop.xlane.xlu0 %3009
        %v3011 = vsel %vm1031, %v2993, 0.0
        %3012 = vadd.xlane.f32.xlu0 %v3011
        %v3013 = vpop.xlane.xlu0 %3012
        %v3014 = vsel %vm1031, %v2995, 0.0
        %3015 = vadd.xlane.f32.xlu0 %v3014
        %v3016 = vpop.xlane.xlu0 %3015
        %v3017 = vsel %vm1031, %v2997, 0.0
        %3018 = vadd.xlane.f32.xlu0 %v3017
        %v3019 = vpop.xlane.xlu0 %3018
        %v3020 = vsel %vm1031, %v2999, 0.0
        %3021 = vadd.xlane.f32.xlu0 %v3020
        %v3022 = vpop.xlane.xlu0 %3021
        %v3023 = vsel %vm1031, %v3001, 0.0
        %3024 = vadd.xlane.f32.xlu0 %v3023
        %v3025 = vpop.xlane.xlu0 %3024
        %v3026 = vrcp.pop %v3004
        %v3027 = vrcp.pop %v3007
        %v3028 = vrcp.pop %v3010
        %v3029 = vrcp.pop %v3013
        %v3030 = vrcp.pop %v3016
        %v3031 = vrcp.pop %v3019
        %v3032 = vrcp.pop %v3022
        %v3033 = vrcp.pop %v3025
        %v3034 = vmul.f32 %v2987, %v3026
        %v3035 = vmul.f32 %v2989, %v3027
        %v3036 = vmul.f32 %v2991, %v3028
        %v3037 = vmul.f32 %v2993, %v3029
        %v3038 = vmul.f32 %v2995, %v3030
        %v3039 = vmul.f32 %v2997, %v3031
        %v3040 = vmul.f32 %v2999, %v3032
        %v3041 = vmul.f32 %v3001, %v3033
        %3042 = vrot.lane.b32.xlu0 %v927, 104
        %v3043 = vpop.permute.xlu0 %3042
        %v3046 = vsel %vm1031, %v3034, 0
        %3048 = vmatpush.msra.mxu0 0.0
        %3049 = vmatpush.msra.mxu0 0.0
        %3050 = vmatpush.msra.mxu0 0.0
        %3051 = vmatpush.msra.mxu0 0.0
        %3052 = vmatpush.msra.mxu0 0.0
        %3053 = vmatpush.msra.mxu0 0.0
        %3054 = vmatpush.msra.mxu0 0.0
        %3055 = vmatpush.msra.mxu0 0.0
        %3056 = vmatpush.msra.mxu0 0.0
        %3057 = vmatpush.msra.mxu0 0.0
        %3058 = vmatpush.msra.mxu0 0.0
        %3059 = vmatpush.msra.mxu0 0.0
        %3060 = vmatpush.msra.mxu0 0.0
        %3061 = vmatpush.msra.mxu0 0.0
        %3062 = vmatpush.msra.mxu0 0.0
        %3063 = vmatpush.msra.mxu0 %v3043
        %3064 = vmatmul.f32.gmra.mxu0 %v3046
        %v3065 = vpop.f32.mrf.mxu0
        %v3066 = vadd.f32 0.0, %v3065
        %3067 = vdwg.mxu0
        %3068 = vrot.lane.b32.xlu0 %v930, 104
        %v3069 = vpop.permute.xlu0 %3068
        %v3072 = vsel %vm1031, %v3035, 0
        %3074 = vmatpush.msra.mxu0 0.0
        %3075 = vmatpush.msra.mxu0 0.0
        %3076 = vmatpush.msra.mxu0 0.0
        %3077 = vmatpush.msra.mxu0 0.0
        %3078 = vmatpush.msra.mxu0 0.0
        %3079 = vmatpush.msra.mxu0 0.0
        %3080 = vmatpush.msra.mxu0 0.0
        %3081 = vmatpush.msra.mxu0 0.0
        %3082 = vmatpush.msra.mxu0 0.0
        %3083 = vmatpush.msra.mxu0 0.0
        %3084 = vmatpush.msra.mxu0 0.0
        %3085 = vmatpush.msra.mxu0 0.0
        %3086 = vmatpush.msra.mxu0 0.0
        %3087 = vmatpush.msra.mxu0 0.0
        %3088 = vmatpush.msra.mxu0 0.0
        %3089 = vmatpush.msra.mxu0 %v3069
        %3090 = vmatmul.f32.gmra.mxu0 %v3072
        %v3091 = vpop.f32.mrf.mxu0
        %v3092 = vadd.f32 0.0, %v3091
        %3093 = vdwg.mxu0
        %3094 = vrot.lane.b32.xlu0 %v933, 104
        %v3095 = vpop.permute.xlu0 %3094
        %v3098 = vsel %vm1031, %v3036, 0
        %3100 = vmatpush.msra.mxu0 0.0
        %3101 = vmatpush.msra.mxu0 0.0
        %3102 = vmatpush.msra.mxu0 0.0
        %3103 = vmatpush.msra.mxu0 0.0
        %3104 = vmatpush.msra.mxu0 0.0
        %3105 = vmatpush.msra.mxu0 0.0
        %3106 = vmatpush.msra.mxu0 0.0
        %3107 = vmatpush.msra.mxu0 0.0
        %3108 = vmatpush.msra.mxu0 0.0
        %3109 = vmatpush.msra.mxu0 0.0
        %3110 = vmatpush.msra.mxu0 0.0
        %3111 = vmatpush.msra.mxu0 0.0
        %3112 = vmatpush.msra.mxu0 0.0
        %3113 = vmatpush.msra.mxu0 0.0
        %3114 = vmatpush.msra.mxu0 0.0
        %3115 = vmatpush.msra.mxu0 %v3095
        %3116 = vmatmul.f32.gmra.mxu0 %v3098
        %v3117 = vpop.f32.mrf.mxu0
        %v3118 = vadd.f32 0.0, %v3117
        %3119 = vdwg.mxu0
        %3120 = vrot.lane.b32.xlu0 %v936, 104
        %v3121 = vpop.permute.xlu0 %3120
        %v3124 = vsel %vm1031, %v3037, 0
        %3126 = vmatpush.msra.mxu0 0.0
        %3127 = vmatpush.msra.mxu0 0.0
        %3128 = vmatpush.msra.mxu0 0.0
        %3129 = vmatpush.msra.mxu0 0.0
        %3130 = vmatpush.msra.mxu0 0.0
        %3131 = vmatpush.msra.mxu0 0.0
        %3132 = vmatpush.msra.mxu0 0.0
        %3133 = vmatpush.msra.mxu0 0.0
        %3134 = vmatpush.msra.mxu0 0.0
        %3135 = vmatpush.msra.mxu0 0.0
        %3136 = vmatpush.msra.mxu0 0.0
        %3137 = vmatpush.msra.mxu0 0.0
        %3138 = vmatpush.msra.mxu0 0.0
        %3139 = vmatpush.msra.mxu0 0.0
        %3140 = vmatpush.msra.mxu0 0.0
        %3141 = vmatpush.msra.mxu0 %v3121
        %3142 = vmatmul.f32.gmra.mxu0 %v3124
        %v3143 = vpop.f32.mrf.mxu0
        %v3144 = vadd.f32 0.0, %v3143
        %3145 = vdwg.mxu0
        %3146 = vrot.lane.b32.xlu0 %v939, 104
        %v3147 = vpop.permute.xlu0 %3146
        %v3150 = vsel %vm1031, %v3038, 0
        %3152 = vmatpush.msra.mxu0 0.0
        %3153 = vmatpush.msra.mxu0 0.0
        %3154 = vmatpush.msra.mxu0 0.0
        %3155 = vmatpush.msra.mxu0 0.0
        %3156 = vmatpush.msra.mxu0 0.0
        %3157 = vmatpush.msra.mxu0 0.0
        %3158 = vmatpush.msra.mxu0 0.0
        %3159 = vmatpush.msra.mxu0 0.0
        %3160 = vmatpush.msra.mxu0 0.0
        %3161 = vmatpush.msra.mxu0 0.0
        %3162 = vmatpush.msra.mxu0 0.0
        %3163 = vmatpush.msra.mxu0 0.0
        %3164 = vmatpush.msra.mxu0 0.0
        %3165 = vmatpush.msra.mxu0 0.0
        %3166 = vmatpush.msra.mxu0 0.0
        %3167 = vmatpush.msra.mxu0 %v3147
        %3168 = vmatmul.f32.gmra.mxu0 %v3150
        %v3169 = vpop.f32.mrf.mxu0
        %v3170 = vadd.f32 0.0, %v3169
        %3171 = vdwg.mxu0
        %3172 = vrot.lane.b32.xlu0 %v942, 104
        %v3173 = vpop.permute.xlu0 %3172
        %v3176 = vsel %vm1031, %v3039, 0
        %3178 = vmatpush.msra.mxu0 0.0
        %3179 = vmatpush.msra.mxu0 0.0
        %3180 = vmatpush.msra.mxu0 0.0
        %3181 = vmatpush.msra.mxu0 0.0
        %3182 = vmatpush.msra.mxu0 0.0
        %3183 = vmatpush.msra.mxu0 0.0
        %3184 = vmatpush.msra.mxu0 0.0
        %3185 = vmatpush.msra.mxu0 0.0
        %3186 = vmatpush.msra.mxu0 0.0
        %3187 = vmatpush.msra.mxu0 0.0
        %3188 = vmatpush.msra.mxu0 0.0
        %3189 = vmatpush.msra.mxu0 0.0
        %3190 = vmatpush.msra.mxu0 0.0
        %3191 = vmatpush.msra.mxu0 0.0
        %3192 = vmatpush.msra.mxu0 0.0
        %3193 = vmatpush.msra.mxu0 %v3173
        %3194 = vmatmul.f32.gmra.mxu0 %v3176
        %v3195 = vpop.f32.mrf.mxu0
        %v3196 = vadd.f32 0.0, %v3195
        %3197 = vdwg.mxu0
        %3198 = vrot.lane.b32.xlu0 %v945, 104
        %v3199 = vpop.permute.xlu0 %3198
        %v3202 = vsel %vm1031, %v3040, 0
        %3204 = vmatpush.msra.mxu0 0.0
        %3205 = vmatpush.msra.mxu0 0.0
        %3206 = vmatpush.msra.mxu0 0.0
        %3207 = vmatpush.msra.mxu0 0.0
        %3208 = vmatpush.msra.mxu0 0.0
        %3209 = vmatpush.msra.mxu0 0.0
        %3210 = vmatpush.msra.mxu0 0.0
        %3211 = vmatpush.msra.mxu0 0.0
        %3212 = vmatpush.msra.mxu0 0.0
        %3213 = vmatpush.msra.mxu0 0.0
        %3214 = vmatpush.msra.mxu0 0.0
        %3215 = vmatpush.msra.mxu0 0.0
        %3216 = vmatpush.msra.mxu0 0.0
        %3217 = vmatpush.msra.mxu0 0.0
        %3218 = vmatpush.msra.mxu0 0.0
        %3219 = vmatpush.msra.mxu0 %v3199
        %3220 = vmatmul.f32.gmra.mxu0 %v3202
        %v3221 = vpop.f32.mrf.mxu0
        %v3222 = vadd.f32 0.0, %v3221
        %3223 = vdwg.mxu0
        %3224 = vrot.lane.b32.xlu0 %v948, 104
        %v3225 = vpop.permute.xlu0 %3224
        %v3228 = vsel %vm1031, %v3041, 0
        %3230 = vmatpush.msra.mxu0 0.0
        %3231 = vmatpush.msra.mxu0 0.0
        %3232 = vmatpush.msra.mxu0 0.0
        %3233 = vmatpush.msra.mxu0 0.0
        %3234 = vmatpush.msra.mxu0 0.0
        %3235 = vmatpush.msra.mxu0 0.0
        %3236 = vmatpush.msra.mxu0 0.0
        %3237 = vmatpush.msra.mxu0 0.0
        %3238 = vmatpush.msra.mxu0 0.0
        %3239 = vmatpush.msra.mxu0 0.0
        %3240 = vmatpush.msra.mxu0 0.0
        %3241 = vmatpush.msra.mxu0 0.0
        %3242 = vmatpush.msra.mxu0 0.0
        %3243 = vmatpush.msra.mxu0 0.0
        %3244 = vmatpush.msra.mxu0 0.0
        %3245 = vmatpush.msra.mxu0 %v3225
        %3246 = vmatmul.f32.gmra.mxu0 %v3228
        %v3247 = vpop.f32.mrf.mxu0
        %v3248 = vadd.f32 0.0, %v3247
        %3249 = vdwg.mxu0
        %3258 = vrot.lane.b32.xlu0 %v3066, 24
        %v3259 = vpop.permute.xlu0 %3258
        %3260 = vrot.lane.b32.xlu0 %v3092, 24
        %v3261 = vpop.permute.xlu0 %3260
        %3262 = vrot.lane.b32.xlu0 %v3118, 24
        %v3263 = vpop.permute.xlu0 %3262
        %3264 = vrot.lane.b32.xlu0 %v3144, 24
        %v3265 = vpop.permute.xlu0 %3264
        %3266 = vrot.lane.b32.xlu0 %v3170, 24
        %v3267 = vpop.permute.xlu0 %3266
        %3268 = vrot.lane.b32.xlu0 %v3196, 24
        %v3269 = vpop.permute.xlu0 %3268
        %3270 = vrot.lane.b32.xlu0 %v3222, 24
        %v3271 = vpop.permute.xlu0 %3270
        %3272 = vrot.lane.b32.xlu0 %v3248, 24
        %v3273 = vpop.permute.xlu0 %3272
        %vm3282 = vcmask 261312
        %3283 = vst.msk [vmem:[#allocation2] sm:$0xff] %vm3282, %v3259
        %3284 = vst.msk [vmem:[#allocation2 + $0x8] sm:$0xff] %vm3282, %v3261
        %3285 = vst.msk [vmem:[#allocation2 + $0x10] sm:$0xff] %vm3282, %v3263
        %3286 = vst.msk [vmem:[#allocation2 + $0x18] sm:$0xff] %vm3282, %v3265
        %3287 = vst.msk [vmem:[#allocation2 + $0x20] sm:$0xff] %vm3282, %v3267
        %3288 = vst.msk [vmem:[#allocation2 + $0x28] sm:$0xff] %vm3282, %v3269
        %3289 = vst.msk [vmem:[#allocation2 + $0x30] sm:$0xff] %vm3282, %v3271
        %3290 = vst.msk [vmem:[#allocation2 + $0x38] sm:$0xff] %vm3282, %v3273
        %v3291 = vld [vmem:[#allocation2] sm:$0xff]
        %v3292 = vld [vmem:[#allocation2 + $0x8] sm:$0xff]
        %v3293 = vld [vmem:[#allocation2 + $0x10] sm:$0xff]
        %v3294 = vld [vmem:[#allocation2 + $0x18] sm:$0xff]
        %v3295 = vld [vmem:[#allocation2 + $0x20] sm:$0xff]
        %v3296 = vld [vmem:[#allocation2 + $0x28] sm:$0xff]
        %v3297 = vld [vmem:[#allocation2 + $0x30] sm:$0xff]
        %v3298 = vld [vmem:[#allocation2 + $0x38] sm:$0xff]
        %v3299 = vld [vmem:[#allocation17] sm:$0xff]
        %v3300 = vld [vmem:[#allocation17 + $0x8] sm:$0xff]
        %v3301 = vld [vmem:[#allocation17 + $0x10] sm:$0xff]
        %v3302 = vld [vmem:[#allocation17 + $0x18] sm:$0xff]
        %v3303 = vld [vmem:[%s13] sm:$0x1]
        %v3305 = vperm.slane %v3303, 0
        %v3308 = vsel %vm738, %v3291, 0
        %v3311 = vsel %vm738, %v3292, 0
        %v3314 = vsel %vm738, %v3293, 0
        %v3317 = vsel %vm738, %v3294, 0
        %v3320 = vsel %vm738, %v3295, 0
        %v3323 = vsel %vm738, %v3296, 0
        %v3326 = vsel %vm738, %v3297, 0
        %v3329 = vsel %vm738, %v3298, 0
        %3331 = vmatpush.msra.mxu0 0.0
        %3332 = vmatpush.msra.mxu0 0.0
        %3333 = vmatpush.msra.mxu0 0.0
        %3334 = vmatpush.msra.mxu0 0.0
        %3335 = vmatpush.msra.mxu0 0.0
        %3336 = vmatpush.msra.mxu0 0.0
        %3337 = vmatpush.msra.mxu0 0.0
        %3338 = vmatpush.msra.mxu0 0.0
        %3339 = vmatpush.msra.mxu0 0.0
        %3340 = vmatpush.msra.mxu0 0.0
        %3341 = vmatpush.msra.mxu0 0.0
        %3342 = vmatpush.msra.mxu0 0.0
        %3343 = vmatpush.msra.mxu0 %v3302
        %3344 = vmatpush.msra.mxu0 %v3301
        %3345 = vmatpush.msra.mxu0 %v3300
        %3346 = vmatpush.msra.mxu0 %v3299
        %3347 = vmatmul.f32.gmra.mxu0 %v3308
        %v3348 = vpop.f32.mrf.mxu0
        %v3349 = vadd.f32 %v3305, %v3348
        %3350 = vmatmul.f32.gmra.mxu0 %v3311
        %v3351 = vpop.f32.mrf.mxu0
        %v3352 = vadd.f32 %v3305, %v3351
        %3353 = vmatmul.f32.gmra.mxu0 %v3314
        %v3354 = vpop.f32.mrf.mxu0
        %v3355 = vadd.f32 %v3305, %v3354
        %3356 = vmatmul.f32.gmra.mxu0 %v3317
        %v3357 = vpop.f32.mrf.mxu0
        %v3358 = vadd.f32 %v3305, %v3357
        %3359 = vmatmul.f32.gmra.mxu0 %v3320
        %v3360 = vpop.f32.mrf.mxu0
        %v3361 = vadd.f32 %v3305, %v3360
        %3362 = vmatmul.f32.gmra.mxu0 %v3323
        %v3363 = vpop.f32.mrf.mxu0
        %v3364 = vadd.f32 %v3305, %v3363
        %3365 = vmatmul.f32.gmra.mxu0 %v3326
        %v3366 = vpop.f32.mrf.mxu0
        %v3367 = vadd.f32 %v3305, %v3366
        %3368 = vmatmul.f32.gmra.mxu0 %v3329
        %v3369 = vpop.f32.mrf.mxu0
        %v3370 = vadd.f32 %v3305, %v3369
        %3371 = vdwg.mxu0
        %3372 = vst.msk [vmem:[%s692] sm:$0xff] %vm738, %v3349
        %3373 = vst.msk [vmem:[%s692 + $0x8] sm:$0xff] %vm738, %v3352
        %3374 = vst.msk [vmem:[%s692 + $0x10] sm:$0xff] %vm738, %v3355
        %3375 = vst.msk [vmem:[%s692 + $0x18] sm:$0xff] %vm738, %v3358
        %3376 = vst.msk [vmem:[%s692 + $0x20] sm:$0xff] %vm738, %v3361
        %3377 = vst.msk [vmem:[%s692 + $0x28] sm:$0xff] %vm738, %v3364
        %3378 = vst.msk [vmem:[%s692 + $0x30] sm:$0xff] %vm738, %v3367
        %3379 = vst.msk [vmem:[%s692 + $0x38] sm:$0xff] %vm738, %v3370
        %s3380 = sand.u32 %s361, 1
        %s3381 = scalar_lea.sflag [#allocation5], %s3380
        %s3382 = sand.u32 %s361, 1
        %s3383 = smul.addr %s3382, 64
        %s3384 = scalar_lea.vmem [#allocation18], %s3383
        // Predicated region
        $region113: #{tpu_custom_call.1} parent=75 // pred_check
          %p3385 = pneg %p371
        $region114: #{tpu_custom_call.1} parent=75 // pred_check_branch
          %3387 = sbr.rel (%p3385) target = $region116
        $region115: #{tpu_custom_call.1} parent=75 // pred_region
          %s3388 = smul.u32 8, %s39
          %3390 = vsyncadd %s3381, 0
          %s3391 = smul.addr %s3388, 8
          %s3392 = scalar_lea.hbm %s14, %s3391
          %s3393 = sshll.u32 %s3384, 4
          %s3394 = int_to_ptr.vmem [resolvable:$true] %s3393
          %s3395 = sshll.u32 %s3392, 4
          %s3396 = int_to_ptr.hbm [resolvable:$true] %s3395
          %3401 = dma.vmem_to_hbm [thread:$0]  %s3394, 1024, %s3396, %s3381, 128, 128, 8
        $region116: #{tpu_custom_call.1} parent=75 // pred_fallthru
          _
      $region76: #{tpu_custom_call.1} parent=5 // pred_fallthru
        _
      %p3402 = scmp.le.s32.totalorder 2, %s34
      // Predicated region
      $region117: #{tpu_custom_call.1} parent=5 // pred_check
        %p3403 = pneg %p3402
      $region118: #{tpu_custom_call.1} parent=5 // pred_check_branch
        %3405 = sbr.rel (%p3403) target = $region120
      $region119: #{tpu_custom_call.1} parent=5 // pred_region
        %s3406 = ssub.s32 %s34, 2
        // Predicated region
        $region121: #{tpu_custom_call.1} parent=119 // pred_check
          %p3407 = pneg %p377
        $region122: #{tpu_custom_call.1} parent=119 // pred_check_branch
          %3409 = sbr.rel (%p3407) target = $region124
        $region123: #{tpu_custom_call.1} parent=119 // pred_region
          %s3410 = sand.u32 %s362, 1
          %s3411 = scalar_lea.sflag [#allocation5], %s3410
          %s3412 = sand.u32 %s362, 1
          %s3413 = smul.addr %s3412, 64
          %s3414 = scalar_lea.vmem [#allocation18], %s3413
          %3416 = dma.done %s3411, 1024
        $region124: #{tpu_custom_call.1} parent=119 // pred_fallthru
          _
      $region120: #{tpu_custom_call.1} parent=5 // pred_fallthru
        _
    $region6: #{tpu_custom_call.1} parent=1 // loop_footer
      %s38 = sadd.s32 1, %s34
    $region7: #{tpu_custom_call.1} parent=1 // loop_footer_branch
      %33 = sbr.rel target = $region3
    $region8: #{tpu_custom_call.1} parent=1 // loop_exit
      _
    %3417 = vsyncpa [#allocation4], 1
    %s3418 = scalar_lea.sflag [#allocation4], 1
    %3419 = vsyncpa %s3418, 1
    %3420 = vsyncpa [#allocation7], 1
    %s3421 = scalar_lea.sflag [#allocation7], 1
    %3422 = vsyncpa %s3421, 1
    %3423 = vsyncpa [#allocation10], 1
    %s3424 = scalar_lea.sflag [#allocation10], 1
    %3425 = vsyncpa %s3424, 1
    %3426 = vsyncpa [#allocation13], 1
    %3427 = vsyncpa [#allocation16], 1
    %3428 = vsyncpa [#allocation5], 1
    %s3429 = scalar_lea.sflag [#allocation5], 1
    %3430 = vsyncpa %s3429, 1

</llo_original>
